<compile_context>
chip_gen: v6e
topology: v6e:2x2x1
jax: 0.10.0
libtpu: 0.0.40
codegen_flags: <defaults>
</compile_context>

<pallas_src>
import jax
import jax.numpy as jnp
from jax.experimental import pallas as pl
from jax.experimental.pallas import tpu as pltpu


def _round_up(x, m):
    return (x + m - 1) // m * m


def classifier_kernel(x_ref, we_ref, be_ref, wf_ref, bf_ref, o_ref):
    # Encoder: feats = x @ W_enc + b_enc   -> [B_pad, F_pad], f32 accumulate.
    feats = jnp.dot(x_ref[...], we_ref[...],
                    preferred_element_type=jnp.float32) + be_ref[...]
    # Classifier head: logits = feats @ W_fc + b_fc -> [B_pad, NC_pad].
    logits = jnp.dot(feats.astype(wf_ref.dtype), wf_ref[...],
                     preferred_element_type=jnp.float32) + bf_ref[...]
    o_ref[...] = logits.astype(o_ref.dtype)


def classifier_forward(x, w_enc, b_enc, w_fc, b_fc):
    """x: [B, C, H, W] float32. Returns [B, num_classes] float32."""
    B = x.shape[0]
    D = x.shape[1] * x.shape[2] * x.shape[3]
    F = w_enc.shape[1]              # 1000 (encoder features / fc.in_features)
    num_classes = w_fc.shape[1]

    # Lane/sublane-friendly zero padding (math unchanged: padded rows/cols
    # are zero and never read back).
    B_pad = _round_up(B, 8)         # unmasked sublane store on the output
    D_pad = _round_up(D, 128)
    F_pad = _round_up(F, 256)       # 256-multiple matches v6e/v7x MXU lanes
    NC_pad = _round_up(num_classes, 128)

    x_flat = x.reshape(B, D)
    x_flat = jnp.pad(x_flat, ((0, B_pad - B), (0, D_pad - D)))

    # bf16 weights/activations, f32 biases. MXU accumulates in f32.
    x_bf = x_flat.astype(jnp.bfloat16)
    w_enc_p = jnp.pad(w_enc, ((0, D_pad - D), (0, F_pad - F))).astype(jnp.bfloat16)
    b_enc_p = jnp.pad(b_enc, (0, F_pad - F)).reshape(1, F_pad).astype(jnp.float32)
    w_fc_p = jnp.pad(w_fc, ((0, F_pad - F), (0, NC_pad - num_classes))).astype(jnp.bfloat16)
    b_fc_p = jnp.pad(b_fc, (0, NC_pad - num_classes)).reshape(1, NC_pad).astype(jnp.float32)

    # Single grid step: every operand fully resident in VMEM (<3 MiB total),
    # so there is no streamed reduction and no per-step overhead.
    out_padded = pl.pallas_call(
        classifier_kernel,
        out_shape=jax.ShapeDtypeStruct((B_pad, NC_pad), jnp.float32),
        grid_spec=pltpu.PrefetchScalarGridSpec(
            num_scalar_prefetch=0,
            grid=(1,),
            in_specs=[
                pl.BlockSpec((B_pad, D_pad), lambda i: (0, 0)),   # x
                pl.BlockSpec((D_pad, F_pad), lambda i: (0, 0)),   # W_enc
                pl.BlockSpec((1, F_pad), lambda i: (0, 0)),       # b_enc
                pl.BlockSpec((F_pad, NC_pad), lambda i: (0, 0)),  # W_fc
                pl.BlockSpec((1, NC_pad), lambda i: (0, 0)),      # b_fc
            ],
            out_specs=pl.BlockSpec((B_pad, NC_pad), lambda i: (0, 0)),
        ),
        compiler_params=pltpu.CompilerParams(
            dimension_semantics=("arbitrary",),
        ),
    )(x_bf, w_enc_p, b_enc_p, w_fc_p, b_fc_p)

    return out_padded[:B, :num_classes]


def init_params(key, in_dim, feat_dim, num_classes):
    """Deterministic nn.Linear-style init (uniform +/- 1/sqrt(fan_in))."""
    k1, k2, k3, k4 = jax.random.split(key, 4)
    bnd_e = 1.0 / jnp.sqrt(in_dim)
    bnd_f = 1.0 / jnp.sqrt(feat_dim)
    w_enc = jax.random.uniform(k1, (in_dim, feat_dim), jnp.float32, -bnd_e, bnd_e)
    b_enc = jax.random.uniform(k2, (feat_dim,), jnp.float32, -bnd_e, bnd_e)
    w_fc = jax.random.uniform(k3, (feat_dim, num_classes), jnp.float32, -bnd_f, bnd_f)
    b_fc = jax.random.uniform(k4, (num_classes,), jnp.float32, -bnd_f, bnd_f)
    return w_enc, b_enc, w_fc, b_fc


if __name__ == "__main__":
    B, C, H, W = 2, 4, 16, 16
    FEAT = 1000          # encoder output dim / fc.in_features per nn.Linear(1000, num_classes)
    NUM_CLASSES = 10

    key = jax.random.PRNGKey(0)
    kx, kp = jax.random.split(key)
    x = jax.random.normal(kx, (B, C, H, W), jnp.float32)
    w_enc, b_enc, w_fc, b_fc = init_params(kp, C * H * W, FEAT, NUM_CLASSES)

    out = classifier_forward(x, w_enc, b_enc, w_fc, b_fc)
    out = jax.block_until_ready(out)
    assert out.shape == (B, NUM_CLASSES)

    # Reference with the same bf16 weight/activation quantization (f32 math),
    # matching the kernel's numerics; remaining diff is accumulation order.
    xf = x.reshape(B, -1).astype(jnp.bfloat16).astype(jnp.float32)
    we = w_enc.astype(jnp.bfloat16).astype(jnp.float32)
    wf = w_fc.astype(jnp.bfloat16).astype(jnp.float32)
    feats_ref = xf @ we + b_enc
    ref = feats_ref.astype(jnp.bfloat16).astype(jnp.float32) @ wf + b_fc
    assert jnp.allclose(out, ref, atol=5e-3, rtol=5e-3)

    print("KERNEL_OK")
</pallas_src>

<mosaic_0001>
module attributes {stable_mosaic.version = 11 : i64} {
  func.func @classifier_kernel(%arg0: i32, %arg1: memref<8x1024xbf16, #tpu.memory_space<vmem>>, %arg2: memref<1024x1024xbf16, #tpu.memory_space<vmem>>, %arg3: memref<1x1024xf32, #tpu.memory_space<vmem>>, %arg4: memref<1024x128xbf16, #tpu.memory_space<vmem>>, %arg5: memref<1x128xf32, #tpu.memory_space<vmem>>, %arg6: memref<8x128xf32, #tpu.memory_space<vmem>>) attributes {dimension_semantics = [#tpu.dimension_semantics<arbitrary>], iteration_bounds = array<i64: 1>, scalar_prefetch = 0 : i64, scratch_operands = 0 : i64, tpu.core_type = #tpu.core_type<tc>, window_params = [{pipeline_mode = #tpu.pipeline_mode<synchronous>, transform_indices = @transform_0, window_bounds = array<i64: 8, 1024>}, {pipeline_mode = #tpu.pipeline_mode<synchronous>, transform_indices = @transform_1, window_bounds = array<i64: 1024, 1024>}, {pipeline_mode = #tpu.pipeline_mode<synchronous>, transform_indices = @transform_2, window_bounds = array<i64: 1, 1024>}, {pipeline_mode = #tpu.pipeline_mode<synchronous>, transform_indices = @transform_3, window_bounds = array<i64: 1024, 128>}, {pipeline_mode = #tpu.pipeline_mode<synchronous>, transform_indices = @transform_4, window_bounds = array<i64: 1, 128>}, {pipeline_mode = #tpu.pipeline_mode<synchronous>, transform_indices = @transform_5, window_bounds = array<i64: 8, 128>}]} {
    %c0 = arith.constant 0 : index
    %c0_0 = arith.constant 0 : index
    %0 = vector.load %arg1[%c0, %c0_0] : memref<8x1024xbf16, #tpu.memory_space<vmem>>, vector<8x1024xbf16>
    %c0_1 = arith.constant 0 : index
    %c0_2 = arith.constant 0 : index
    %1 = vector.load %arg2[%c0_1, %c0_2] : memref<1024x1024xbf16, #tpu.memory_space<vmem>>, vector<1024x1024xbf16>
    %cst = arith.constant dense<0.000000e+00> : vector<8x1024xf32>
    %2 = tpu.matmul %0, %1, %cst {dimension_numbers = #tpu.dot_dimension_numbers<[1], [0], [0], [1], [0, 0, 1, 1], [], []>} : vector<8x1024xbf16>, vector<1024x1024xbf16>, vector<8x1024xf32> -> vector<8x1024xf32>
    %c0_3 = arith.constant 0 : index
    %c0_4 = arith.constant 0 : index
    %3 = vector.load %arg3[%c0_3, %c0_4] : memref<1x1024xf32, #tpu.memory_space<vmem>>, vector<1x1024xf32>
    %4 = vector.broadcast %3 : vector<1x1024xf32> to vector<8x1024xf32>
    %5 = arith.addf %2, %4 : vector<8x1024xf32>
    %6 = arith.truncf %5 : vector<8x1024xf32> to vector<8x1024xbf16>
    %c0_5 = arith.constant 0 : index
    %c0_6 = arith.constant 0 : index
    %7 = vector.load %arg4[%c0_5, %c0_6] : memref<1024x128xbf16, #tpu.memory_space<vmem>>, vector<1024x128xbf16>
    %cst_7 = arith.constant dense<0.000000e+00> : vector<8x128xf32>
    %8 = tpu.matmul %6, %7, %cst_7 {dimension_numbers = #tpu.dot_dimension_numbers<[1], [0], [0], [1], [0, 0, 1, 1], [], []>} : vector<8x1024xbf16>, vector<1024x128xbf16>, vector<8x128xf32> -> vector<8x128xf32>
    %c0_8 = arith.constant 0 : index
    %c0_9 = arith.constant 0 : index
    %9 = vector.load %arg5[%c0_8, %c0_9] : memref<1x128xf32, #tpu.memory_space<vmem>>, vector<1x128xf32>
    %10 = vector.broadcast %9 : vector<1x128xf32> to vector<8x128xf32>
    %11 = arith.addf %8, %10 : vector<8x128xf32>
    %c0_10 = arith.constant 0 : index
    %c0_11 = arith.constant 0 : index
    %12 = vector.load %arg6[%c0_10, %c0_11] : memref<8x128xf32, #tpu.memory_space<vmem>>, vector<8x128xf32>
    tpu.vector_store %arg6[%c0_10, %c0_11], %11 {strides = array<i32>} : memref<8x128xf32, #tpu.memory_space<vmem>>, vector<8x128xf32>,
    return
  }
  func.func @transform_0(%arg0: i32) -> (i32, i32) {
    %c0_i32 = arith.constant 0 : i32
    %c0_i32_0 = arith.constant 0 : i32
    %c0_i32_1 = arith.constant 0 : i32
    return %c0_i32, %c0_i32_0 : i32, i32
  }
  func.func @transform_1(%arg0: i32) -> (i32, i32) {
    %c0_i32 = arith.constant 0 : i32
    %c0_i32_0 = arith.constant 0 : i32
    %c0_i32_1 = arith.constant 0 : i32
    return %c0_i32, %c0_i32_0 : i32, i32
  }
  func.func @transform_2(%arg0: i32) -> (i32, i32) {
    %c0_i32 = arith.constant 0 : i32
    %c0_i32_0 = arith.constant 0 : i32
    %c0_i32_1 = arith.constant 0 : i32
    return %c0_i32, %c0_i32_0 : i32, i32
  }
  func.func @transform_3(%arg0: i32) -> (i32, i32) {
    %c0_i32 = arith.constant 0 : i32
    %c0_i32_0 = arith.constant 0 : i32
    %c0_i32_1 = arith.constant 0 : i32
    return %c0_i32, %c0_i32_0 : i32, i32
  }
  func.func @transform_4(%arg0: i32) -> (i32, i32) {
    %c0_i32 = arith.constant 0 : i32
    %c0_i32_0 = arith.constant 0 : i32
    %c0_i32_1 = arith.constant 0 : i32
    return %c0_i32, %c0_i32_0 : i32, i32
  }
  func.func @transform_5(%arg0: i32) -> (i32, i32) {
    %c0_i32 = arith.constant 0 : i32
    %c0_i32_0 = arith.constant 0 : i32
    %c0_i32_1 = arith.constant 0 : i32
    return %c0_i32, %c0_i32_0 : i32, i32
  }
}

</mosaic_0001>

<llo_original>
// kernel: tpu_custom_call.1
$region0: #{tpu_custom_call.1}
  #allocation0 [shape = 'u32[]', space=smem, size = 0x4, offset = 0x4, fixed_abs, tag = 'smem constant byte address 0x4 - core index']
  #allocation1 [shape = 'u32[144,128]{1,0:T(1,128)}', space=vmem, size = 0x12000, scoped, tag = 'internal scratch']
  %s0 = inlined_call_operand.hbm [shape: bf16[8,1024], index: 0, kind: input, shape index: {}]
  %s1 = inlined_call_operand.hbm [shape: bf16[1024,1024], index: 1, kind: input, shape index: {}]
  %s2 = inlined_call_operand.hbm [shape: f32[1,1024], index: 2, kind: input, shape index: {}]
  %s3 = inlined_call_operand.hbm [shape: bf16[1024,128], index: 3, kind: input, shape index: {}]
  %s4 = inlined_call_operand.hbm [shape: f32[1,128], index: 4, kind: input, shape index: {}]
  %s5 = inlined_call_operand.hbm [shape: f32[8,128], index: 5, kind: output, shape index: {}]
  %s6 = sld [smem:[#allocation0]]
  $region50: #{tpu_custom_call.1} parent=0
    _
  %s8 = ssub.s32 1, %s6
  %s9 = scalar_select 0, %s8, %s6
  $region1: #{tpu_custom_call.1} parent=0
    #allocation2 [shape = 'u8[16384]{0}', space=vmem, size = 0x4000, scoped, tag = 'input window, operand 0, single buffered']
    #allocation3 [shape = 's32[1]{0}', space=sflag, size = 0x4, scoped, tag = 'scoped memory for tpu_custom_call.1']
    #allocation4 [shape = 's32[1]{0}', space=sflag, size = 0x4, scoped, tag = 'scoped memory for tpu_custom_call.1']
    #allocation5 [shape = 'u8[2097152]{0}', space=vmem, size = 0x200000, scoped, tag = 'input window, operand 1, single buffered']
    #allocation6 [shape = 's32[1]{0}', space=sflag, size = 0x4, scoped, tag = 'scoped memory for tpu_custom_call.1']
    #allocation7 [shape = 'u8[4096]{0}', space=vmem, size = 0x1000, scoped, tag = 'input window, operand 2, single buffered']
    #allocation8 [shape = 'u8[262144]{0}', space=vmem, size = 0x40000, scoped, tag = 'input window, operand 3, single buffered']
    #allocation9 [shape = 's32[1]{0}', space=sflag, size = 0x4, scoped, tag = 'scoped memory for tpu_custom_call.1']
    #allocation10 [shape = 'u8[512]{0}', space=vmem, size = 0x400, scoped, tag = 'input window, operand 4, single buffered']
    #allocation11 [shape = 'u8[4096]{0}', space=vmem, size = 0x1000, scoped, tag = 'output window, operand 0, single buffered']
    %10 = vsyncpa [#allocation3], 0
    %11 = vsyncpa [#allocation6], 0
    %12 = vsyncpa [#allocation9], 0
    %13 = vsyncpa [#allocation4], 0
    // Predicated region
    $region2: #{tpu_custom_call.1} parent=1 // pred_check
      _
    $region3: #{tpu_custom_call.1} parent=1 // pred_check_branch
      %15 = sbr.rel (0) target = $region5
    $region4: #{tpu_custom_call.1} parent=1 // pred_region
      %s17 = ssub.s32 512, 512
      %18 = vsyncadd [#allocation3], %s17
      %s20 = sshll.u32 [#allocation2], 4
      %s21 = int_to_ptr.vmem [resolvable:$true] %s20
      %23 = dma.hbm_to_vmem [thread:$0]  %s0, 512, %s21, [#allocation3]
    $region5: #{tpu_custom_call.1} parent=1 // pred_fallthru
      _
    // Predicated region
    $region6: #{tpu_custom_call.1} parent=1 // pred_check
      _
    $region7: #{tpu_custom_call.1} parent=1 // pred_check_branch
      %25 = sbr.rel (0) target = $region9
    $region8: #{tpu_custom_call.1} parent=1 // pred_region
      %s27 = ssub.s32 65536, 65536
      %28 = vsyncadd [#allocation6], %s27
      %s29 = sshll.u32 [#allocation5], 4
      %s30 = int_to_ptr.vmem [resolvable:$true] %s29
      %35 = dma.hbm_to_vmem [thread:$0]  %s1, 65536, %s30, [#allocation6], 512, 512, 32
    $region9: #{tpu_custom_call.1} parent=1 // pred_fallthru
      _
    // Predicated region
    $region10: #{tpu_custom_call.1} parent=1 // pred_check
      _
    $region11: #{tpu_custom_call.1} parent=1 // pred_check_branch
      %37 = sbr.rel (0) target = $region13
    $region12: #{tpu_custom_call.1} parent=1 // pred_region
      %s39 = ssub.s32 128, 128
      %40 = vsyncadd [#allocation6], %s39
      %s42 = sshll.u32 [#allocation7], 4
      %s43 = int_to_ptr.vmem [resolvable:$true] %s42
      %45 = dma.hbm_to_vmem [thread:$0]  %s2, 128, %s43, [#allocation6]
    $region13: #{tpu_custom_call.1} parent=1 // pred_fallthru
      _
    // Predicated region
    $region14: #{tpu_custom_call.1} parent=1 // pred_check
      _
    $region15: #{tpu_custom_call.1} parent=1 // pred_check_branch
      %47 = sbr.rel (0) target = $region17
    $region16: #{tpu_custom_call.1} parent=1 // pred_region
      %s49 = ssub.s32 8192, 8192
      %50 = vsyncadd [#allocation9], %s49
      %s51 = sshll.u32 [#allocation8], 4
      %s52 = int_to_ptr.vmem [resolvable:$true] %s51
      %57 = dma.hbm_to_vmem [thread:$0]  %s3, 8192, %s52, [#allocation9], 64, 64, 4
    $region17: #{tpu_custom_call.1} parent=1 // pred_fallthru
      _
    // Predicated region
    $region18: #{tpu_custom_call.1} parent=1 // pred_check
      _
    $region19: #{tpu_custom_call.1} parent=1 // pred_check_branch
      %59 = sbr.rel (0) target = $region21
    $region20: #{tpu_custom_call.1} parent=1 // pred_region
      %s61 = ssub.s32 16, 16
      %62 = vsyncadd [#allocation9], %s61
      %s64 = sshll.u32 [#allocation10], 4
      %s65 = int_to_ptr.vmem [resolvable:$true] %s64
      %67 = dma.hbm_to_vmem [thread:$0]  %s4, 16, %s65, [#allocation9]
    $region21: #{tpu_custom_call.1} parent=1 // pred_fallthru
      _
    // Predicated region
    $region22: #{tpu_custom_call.1} parent=1 // pred_check
      _
    $region23: #{tpu_custom_call.1} parent=1 // pred_check_branch
      %69 = sbr.rel (0) target = $region25
    $region24: #{tpu_custom_call.1} parent=1 // pred_region
      %70 = dma.done [#allocation3], 512
    $region25: #{tpu_custom_call.1} parent=1 // pred_fallthru
      _
    // Predicated region
    $region26: #{tpu_custom_call.1} parent=1 // pred_check
      _
    $region27: #{tpu_custom_call.1} parent=1 // pred_check_branch
      %72 = sbr.rel (0) target = $region29
    $region28: #{tpu_custom_call.1} parent=1 // pred_region
      %73 = dma.done [#allocation6], 65536
    $region29: #{tpu_custom_call.1} parent=1 // pred_fallthru
      _
    // Predicated region
    $region30: #{tpu_custom_call.1} parent=1 // pred_check
      _
    $region31: #{tpu_custom_call.1} parent=1 // pred_check_branch
      %75 = sbr.rel (0) target = $region33
    $region32: #{tpu_custom_call.1} parent=1 // pred_region
      %76 = dma.done [#allocation6], 128
    $region33: #{tpu_custom_call.1} parent=1 // pred_fallthru
      _
    // Predicated region
    $region34: #{tpu_custom_call.1} parent=1 // pred_check
      _
    $region35: #{tpu_custom_call.1} parent=1 // pred_check_branch
      %78 = sbr.rel (0) target = $region37
    $region36: #{tpu_custom_call.1} parent=1 // pred_region
      %79 = dma.done [#allocation9], 8192
    $region37: #{tpu_custom_call.1} parent=1 // pred_fallthru
      _
    // Predicated region
    $region38: #{tpu_custom_call.1} parent=1 // pred_check
      _
    $region39: #{tpu_custom_call.1} parent=1 // pred_check_branch
      %81 = sbr.rel (0) target = $region41
    $region40: #{tpu_custom_call.1} parent=1 // pred_region
      %82 = dma.done [#allocation9], 16
    $region41: #{tpu_custom_call.1} parent=1 // pred_fallthru
      _
    %v84 = vld [vmem:[#allocation2] sm:$0xff]
    %v85 = vld [vmem:[#allocation2 + $0x8] sm:$0xff]
    %v86 = vld [vmem:[#allocation2 + $0x10] sm:$0xff]
    %v87 = vld [vmem:[#allocation2 + $0x18] sm:$0xff]
    %v88 = vld [vmem:[#allocation5] sm:$0xff]
    %v89 = vld [vmem:[#allocation5 + $0x8] sm:$0xff]
    %v90 = vld [vmem:[#allocation5 + $0x10] sm:$0xff]
    %v91 = vld [vmem:[#allocation5 + $0x18] sm:$0xff]
    %v92 = vld [vmem:[#allocation5 + $0x20] sm:$0xff]
    %v93 = vld [vmem:[#allocation5 + $0x28] sm:$0xff]
    %v94 = vld [vmem:[#allocation5 + $0x30] sm:$0xff]
    %v95 = vld [vmem:[#allocation5 + $0x38] sm:$0xff]
    %v96 = vld [vmem:[#allocation5 + $0x40] sm:$0xff]
    %v97 = vld [vmem:[#allocation5 + $0x48] sm:$0xff]
    %v98 = vld [vmem:[#allocation5 + $0x50] sm:$0xff]
    %v99 = vld [vmem:[#allocation5 + $0x58] sm:$0xff]
    %v100 = vld [vmem:[#allocation5 + $0x60] sm:$0xff]
    %v101 = vld [vmem:[#allocation5 + $0x68] sm:$0xff]
    %v102 = vld [vmem:[#allocation5 + $0x70] sm:$0xff]
    %v103 = vld [vmem:[#allocation5 + $0x78] sm:$0xff]
    %v104 = vld [vmem:[#allocation5 + $0x80] sm:$0xff]
    %v105 = vld [vmem:[#allocation5 + $0x88] sm:$0xff]
    %v106 = vld [vmem:[#allocation5 + $0x90] sm:$0xff]
    %v107 = vld [vmem:[#allocation5 + $0x98] sm:$0xff]
    %v108 = vld [vmem:[#allocation5 + $0xa0] sm:$0xff]
    %v109 = vld [vmem:[#allocation5 + $0xa8] sm:$0xff]
    %v110 = vld [vmem:[#allocation5 + $0xb0] sm:$0xff]
    %v111 = vld [vmem:[#allocation5 + $0xb8] sm:$0xff]
    %v112 = vld [vmem:[#allocation5 + $0xc0] sm:$0xff]
    %v113 = vld [vmem:[#allocation5 + $0xc8] sm:$0xff]
    %v114 = vld [vmem:[#allocation5 + $0xd0] sm:$0xff]
    %v115 = vld [vmem:[#allocation5 + $0xd8] sm:$0xff]
    %v116 = vld [vmem:[#allocation5 + $0xe0] sm:$0xff]
    %v117 = vld [vmem:[#allocation5 + $0xe8] sm:$0xff]
    %v118 = vld [vmem:[#allocation5 + $0xf0] sm:$0xff]
    %v119 = vld [vmem:[#allocation5 + $0xf8] sm:$0xff]
    %v120 = vld [vmem:[#allocation5 + $0x100] sm:$0xff]
    %v121 = vld [vmem:[#allocation5 + $0x108] sm:$0xff]
    %v122 = vld [vmem:[#allocation5 + $0x110] sm:$0xff]
    %v123 = vld [vmem:[#allocation5 + $0x118] sm:$0xff]
    %v124 = vld [vmem:[#allocation5 + $0x120] sm:$0xff]
    %v125 = vld [vmem:[#allocation5 + $0x128] sm:$0xff]
    %v126 = vld [vmem:[#allocation5 + $0x130] sm:$0xff]
    %v127 = vld [vmem:[#allocation5 + $0x138] sm:$0xff]
    %v128 = vld [vmem:[#allocation5 + $0x140] sm:$0xff]
    %v129 = vld [vmem:[#allocation5 + $0x148] sm:$0xff]
    %v130 = vld [vmem:[#allocation5 + $0x150] sm:$0xff]
    %v131 = vld [vmem:[#allocation5 + $0x158] sm:$0xff]
    %v132 = vld [vmem:[#allocation5 + $0x160] sm:$0xff]
    %v133 = vld [vmem:[#allocation5 + $0x168] sm:$0xff]
    %v134 = vld [vmem:[#allocation5 + $0x170] sm:$0xff]
    %v135 = vld [vmem:[#allocation5 + $0x178] sm:$0xff]
    %v136 = vld [vmem:[#allocation5 + $0x180] sm:$0xff]
    %v137 = vld [vmem:[#allocation5 + $0x188] sm:$0xff]
    %v138 = vld [vmem:[#allocation5 + $0x190] sm:$0xff]
    %v139 = vld [vmem:[#allocation5 + $0x198] sm:$0xff]
    %v140 = vld [vmem:[#allocation5 + $0x1a0] sm:$0xff]
    %v141 = vld [vmem:[#allocation5 + $0x1a8] sm:$0xff]
    %v142 = vld [vmem:[#allocation5 + $0x1b0] sm:$0xff]
    %v143 = vld [vmem:[#allocation5 + $0x1b8] sm:$0xff]
    %v144 = vld [vmem:[#allocation5 + $0x1c0] sm:$0xff]
    %v145 = vld [vmem:[#allocation5 + $0x1c8] sm:$0xff]
    %v146 = vld [vmem:[#allocation5 + $0x1d0] sm:$0xff]
    %v147 = vld [vmem:[#allocation5 + $0x1d8] sm:$0xff]
    %v148 = vld [vmem:[#allocation5 + $0x1e0] sm:$0xff]
    %v149 = vld [vmem:[#allocation5 + $0x1e8] sm:$0xff]
    %v150 = vld [vmem:[#allocation5 + $0x1f0] sm:$0xff]
    %v151 = vld [vmem:[#allocation5 + $0x1f8] sm:$0xff]
    %v152 = vld [vmem:[#allocation5 + $0x200] sm:$0xff]
    %v153 = vld [vmem:[#allocation5 + $0x208] sm:$0xff]
    %v154 = vld [vmem:[#allocation5 + $0x210] sm:$0xff]
    %v155 = vld [vmem:[#allocation5 + $0x218] sm:$0xff]
    %v156 = vld [vmem:[#allocation5 + $0x220] sm:$0xff]
    %v157 = vld [vmem:[#allocation5 + $0x228] sm:$0xff]
    %v158 = vld [vmem:[#allocation5 + $0x230] sm:$0xff]
    %v159 = vld [vmem:[#allocation5 + $0x238] sm:$0xff]
    %v160 = vld [vmem:[#allocation5 + $0x240] sm:$0xff]
    %v161 = vld [vmem:[#allocation5 + $0x248] sm:$0xff]
    %v162 = vld [vmem:[#allocation5 + $0x250] sm:$0xff]
    %v163 = vld [vmem:[#allocation5 + $0x258] sm:$0xff]
    %v164 = vld [vmem:[#allocation5 + $0x260] sm:$0xff]
    %v165 = vld [vmem:[#allocation5 + $0x268] sm:$0xff]
    %v166 = vld [vmem:[#allocation5 + $0x270] sm:$0xff]
    %v167 = vld [vmem:[#allocation5 + $0x278] sm:$0xff]
    %v168 = vld [vmem:[#allocation5 + $0x280] sm:$0xff]
    %v169 = vld [vmem:[#allocation5 + $0x288] sm:$0xff]
    %v170 = vld [vmem:[#allocation5 + $0x290] sm:$0xff]
    %v171 = vld [vmem:[#allocation5 + $0x298] sm:$0xff]
    %v172 = vld [vmem:[#allocation5 + $0x2a0] sm:$0xff]
    %v173 = vld [vmem:[#allocation5 + $0x2a8] sm:$0xff]
    %v174 = vld [vmem:[#allocation5 + $0x2b0] sm:$0xff]
    %v175 = vld [vmem:[#allocation5 + $0x2b8] sm:$0xff]
    %v176 = vld [vmem:[#allocation5 + $0x2c0] sm:$0xff]
    %v177 = vld [vmem:[#allocation5 + $0x2c8] sm:$0xff]
    %v178 = vld [vmem:[#allocation5 + $0x2d0] sm:$0xff]
    %v179 = vld [vmem:[#allocation5 + $0x2d8] sm:$0xff]
    %v180 = vld [vmem:[#allocation5 + $0x2e0] sm:$0xff]
    %v181 = vld [vmem:[#allocation5 + $0x2e8] sm:$0xff]
    %v182 = vld [vmem:[#allocation5 + $0x2f0] sm:$0xff]
    %v183 = vld [vmem:[#allocation5 + $0x2f8] sm:$0xff]
    %v184 = vld [vmem:[#allocation5 + $0x300] sm:$0xff]
    %v185 = vld [vmem:[#allocation5 + $0x308] sm:$0xff]
    %v186 = vld [vmem:[#allocation5 + $0x310] sm:$0xff]
    %v187 = vld [vmem:[#allocation5 + $0x318] sm:$0xff]
    %v188 = vld [vmem:[#allocation5 + $0x320] sm:$0xff]
    %v189 = vld [vmem:[#allocation5 + $0x328] sm:$0xff]
    %v190 = vld [vmem:[#allocation5 + $0x330] sm:$0xff]
    %v191 = vld [vmem:[#allocation5 + $0x338] sm:$0xff]
    %v192 = vld [vmem:[#allocation5 + $0x340] sm:$0xff]
    %v193 = vld [vmem:[#allocation5 + $0x348] sm:$0xff]
    %v194 = vld [vmem:[#allocation5 + $0x350] sm:$0xff]
    %v195 = vld [vmem:[#allocation5 + $0x358] sm:$0xff]
    %v196 = vld [vmem:[#allocation5 + $0x360] sm:$0xff]
    %v197 = vld [vmem:[#allocation5 + $0x368] sm:$0xff]
    %v198 = vld [vmem:[#allocation5 + $0x370] sm:$0xff]
    %v199 = vld [vmem:[#allocation5 + $0x378] sm:$0xff]
    %v200 = vld [vmem:[#allocation5 + $0x380] sm:$0xff]
    %v201 = vld [vmem:[#allocation5 + $0x388] sm:$0xff]
    %v202 = vld [vmem:[#allocation5 + $0x390] sm:$0xff]
    %v203 = vld [vmem:[#allocation5 + $0x398] sm:$0xff]
    %v204 = vld [vmem:[#allocation5 + $0x3a0] sm:$0xff]
    %v205 = vld [vmem:[#allocation5 + $0x3a8] sm:$0xff]
    %v206 = vld [vmem:[#allocation5 + $0x3b0] sm:$0xff]
    %v207 = vld [vmem:[#allocation5 + $0x3b8] sm:$0xff]
    %v208 = vld [vmem:[#allocation5 + $0x3c0] sm:$0xff]
    %v209 = vld [vmem:[#allocation5 + $0x3c8] sm:$0xff]
    %v210 = vld [vmem:[#allocation5 + $0x3d0] sm:$0xff]
    %v211 = vld [vmem:[#allocation5 + $0x3d8] sm:$0xff]
    %v212 = vld [vmem:[#allocation5 + $0x3e0] sm:$0xff]
    %v213 = vld [vmem:[#allocation5 + $0x3e8] sm:$0xff]
    %v214 = vld [vmem:[#allocation5 + $0x3f0] sm:$0xff]
    %v215 = vld [vmem:[#allocation5 + $0x3f8] sm:$0xff]
    %v216 = vld [vmem:[#allocation5 + $0x400] sm:$0xff]
    %v217 = vld [vmem:[#allocation5 + $0x408] sm:$0xff]
    %v218 = vld [vmem:[#allocation5 + $0x410] sm:$0xff]
    %v219 = vld [vmem:[#allocation5 + $0x418] sm:$0xff]
    %v220 = vld [vmem:[#allocation5 + $0x420] sm:$0xff]
    %v221 = vld [vmem:[#allocation5 + $0x428] sm:$0xff]
    %v222 = vld [vmem:[#allocation5 + $0x430] sm:$0xff]
    %v223 = vld [vmem:[#allocation5 + $0x438] sm:$0xff]
    %v224 = vld [vmem:[#allocation5 + $0x440] sm:$0xff]
    %v225 = vld [vmem:[#allocation5 + $0x448] sm:$0xff]
    %v226 = vld [vmem:[#allocation5 + $0x450] sm:$0xff]
    %v227 = vld [vmem:[#allocation5 + $0x458] sm:$0xff]
    %v228 = vld [vmem:[#allocation5 + $0x460] sm:$0xff]
    %v229 = vld [vmem:[#allocation5 + $0x468] sm:$0xff]
    %v230 = vld [vmem:[#allocation5 + $0x470] sm:$0xff]
    %v231 = vld [vmem:[#allocation5 + $0x478] sm:$0xff]
    %v232 = vld [vmem:[#allocation5 + $0x480] sm:$0xff]
    %v233 = vld [vmem:[#allocation5 + $0x488] sm:$0xff]
    %v234 = vld [vmem:[#allocation5 + $0x490] sm:$0xff]
    %v235 = vld [vmem:[#allocation5 + $0x498] sm:$0xff]
    %v236 = vld [vmem:[#allocation5 + $0x4a0] sm:$0xff]
    %v237 = vld [vmem:[#allocation5 + $0x4a8] sm:$0xff]
    %v238 = vld [vmem:[#allocation5 + $0x4b0] sm:$0xff]
    %v239 = vld [vmem:[#allocation5 + $0x4b8] sm:$0xff]
    %v240 = vld [vmem:[#allocation5 + $0x4c0] sm:$0xff]
    %v241 = vld [vmem:[#allocation5 + $0x4c8] sm:$0xff]
    %v242 = vld [vmem:[#allocation5 + $0x4d0] sm:$0xff]
    %v243 = vld [vmem:[#allocation5 + $0x4d8] sm:$0xff]
    %v244 = vld [vmem:[#allocation5 + $0x4e0] sm:$0xff]
    %v245 = vld [vmem:[#allocation5 + $0x4e8] sm:$0xff]
    %v246 = vld [vmem:[#allocation5 + $0x4f0] sm:$0xff]
    %v247 = vld [vmem:[#allocation5 + $0x4f8] sm:$0xff]
    %v248 = vld [vmem:[#allocation5 + $0x500] sm:$0xff]
    %v249 = vld [vmem:[#allocation5 + $0x508] sm:$0xff]
    %v250 = vld [vmem:[#allocation5 + $0x510] sm:$0xff]
    %v251 = vld [vmem:[#allocation5 + $0x518] sm:$0xff]
    %v252 = vld [vmem:[#allocation5 + $0x520] sm:$0xff]
    %v253 = vld [vmem:[#allocation5 + $0x528] sm:$0xff]
    %v254 = vld [vmem:[#allocation5 + $0x530] sm:$0xff]
    %v255 = vld [vmem:[#allocation5 + $0x538] sm:$0xff]
    %v256 = vld [vmem:[#allocation5 + $0x540] sm:$0xff]
    %v257 = vld [vmem:[#allocation5 + $0x548] sm:$0xff]
    %v258 = vld [vmem:[#allocation5 + $0x550] sm:$0xff]
    %v259 = vld [vmem:[#allocation5 + $0x558] sm:$0xff]
    %v260 = vld [vmem:[#allocation5 + $0x560] sm:$0xff]
    %v261 = vld [vmem:[#allocation5 + $0x568] sm:$0xff]
    %v262 = vld [vmem:[#allocation5 + $0x570] sm:$0xff]
    %v263 = vld [vmem:[#allocation5 + $0x578] sm:$0xff]
    %v264 = vld [vmem:[#allocation5 + $0x580] sm:$0xff]
    %v265 = vld [vmem:[#allocation5 + $0x588] sm:$0xff]
    %v266 = vld [vmem:[#allocation5 + $0x590] sm:$0xff]
    %v267 = vld [vmem:[#allocation5 + $0x598] sm:$0xff]
    %v268 = vld [vmem:[#allocation5 + $0x5a0] sm:$0xff]
    %v269 = vld [vmem:[#allocation5 + $0x5a8] sm:$0xff]
    %v270 = vld [vmem:[#allocation5 + $0x5b0] sm:$0xff]
    %v271 = vld [vmem:[#allocation5 + $0x5b8] sm:$0xff]
    %v272 = vld [vmem:[#allocation5 + $0x5c0] sm:$0xff]
    %v273 = vld [vmem:[#allocation5 + $0x5c8] sm:$0xff]
    %v274 = vld [vmem:[#allocation5 + $0x5d0] sm:$0xff]
    %v275 = vld [vmem:[#allocation5 + $0x5d8] sm:$0xff]
    %v276 = vld [vmem:[#allocation5 + $0x5e0] sm:$0xff]
    %v277 = vld [vmem:[#allocation5 + $0x5e8] sm:$0xff]
    %v278 = vld [vmem:[#allocation5 + $0x5f0] sm:$0xff]
    %v279 = vld [vmem:[#allocation5 + $0x5f8] sm:$0xff]
    %v280 = vld [vmem:[#allocation5 + $0x600] sm:$0xff]
    %v281 = vld [vmem:[#allocation5 + $0x608] sm:$0xff]
    %v282 = vld [vmem:[#allocation5 + $0x610] sm:$0xff]
    %v283 = vld [vmem:[#allocation5 + $0x618] sm:$0xff]
    %v284 = vld [vmem:[#allocation5 + $0x620] sm:$0xff]
    %v285 = vld [vmem:[#allocation5 + $0x628] sm:$0xff]
    %v286 = vld [vmem:[#allocation5 + $0x630] sm:$0xff]
    %v287 = vld [vmem:[#allocation5 + $0x638] sm:$0xff]
    %v288 = vld [vmem:[#allocation5 + $0x640] sm:$0xff]
    %v289 = vld [vmem:[#allocation5 + $0x648] sm:$0xff]
    %v290 = vld [vmem:[#allocation5 + $0x650] sm:$0xff]
    %v291 = vld [vmem:[#allocation5 + $0x658] sm:$0xff]
    %v292 = vld [vmem:[#allocation5 + $0x660] sm:$0xff]
    %v293 = vld [vmem:[#allocation5 + $0x668] sm:$0xff]
    %v294 = vld [vmem:[#allocation5 + $0x670] sm:$0xff]
    %v295 = vld [vmem:[#allocation5 + $0x678] sm:$0xff]
    %v296 = vld [vmem:[#allocation5 + $0x680] sm:$0xff]
    %v297 = vld [vmem:[#allocation5 + $0x688] sm:$0xff]
    %v298 = vld [vmem:[#allocation5 + $0x690] sm:$0xff]
    %v299 = vld [vmem:[#allocation5 + $0x698] sm:$0xff]
    %v300 = vld [vmem:[#allocation5 + $0x6a0] sm:$0xff]
    %v301 = vld [vmem:[#allocation5 + $0x6a8] sm:$0xff]
    %v302 = vld [vmem:[#allocation5 + $0x6b0] sm:$0xff]
    %v303 = vld [vmem:[#allocation5 + $0x6b8] sm:$0xff]
    %v304 = vld [vmem:[#allocation5 + $0x6c0] sm:$0xff]
    %v305 = vld [vmem:[#allocation5 + $0x6c8] sm:$0xff]
    %v306 = vld [vmem:[#allocation5 + $0x6d0] sm:$0xff]
    %v307 = vld [vmem:[#allocation5 + $0x6d8] sm:$0xff]
    %v308 = vld [vmem:[#allocation5 + $0x6e0] sm:$0xff]
    %v309 = vld [vmem:[#allocation5 + $0x6e8] sm:$0xff]
    %v310 = vld [vmem:[#allocation5 + $0x6f0] sm:$0xff]
    %v311 = vld [vmem:[#allocation5 + $0x6f8] sm:$0xff]
    %v312 = vld [vmem:[#allocation5 + $0x700] sm:$0xff]
    %v313 = vld [vmem:[#allocation5 + $0x708] sm:$0xff]
    %v314 = vld [vmem:[#allocation5 + $0x710] sm:$0xff]
    %v315 = vld [vmem:[#allocation5 + $0x718] sm:$0xff]
    %v316 = vld [vmem:[#allocation5 + $0x720] sm:$0xff]
    %v317 = vld [vmem:[#allocation5 + $0x728] sm:$0xff]
    %v318 = vld [vmem:[#allocation5 + $0x730] sm:$0xff]
    %v319 = vld [vmem:[#allocation5 + $0x738] sm:$0xff]
    %v320 = vld [vmem:[#allocation5 + $0x740] sm:$0xff]
    %v321 = vld [vmem:[#allocation5 + $0x748] sm:$0xff]
    %v322 = vld [vmem:[#allocation5 + $0x750] sm:$0xff]
    %v323 = vld [vmem:[#allocation5 + $0x758] sm:$0xff]
    %v324 = vld [vmem:[#allocation5 + $0x760] sm:$0xff]
    %v325 = vld [vmem:[#allocation5 + $0x768] sm:$0xff]
    %v326 = vld [vmem:[#allocation5 + $0x770] sm:$0xff]
    %v327 = vld [vmem:[#allocation5 + $0x778] sm:$0xff]
    %v328 = vld [vmem:[#allocation5 + $0x780] sm:$0xff]
    %v329 = vld [vmem:[#allocation5 + $0x788] sm:$0xff]
    %v330 = vld [vmem:[#allocation5 + $0x790] sm:$0xff]
    %v331 = vld [vmem:[#allocation5 + $0x798] sm:$0xff]
    %v332 = vld [vmem:[#allocation5 + $0x7a0] sm:$0xff]
    %v333 = vld [vmem:[#allocation5 + $0x7a8] sm:$0xff]
    %v334 = vld [vmem:[#allocation5 + $0x7b0] sm:$0xff]
    %v335 = vld [vmem:[#allocation5 + $0x7b8] sm:$0xff]
    %v336 = vld [vmem:[#allocation5 + $0x7c0] sm:$0xff]
    %v337 = vld [vmem:[#allocation5 + $0x7c8] sm:$0xff]
    %v338 = vld [vmem:[#allocation5 + $0x7d0] sm:$0xff]
    %v339 = vld [vmem:[#allocation5 + $0x7d8] sm:$0xff]
    %v340 = vld [vmem:[#allocation5 + $0x7e0] sm:$0xff]
    %v341 = vld [vmem:[#allocation5 + $0x7e8] sm:$0xff]
    %v342 = vld [vmem:[#allocation5 + $0x7f0] sm:$0xff]
    %v343 = vld [vmem:[#allocation5 + $0x7f8] sm:$0xff]
    %v344 = vld [vmem:[#allocation5 + $0x800] sm:$0xff]
    %v345 = vld [vmem:[#allocation5 + $0x808] sm:$0xff]
    %v346 = vld [vmem:[#allocation5 + $0x810] sm:$0xff]
    %v347 = vld [vmem:[#allocation5 + $0x818] sm:$0xff]
    %v348 = vld [vmem:[#allocation5 + $0x820] sm:$0xff]
    %v349 = vld [vmem:[#allocation5 + $0x828] sm:$0xff]
    %v350 = vld [vmem:[#allocation5 + $0x830] sm:$0xff]
    %v351 = vld [vmem:[#allocation5 + $0x838] sm:$0xff]
    %v352 = vld [vmem:[#allocation5 + $0x840] sm:$0xff]
    %v353 = vld [vmem:[#allocation5 + $0x848] sm:$0xff]
    %v354 = vld [vmem:[#allocation5 + $0x850] sm:$0xff]
    %v355 = vld [vmem:[#allocation5 + $0x858] sm:$0xff]
    %v356 = vld [vmem:[#allocation5 + $0x860] sm:$0xff]
    %v357 = vld [vmem:[#allocation5 + $0x868] sm:$0xff]
    %v358 = vld [vmem:[#allocation5 + $0x870] sm:$0xff]
    %v359 = vld [vmem:[#allocation5 + $0x878] sm:$0xff]
    %v360 = vld [vmem:[#allocation5 + $0x880] sm:$0xff]
    %v361 = vld [vmem:[#allocation5 + $0x888] sm:$0xff]
    %v362 = vld [vmem:[#allocation5 + $0x890] sm:$0xff]
    %v363 = vld [vmem:[#allocation5 + $0x898] sm:$0xff]
    %v364 = vld [vmem:[#allocation5 + $0x8a0] sm:$0xff]
    %v365 = vld [vmem:[#allocation5 + $0x8a8] sm:$0xff]
    %v366 = vld [vmem:[#allocation5 + $0x8b0] sm:$0xff]
    %v367 = vld [vmem:[#allocation5 + $0x8b8] sm:$0xff]
    %v368 = vld [vmem:[#allocation5 + $0x8c0] sm:$0xff]
    %v369 = vld [vmem:[#allocation5 + $0x8c8] sm:$0xff]
    %v370 = vld [vmem:[#allocation5 + $0x8d0] sm:$0xff]
    %v371 = vld [vmem:[#allocation5 + $0x8d8] sm:$0xff]
    %v372 = vld [vmem:[#allocation5 + $0x8e0] sm:$0xff]
    %v373 = vld [vmem:[#allocation5 + $0x8e8] sm:$0xff]
    %v374 = vld [vmem:[#allocation5 + $0x8f0] sm:$0xff]
    %v375 = vld [vmem:[#allocation5 + $0x8f8] sm:$0xff]
    %v376 = vld [vmem:[#allocation5 + $0x900] sm:$0xff]
    %v377 = vld [vmem:[#allocation5 + $0x908] sm:$0xff]
    %v378 = vld [vmem:[#allocation5 + $0x910] sm:$0xff]
    %v379 = vld [vmem:[#allocation5 + $0x918] sm:$0xff]
    %v380 = vld [vmem:[#allocation5 + $0x920] sm:$0xff]
    %v381 = vld [vmem:[#allocation5 + $0x928] sm:$0xff]
    %v382 = vld [vmem:[#allocation5 + $0x930] sm:$0xff]
    %v383 = vld [vmem:[#allocation5 + $0x938] sm:$0xff]
    %v384 = vld [vmem:[#allocation5 + $0x940] sm:$0xff]
    %v385 = vld [vmem:[#allocation5 + $0x948] sm:$0xff]
    %v386 = vld [vmem:[#allocation5 + $0x950] sm:$0xff]
    %v387 = vld [vmem:[#allocation5 + $0x958] sm:$0xff]
    %v388 = vld [vmem:[#allocation5 + $0x960] sm:$0xff]
    %v389 = vld [vmem:[#allocation5 + $0x968] sm:$0xff]
    %v390 = vld [vmem:[#allocation5 + $0x970] sm:$0xff]
    %v391 = vld [vmem:[#allocation5 + $0x978] sm:$0xff]
    %v392 = vld [vmem:[#allocation5 + $0x980] sm:$0xff]
    %v393 = vld [vmem:[#allocation5 + $0x988] sm:$0xff]
    %v394 = vld [vmem:[#allocation5 + $0x990] sm:$0xff]
    %v395 = vld [vmem:[#allocation5 + $0x998] sm:$0xff]
    %v396 = vld [vmem:[#allocation5 + $0x9a0] sm:$0xff]
    %v397 = vld [vmem:[#allocation5 + $0x9a8] sm:$0xff]
    %v398 = vld [vmem:[#allocation5 + $0x9b0] sm:$0xff]
    %v399 = vld [vmem:[#allocation5 + $0x9b8] sm:$0xff]
    %v400 = vld [vmem:[#allocation5 + $0x9c0] sm:$0xff]
    %v401 = vld [vmem:[#allocation5 + $0x9c8] sm:$0xff]
    %v402 = vld [vmem:[#allocation5 + $0x9d0] sm:$0xff]
    %v403 = vld [vmem:[#allocation5 + $0x9d8] sm:$0xff]
    %v404 = vld [vmem:[#allocation5 + $0x9e0] sm:$0xff]
    %v405 = vld [vmem:[#allocation5 + $0x9e8] sm:$0xff]
    %v406 = vld [vmem:[#allocation5 + $0x9f0] sm:$0xff]
    %v407 = vld [vmem:[#allocation5 + $0x9f8] sm:$0xff]
    %v408 = vld [vmem:[#allocation5 + $0xa00] sm:$0xff]
    %v409 = vld [vmem:[#allocation5 + $0xa08] sm:$0xff]
    %v410 = vld [vmem:[#allocation5 + $0xa10] sm:$0xff]
    %v411 = vld [vmem:[#allocation5 + $0xa18] sm:$0xff]
    %v412 = vld [vmem:[#allocation5 + $0xa20] sm:$0xff]
    %v413 = vld [vmem:[#allocation5 + $0xa28] sm:$0xff]
    %v414 = vld [vmem:[#allocation5 + $0xa30] sm:$0xff]
    %v415 = vld [vmem:[#allocation5 + $0xa38] sm:$0xff]
    %v416 = vld [vmem:[#allocation5 + $0xa40] sm:$0xff]
    %v417 = vld [vmem:[#allocation5 + $0xa48] sm:$0xff]
    %v418 = vld [vmem:[#allocation5 + $0xa50] sm:$0xff]
    %v419 = vld [vmem:[#allocation5 + $0xa58] sm:$0xff]
    %v420 = vld [vmem:[#allocation5 + $0xa60] sm:$0xff]
    %v421 = vld [vmem:[#allocation5 + $0xa68] sm:$0xff]
    %v422 = vld [vmem:[#allocation5 + $0xa70] sm:$0xff]
    %v423 = vld [vmem:[#allocation5 + $0xa78] sm:$0xff]
    %v424 = vld [vmem:[#allocation5 + $0xa80] sm:$0xff]
    %v425 = vld [vmem:[#allocation5 + $0xa88] sm:$0xff]
    %v426 = vld [vmem:[#allocation5 + $0xa90] sm:$0xff]
    %v427 = vld [vmem:[#allocation5 + $0xa98] sm:$0xff]
    %v428 = vld [vmem:[#allocation5 + $0xaa0] sm:$0xff]
    %v429 = vld [vmem:[#allocation5 + $0xaa8] sm:$0xff]
    %v430 = vld [vmem:[#allocation5 + $0xab0] sm:$0xff]
    %v431 = vld [vmem:[#allocation5 + $0xab8] sm:$0xff]
    %v432 = vld [vmem:[#allocation5 + $0xac0] sm:$0xff]
    %v433 = vld [vmem:[#allocation5 + $0xac8] sm:$0xff]
    %v434 = vld [vmem:[#allocation5 + $0xad0] sm:$0xff]
    %v435 = vld [vmem:[#allocation5 + $0xad8] sm:$0xff]
    %v436 = vld [vmem:[#allocation5 + $0xae0] sm:$0xff]
    %v437 = vld [vmem:[#allocation5 + $0xae8] sm:$0xff]
    %v438 = vld [vmem:[#allocation5 + $0xaf0] sm:$0xff]
    %v439 = vld [vmem:[#allocation5 + $0xaf8] sm:$0xff]
    %v440 = vld [vmem:[#allocation5 + $0xb00] sm:$0xff]
    %v441 = vld [vmem:[#allocation5 + $0xb08] sm:$0xff]
    %v442 = vld [vmem:[#allocation5 + $0xb10] sm:$0xff]
    %v443 = vld [vmem:[#allocation5 + $0xb18] sm:$0xff]
    %v444 = vld [vmem:[#allocation5 + $0xb20] sm:$0xff]
    %v445 = vld [vmem:[#allocation5 + $0xb28] sm:$0xff]
    %v446 = vld [vmem:[#allocation5 + $0xb30] sm:$0xff]
    %v447 = vld [vmem:[#allocation5 + $0xb38] sm:$0xff]
    %v448 = vld [vmem:[#allocation5 + $0xb40] sm:$0xff]
    %v449 = vld [vmem:[#allocation5 + $0xb48] sm:$0xff]
    %v450 = vld [vmem:[#allocation5 + $0xb50] sm:$0xff]
    %v451 = vld [vmem:[#allocation5 + $0xb58] sm:$0xff]
    %v452 = vld [vmem:[#allocation5 + $0xb60] sm:$0xff]
    %v453 = vld [vmem:[#allocation5 + $0xb68] sm:$0xff]
    %v454 = vld [vmem:[#allocation5 + $0xb70] sm:$0xff]
    %v455 = vld [vmem:[#allocation5 + $0xb78] sm:$0xff]
    %v456 = vld [vmem:[#allocation5 + $0xb80] sm:$0xff]
    %v457 = vld [vmem:[#allocation5 + $0xb88] sm:$0xff]
    %v458 = vld [vmem:[#allocation5 + $0xb90] sm:$0xff]
    %v459 = vld [vmem:[#allocation5 + $0xb98] sm:$0xff]
    %v460 = vld [vmem:[#allocation5 + $0xba0] sm:$0xff]
    %v461 = vld [vmem:[#allocation5 + $0xba8] sm:$0xff]
    %v462 = vld [vmem:[#allocation5 + $0xbb0] sm:$0xff]
    %v463 = vld [vmem:[#allocation5 + $0xbb8] sm:$0xff]
    %v464 = vld [vmem:[#allocation5 + $0xbc0] sm:$0xff]
    %v465 = vld [vmem:[#allocation5 + $0xbc8] sm:$0xff]
    %v466 = vld [vmem:[#allocation5 + $0xbd0] sm:$0xff]
    %v467 = vld [vmem:[#allocation5 + $0xbd8] sm:$0xff]
    %v468 = vld [vmem:[#allocation5 + $0xbe0] sm:$0xff]
    %v469 = vld [vmem:[#allocation5 + $0xbe8] sm:$0xff]
    %v470 = vld [vmem:[#allocation5 + $0xbf0] sm:$0xff]
    %v471 = vld [vmem:[#allocation5 + $0xbf8] sm:$0xff]
    %v472 = vld [vmem:[#allocation5 + $0xc00] sm:$0xff]
    %v473 = vld [vmem:[#allocation5 + $0xc08] sm:$0xff]
    %v474 = vld [vmem:[#allocation5 + $0xc10] sm:$0xff]
    %v475 = vld [vmem:[#allocation5 + $0xc18] sm:$0xff]
    %v476 = vld [vmem:[#allocation5 + $0xc20] sm:$0xff]
    %v477 = vld [vmem:[#allocation5 + $0xc28] sm:$0xff]
    %v478 = vld [vmem:[#allocation5 + $0xc30] sm:$0xff]
    %v479 = vld [vmem:[#allocation5 + $0xc38] sm:$0xff]
    %v480 = vld [vmem:[#allocation5 + $0xc40] sm:$0xff]
    %v481 = vld [vmem:[#allocation5 + $0xc48] sm:$0xff]
    %v482 = vld [vmem:[#allocation5 + $0xc50] sm:$0xff]
    %v483 = vld [vmem:[#allocation5 + $0xc58] sm:$0xff]
    %v484 = vld [vmem:[#allocation5 + $0xc60] sm:$0xff]
    %v485 = vld [vmem:[#allocation5 + $0xc68] sm:$0xff]
    %v486 = vld [vmem:[#allocation5 + $0xc70] sm:$0xff]
    %v487 = vld [vmem:[#allocation5 + $0xc78] sm:$0xff]
    %v488 = vld [vmem:[#allocation5 + $0xc80] sm:$0xff]
    %v489 = vld [vmem:[#allocation5 + $0xc88] sm:$0xff]
    %v490 = vld [vmem:[#allocation5 + $0xc90] sm:$0xff]
    %v491 = vld [vmem:[#allocation5 + $0xc98] sm:$0xff]
    %v492 = vld [vmem:[#allocation5 + $0xca0] sm:$0xff]
    %v493 = vld [vmem:[#allocation5 + $0xca8] sm:$0xff]
    %v494 = vld [vmem:[#allocation5 + $0xcb0] sm:$0xff]
    %v495 = vld [vmem:[#allocation5 + $0xcb8] sm:$0xff]
    %v496 = vld [vmem:[#allocation5 + $0xcc0] sm:$0xff]
    %v497 = vld [vmem:[#allocation5 + $0xcc8] sm:$0xff]
    %v498 = vld [vmem:[#allocation5 + $0xcd0] sm:$0xff]
    %v499 = vld [vmem:[#allocation5 + $0xcd8] sm:$0xff]
    %v500 = vld [vmem:[#allocation5 + $0xce0] sm:$0xff]
    %v501 = vld [vmem:[#allocation5 + $0xce8] sm:$0xff]
    %v502 = vld [vmem:[#allocation5 + $0xcf0] sm:$0xff]
    %v503 = vld [vmem:[#allocation5 + $0xcf8] sm:$0xff]
    %v504 = vld [vmem:[#allocation5 + $0xd00] sm:$0xff]
    %v505 = vld [vmem:[#allocation5 + $0xd08] sm:$0xff]
    %v506 = vld [vmem:[#allocation5 + $0xd10] sm:$0xff]
    %v507 = vld [vmem:[#allocation5 + $0xd18] sm:$0xff]
    %v508 = vld [vmem:[#allocation5 + $0xd20] sm:$0xff]
    %v509 = vld [vmem:[#allocation5 + $0xd28] sm:$0xff]
    %v510 = vld [vmem:[#allocation5 + $0xd30] sm:$0xff]
    %v511 = vld [vmem:[#allocation5 + $0xd38] sm:$0xff]
    %v512 = vld [vmem:[#allocation5 + $0xd40] sm:$0xff]
    %v513 = vld [vmem:[#allocation5 + $0xd48] sm:$0xff]
    %v514 = vld [vmem:[#allocation5 + $0xd50] sm:$0xff]
    %v515 = vld [vmem:[#allocation5 + $0xd58] sm:$0xff]
    %v516 = vld [vmem:[#allocation5 + $0xd60] sm:$0xff]
    %v517 = vld [vmem:[#allocation5 + $0xd68] sm:$0xff]
    %v518 = vld [vmem:[#allocation5 + $0xd70] sm:$0xff]
    %v519 = vld [vmem:[#allocation5 + $0xd78] sm:$0xff]
    %v520 = vld [vmem:[#allocation5 + $0xd80] sm:$0xff]
    %v521 = vld [vmem:[#allocation5 + $0xd88] sm:$0xff]
    %v522 = vld [vmem:[#allocation5 + $0xd90] sm:$0xff]
    %v523 = vld [vmem:[#allocation5 + $0xd98] sm:$0xff]
    %v524 = vld [vmem:[#allocation5 + $0xda0] sm:$0xff]
    %v525 = vld [vmem:[#allocation5 + $0xda8] sm:$0xff]
    %v526 = vld [vmem:[#allocation5 + $0xdb0] sm:$0xff]
    %v527 = vld [vmem:[#allocation5 + $0xdb8] sm:$0xff]
    %v528 = vld [vmem:[#allocation5 + $0xdc0] sm:$0xff]
    %v529 = vld [vmem:[#allocation5 + $0xdc8] sm:$0xff]
    %v530 = vld [vmem:[#allocation5 + $0xdd0] sm:$0xff]
    %v531 = vld [vmem:[#allocation5 + $0xdd8] sm:$0xff]
    %v532 = vld [vmem:[#allocation5 + $0xde0] sm:$0xff]
    %v533 = vld [vmem:[#allocation5 + $0xde8] sm:$0xff]
    %v534 = vld [vmem:[#allocation5 + $0xdf0] sm:$0xff]
    %v535 = vld [vmem:[#allocation5 + $0xdf8] sm:$0xff]
    %v536 = vld [vmem:[#allocation5 + $0xe00] sm:$0xff]
    %v537 = vld [vmem:[#allocation5 + $0xe08] sm:$0xff]
    %v538 = vld [vmem:[#allocation5 + $0xe10] sm:$0xff]
    %v539 = vld [vmem:[#allocation5 + $0xe18] sm:$0xff]
    %v540 = vld [vmem:[#allocation5 + $0xe20] sm:$0xff]
    %v541 = vld [vmem:[#allocation5 + $0xe28] sm:$0xff]
    %v542 = vld [vmem:[#allocation5 + $0xe30] sm:$0xff]
    %v543 = vld [vmem:[#allocation5 + $0xe38] sm:$0xff]
    %v544 = vld [vmem:[#allocation5 + $0xe40] sm:$0xff]
    %v545 = vld [vmem:[#allocation5 + $0xe48] sm:$0xff]
    %v546 = vld [vmem:[#allocation5 + $0xe50] sm:$0xff]
    %v547 = vld [vmem:[#allocation5 + $0xe58] sm:$0xff]
    %v548 = vld [vmem:[#allocation5 + $0xe60] sm:$0xff]
    %v549 = vld [vmem:[#allocation5 + $0xe68] sm:$0xff]
    %v550 = vld [vmem:[#allocation5 + $0xe70] sm:$0xff]
    %v551 = vld [vmem:[#allocation5 + $0xe78] sm:$0xff]
    %v552 = vld [vmem:[#allocation5 + $0xe80] sm:$0xff]
    %v553 = vld [vmem:[#allocation5 + $0xe88] sm:$0xff]
    %v554 = vld [vmem:[#allocation5 + $0xe90] sm:$0xff]
    %v555 = vld [vmem:[#allocation5 + $0xe98] sm:$0xff]
    %v556 = vld [vmem:[#allocation5 + $0xea0] sm:$0xff]
    %v557 = vld [vmem:[#allocation5 + $0xea8] sm:$0xff]
    %v558 = vld [vmem:[#allocation5 + $0xeb0] sm:$0xff]
    %v559 = vld [vmem:[#allocation5 + $0xeb8] sm:$0xff]
    %v560 = vld [vmem:[#allocation5 + $0xec0] sm:$0xff]
    %v561 = vld [vmem:[#allocation5 + $0xec8] sm:$0xff]
    %v562 = vld [vmem:[#allocation5 + $0xed0] sm:$0xff]
    %v563 = vld [vmem:[#allocation5 + $0xed8] sm:$0xff]
    %v564 = vld [vmem:[#allocation5 + $0xee0] sm:$0xff]
    %v565 = vld [vmem:[#allocation5 + $0xee8] sm:$0xff]
    %v566 = vld [vmem:[#allocation5 + $0xef0] sm:$0xff]
    %v567 = vld [vmem:[#allocation5 + $0xef8] sm:$0xff]
    %v568 = vld [vmem:[#allocation5 + $0xf00] sm:$0xff]
    %v569 = vld [vmem:[#allocation5 + $0xf08] sm:$0xff]
    %v570 = vld [vmem:[#allocation5 + $0xf10] sm:$0xff]
    %v571 = vld [vmem:[#allocation5 + $0xf18] sm:$0xff]
    %v572 = vld [vmem:[#allocation5 + $0xf20] sm:$0xff]
    %v573 = vld [vmem:[#allocation5 + $0xf28] sm:$0xff]
    %v574 = vld [vmem:[#allocation5 + $0xf30] sm:$0xff]
    %v575 = vld [vmem:[#allocation5 + $0xf38] sm:$0xff]
    %v576 = vld [vmem:[#allocation5 + $0xf40] sm:$0xff]
    %v577 = vld [vmem:[#allocation5 + $0xf48] sm:$0xff]
    %v578 = vld [vmem:[#allocation5 + $0xf50] sm:$0xff]
    %v579 = vld [vmem:[#allocation5 + $0xf58] sm:$0xff]
    %v580 = vld [vmem:[#allocation5 + $0xf60] sm:$0xff]
    %v581 = vld [vmem:[#allocation5 + $0xf68] sm:$0xff]
    %v582 = vld [vmem:[#allocation5 + $0xf70] sm:$0xff]
    %v583 = vld [vmem:[#allocation5 + $0xf78] sm:$0xff]
    %v584 = vld [vmem:[#allocation5 + $0xf80] sm:$0xff]
    %v585 = vld [vmem:[#allocation5 + $0xf88] sm:$0xff]
    %v586 = vld [vmem:[#allocation5 + $0xf90] sm:$0xff]
    %v587 = vld [vmem:[#allocation5 + $0xf98] sm:$0xff]
    %v588 = vld [vmem:[#allocation5 + $0xfa0] sm:$0xff]
    %v589 = vld [vmem:[#allocation5 + $0xfa8] sm:$0xff]
    %v590 = vld [vmem:[#allocation5 + $0xfb0] sm:$0xff]
    %v591 = vld [vmem:[#allocation5 + $0xfb8] sm:$0xff]
    %v592 = vld [vmem:[#allocation5 + $0xfc0] sm:$0xff]
    %v593 = vld [vmem:[#allocation5 + $0xfc8] sm:$0xff]
    %v594 = vld [vmem:[#allocation5 + $0xfd0] sm:$0xff]
    %v595 = vld [vmem:[#allocation5 + $0xfd8] sm:$0xff]
    %v596 = vld [vmem:[#allocation5 + $0xfe0] sm:$0xff]
    %v597 = vld [vmem:[#allocation5 + $0xfe8] sm:$0xff]
    %v598 = vld [vmem:[#allocation5 + $0xff0] sm:$0xff]
    %v599 = vld [vmem:[#allocation5 + $0xff8] sm:$0xff]
    %v600 = vld [vmem:[#allocation7] sm:$0xff]
    %v602 = vlaneseq
    %v603 = vshrl.u32 %v602, 7
    %v604 = vsub.s32 0, %v603
    %v605 = vrot.slane %v600, %v604
    %v606 = vlaneseq
    %v607 = vshrl.u32 %v606, 7
    %v608 = vsub.s32 1, %v607
    %v609 = vrot.slane %v600, %v608
    %v610 = vlaneseq
    %v611 = vshrl.u32 %v610, 7
    %v612 = vsub.s32 2, %v611
    %v613 = vrot.slane %v600, %v612
    %v614 = vlaneseq
    %v615 = vshrl.u32 %v614, 7
    %v616 = vsub.s32 3, %v615
    %v617 = vrot.slane %v600, %v616
    %v618 = vlaneseq
    %v619 = vshrl.u32 %v618, 7
    %v620 = vsub.s32 4, %v619
    %v621 = vrot.slane %v600, %v620
    %v622 = vlaneseq
    %v623 = vshrl.u32 %v622, 7
    %v624 = vsub.s32 5, %v623
    %v625 = vrot.slane %v600, %v624
    %v626 = vlaneseq
    %v627 = vshrl.u32 %v626, 7
    %v628 = vsub.s32 6, %v627
    %v629 = vrot.slane %v600, %v628
    %v630 = vlaneseq
    %v631 = vshrl.u32 %v630, 7
    %v632 = vsub.s32 7, %v631
    %v633 = vrot.slane %v600, %v632
    %v646 = vunpack.c.l.b16 %v84
    %v647 = vunpack.c.h.b16 %v84
    %v648 = vunpack.c.l.b16 %v85
    %v649 = vunpack.c.h.b16 %v85
    %v650 = vunpack.c.l.b16 %v86
    %v651 = vunpack.c.h.b16 %v86
    %v652 = vunpack.c.l.b16 %v87
    %v653 = vunpack.c.h.b16 %v87
    %v654 = vpack.c.b16 %v646, %v646
    %v655 = vpack.c.b16 %v647, %v647
    %v656 = vpack.c.b16 %v648, %v648
    %v657 = vpack.c.b16 %v649, %v649
    %v658 = vpack.c.b16 %v650, %v650
    %v659 = vpack.c.b16 %v651, %v651
    %v660 = vpack.c.b16 %v652, %v652
    %v661 = vpack.c.b16 %v653, %v653
    %v1182 = vunpack.c.l.b16 %v88
    %v1183 = vunpack.c.h.b16 %v88
    %v1184 = vunpack.c.l.b16 %v89
    %v1185 = vunpack.c.h.b16 %v89
    %v1186 = vunpack.c.l.b16 %v90
    %v1187 = vunpack.c.h.b16 %v90
    %v1188 = vunpack.c.l.b16 %v91
    %v1189 = vunpack.c.h.b16 %v91
    %v1190 = vunpack.c.l.b16 %v92
    %v1191 = vunpack.c.h.b16 %v92
    %v1192 = vunpack.c.l.b16 %v93
    %v1193 = vunpack.c.h.b16 %v93
    %v1194 = vunpack.c.l.b16 %v94
    %v1195 = vunpack.c.h.b16 %v94
    %v1196 = vunpack.c.l.b16 %v95
    %v1197 = vunpack.c.h.b16 %v95
    %v1198 = vunpack.c.l.b16 %v96
    %v1199 = vunpack.c.h.b16 %v96
    %v1200 = vunpack.c.l.b16 %v97
    %v1201 = vunpack.c.h.b16 %v97
    %v1202 = vunpack.c.l.b16 %v98
    %v1203 = vunpack.c.h.b16 %v98
    %v1204 = vunpack.c.l.b16 %v99
    %v1205 = vunpack.c.h.b16 %v99
    %v1206 = vunpack.c.l.b16 %v100
    %v1207 = vunpack.c.h.b16 %v100
    %v1208 = vunpack.c.l.b16 %v101
    %v1209 = vunpack.c.h.b16 %v101
    %v1210 = vunpack.c.l.b16 %v102
    %v1211 = vunpack.c.h.b16 %v102
    %v1212 = vunpack.c.l.b16 %v103
    %v1213 = vunpack.c.h.b16 %v103
    %v1214 = vunpack.c.l.b16 %v104
    %v1215 = vunpack.c.h.b16 %v104
    %v1216 = vunpack.c.l.b16 %v105
    %v1217 = vunpack.c.h.b16 %v105
    %v1218 = vunpack.c.l.b16 %v106
    %v1219 = vunpack.c.h.b16 %v106
    %v1220 = vunpack.c.l.b16 %v107
    %v1221 = vunpack.c.h.b16 %v107
    %v1222 = vunpack.c.l.b16 %v108
    %v1223 = vunpack.c.h.b16 %v108
    %v1224 = vunpack.c.l.b16 %v109
    %v1225 = vunpack.c.h.b16 %v109
    %v1226 = vunpack.c.l.b16 %v110
    %v1227 = vunpack.c.h.b16 %v110
    %v1228 = vunpack.c.l.b16 %v111
    %v1229 = vunpack.c.h.b16 %v111
    %v1230 = vunpack.c.l.b16 %v112
    %v1231 = vunpack.c.h.b16 %v112
    %v1232 = vunpack.c.l.b16 %v113
    %v1233 = vunpack.c.h.b16 %v113
    %v1234 = vunpack.c.l.b16 %v114
    %v1235 = vunpack.c.h.b16 %v114
    %v1236 = vunpack.c.l.b16 %v115
    %v1237 = vunpack.c.h.b16 %v115
    %v1238 = vunpack.c.l.b16 %v116
    %v1239 = vunpack.c.h.b16 %v116
    %v1240 = vunpack.c.l.b16 %v117
    %v1241 = vunpack.c.h.b16 %v117
    %v1242 = vunpack.c.l.b16 %v118
    %v1243 = vunpack.c.h.b16 %v118
    %v1244 = vunpack.c.l.b16 %v119
    %v1245 = vunpack.c.h.b16 %v119
    %v1246 = vunpack.c.l.b16 %v120
    %v1247 = vunpack.c.h.b16 %v120
    %v1248 = vunpack.c.l.b16 %v121
    %v1249 = vunpack.c.h.b16 %v121
    %v1250 = vunpack.c.l.b16 %v122
    %v1251 = vunpack.c.h.b16 %v122
    %v1252 = vunpack.c.l.b16 %v123
    %v1253 = vunpack.c.h.b16 %v123
    %v1254 = vunpack.c.l.b16 %v124
    %v1255 = vunpack.c.h.b16 %v124
    %v1256 = vunpack.c.l.b16 %v125
    %v1257 = vunpack.c.h.b16 %v125
    %v1258 = vunpack.c.l.b16 %v126
    %v1259 = vunpack.c.h.b16 %v126
    %v1260 = vunpack.c.l.b16 %v127
    %v1261 = vunpack.c.h.b16 %v127
    %v1262 = vunpack.c.l.b16 %v128
    %v1263 = vunpack.c.h.b16 %v128
    %v1264 = vunpack.c.l.b16 %v129
    %v1265 = vunpack.c.h.b16 %v129
    %v1266 = vunpack.c.l.b16 %v130
    %v1267 = vunpack.c.h.b16 %v130
    %v1268 = vunpack.c.l.b16 %v131
    %v1269 = vunpack.c.h.b16 %v131
    %v1270 = vunpack.c.l.b16 %v132
    %v1271 = vunpack.c.h.b16 %v132
    %v1272 = vunpack.c.l.b16 %v133
    %v1273 = vunpack.c.h.b16 %v133
    %v1274 = vunpack.c.l.b16 %v134
    %v1275 = vunpack.c.h.b16 %v134
    %v1276 = vunpack.c.l.b16 %v135
    %v1277 = vunpack.c.h.b16 %v135
    %v1278 = vunpack.c.l.b16 %v136
    %v1279 = vunpack.c.h.b16 %v136
    %v1280 = vunpack.c.l.b16 %v137
    %v1281 = vunpack.c.h.b16 %v137
    %v1282 = vunpack.c.l.b16 %v138
    %v1283 = vunpack.c.h.b16 %v138
    %v1284 = vunpack.c.l.b16 %v139
    %v1285 = vunpack.c.h.b16 %v139
    %v1286 = vunpack.c.l.b16 %v140
    %v1287 = vunpack.c.h.b16 %v140
    %v1288 = vunpack.c.l.b16 %v141
    %v1289 = vunpack.c.h.b16 %v141
    %v1290 = vunpack.c.l.b16 %v142
    %v1291 = vunpack.c.h.b16 %v142
    %v1292 = vunpack.c.l.b16 %v143
    %v1293 = vunpack.c.h.b16 %v143
    %v1294 = vunpack.c.l.b16 %v144
    %v1295 = vunpack.c.h.b16 %v144
    %v1296 = vunpack.c.l.b16 %v145
    %v1297 = vunpack.c.h.b16 %v145
    %v1298 = vunpack.c.l.b16 %v146
    %v1299 = vunpack.c.h.b16 %v146
    %v1300 = vunpack.c.l.b16 %v147
    %v1301 = vunpack.c.h.b16 %v147
    %v1302 = vunpack.c.l.b16 %v148
    %v1303 = vunpack.c.h.b16 %v148
    %v1304 = vunpack.c.l.b16 %v149
    %v1305 = vunpack.c.h.b16 %v149
    %v1306 = vunpack.c.l.b16 %v150
    %v1307 = vunpack.c.h.b16 %v150
    %v1308 = vunpack.c.l.b16 %v151
    %v1309 = vunpack.c.h.b16 %v151
    %v1310 = vunpack.c.l.b16 %v152
    %v1311 = vunpack.c.h.b16 %v152
    %v1312 = vunpack.c.l.b16 %v153
    %v1313 = vunpack.c.h.b16 %v153
    %v1314 = vunpack.c.l.b16 %v154
    %v1315 = vunpack.c.h.b16 %v154
    %v1316 = vunpack.c.l.b16 %v155
    %v1317 = vunpack.c.h.b16 %v155
    %v1318 = vunpack.c.l.b16 %v156
    %v1319 = vunpack.c.h.b16 %v156
    %v1320 = vunpack.c.l.b16 %v157
    %v1321 = vunpack.c.h.b16 %v157
    %v1322 = vunpack.c.l.b16 %v158
    %v1323 = vunpack.c.h.b16 %v158
    %v1324 = vunpack.c.l.b16 %v159
    %v1325 = vunpack.c.h.b16 %v159
    %v1326 = vunpack.c.l.b16 %v160
    %v1327 = vunpack.c.h.b16 %v160
    %v1328 = vunpack.c.l.b16 %v161
    %v1329 = vunpack.c.h.b16 %v161
    %v1330 = vunpack.c.l.b16 %v162
    %v1331 = vunpack.c.h.b16 %v162
    %v1332 = vunpack.c.l.b16 %v163
    %v1333 = vunpack.c.h.b16 %v163
    %v1334 = vunpack.c.l.b16 %v164
    %v1335 = vunpack.c.h.b16 %v164
    %v1336 = vunpack.c.l.b16 %v165
    %v1337 = vunpack.c.h.b16 %v165
    %v1338 = vunpack.c.l.b16 %v166
    %v1339 = vunpack.c.h.b16 %v166
    %v1340 = vunpack.c.l.b16 %v167
    %v1341 = vunpack.c.h.b16 %v167
    %v1342 = vunpack.c.l.b16 %v168
    %v1343 = vunpack.c.h.b16 %v168
    %v1344 = vunpack.c.l.b16 %v169
    %v1345 = vunpack.c.h.b16 %v169
    %v1346 = vunpack.c.l.b16 %v170
    %v1347 = vunpack.c.h.b16 %v170
    %v1348 = vunpack.c.l.b16 %v171
    %v1349 = vunpack.c.h.b16 %v171
    %v1350 = vunpack.c.l.b16 %v172
    %v1351 = vunpack.c.h.b16 %v172
    %v1352 = vunpack.c.l.b16 %v173
    %v1353 = vunpack.c.h.b16 %v173
    %v1354 = vunpack.c.l.b16 %v174
    %v1355 = vunpack.c.h.b16 %v174
    %v1356 = vunpack.c.l.b16 %v175
    %v1357 = vunpack.c.h.b16 %v175
    %v1358 = vunpack.c.l.b16 %v176
    %v1359 = vunpack.c.h.b16 %v176
    %v1360 = vunpack.c.l.b16 %v177
    %v1361 = vunpack.c.h.b16 %v177
    %v1362 = vunpack.c.l.b16 %v178
    %v1363 = vunpack.c.h.b16 %v178
    %v1364 = vunpack.c.l.b16 %v179
    %v1365 = vunpack.c.h.b16 %v179
    %v1366 = vunpack.c.l.b16 %v180
    %v1367 = vunpack.c.h.b16 %v180
    %v1368 = vunpack.c.l.b16 %v181
    %v1369 = vunpack.c.h.b16 %v181
    %v1370 = vunpack.c.l.b16 %v182
    %v1371 = vunpack.c.h.b16 %v182
    %v1372 = vunpack.c.l.b16 %v183
    %v1373 = vunpack.c.h.b16 %v183
    %v1374 = vunpack.c.l.b16 %v184
    %v1375 = vunpack.c.h.b16 %v184
    %v1376 = vunpack.c.l.b16 %v185
    %v1377 = vunpack.c.h.b16 %v185
    %v1378 = vunpack.c.l.b16 %v186
    %v1379 = vunpack.c.h.b16 %v186
    %v1380 = vunpack.c.l.b16 %v187
    %v1381 = vunpack.c.h.b16 %v187
    %v1382 = vunpack.c.l.b16 %v188
    %v1383 = vunpack.c.h.b16 %v188
    %v1384 = vunpack.c.l.b16 %v189
    %v1385 = vunpack.c.h.b16 %v189
    %v1386 = vunpack.c.l.b16 %v190
    %v1387 = vunpack.c.h.b16 %v190
    %v1388 = vunpack.c.l.b16 %v191
    %v1389 = vunpack.c.h.b16 %v191
    %v1390 = vunpack.c.l.b16 %v192
    %v1391 = vunpack.c.h.b16 %v192
    %v1392 = vunpack.c.l.b16 %v193
    %v1393 = vunpack.c.h.b16 %v193
    %v1394 = vunpack.c.l.b16 %v194
    %v1395 = vunpack.c.h.b16 %v194
    %v1396 = vunpack.c.l.b16 %v195
    %v1397 = vunpack.c.h.b16 %v195
    %v1398 = vunpack.c.l.b16 %v196
    %v1399 = vunpack.c.h.b16 %v196
    %v1400 = vunpack.c.l.b16 %v197
    %v1401 = vunpack.c.h.b16 %v197
    %v1402 = vunpack.c.l.b16 %v198
    %v1403 = vunpack.c.h.b16 %v198
    %v1404 = vunpack.c.l.b16 %v199
    %v1405 = vunpack.c.h.b16 %v199
    %v1406 = vunpack.c.l.b16 %v200
    %v1407 = vunpack.c.h.b16 %v200
    %v1408 = vunpack.c.l.b16 %v201
    %v1409 = vunpack.c.h.b16 %v201
    %v1410 = vunpack.c.l.b16 %v202
    %v1411 = vunpack.c.h.b16 %v202
    %v1412 = vunpack.c.l.b16 %v203
    %v1413 = vunpack.c.h.b16 %v203
    %v1414 = vunpack.c.l.b16 %v204
    %v1415 = vunpack.c.h.b16 %v204
    %v1416 = vunpack.c.l.b16 %v205
    %v1417 = vunpack.c.h.b16 %v205
    %v1418 = vunpack.c.l.b16 %v206
    %v1419 = vunpack.c.h.b16 %v206
    %v1420 = vunpack.c.l.b16 %v207
    %v1421 = vunpack.c.h.b16 %v207
    %v1422 = vunpack.c.l.b16 %v208
    %v1423 = vunpack.c.h.b16 %v208
    %v1424 = vunpack.c.l.b16 %v209
    %v1425 = vunpack.c.h.b16 %v209
    %v1426 = vunpack.c.l.b16 %v210
    %v1427 = vunpack.c.h.b16 %v210
    %v1428 = vunpack.c.l.b16 %v211
    %v1429 = vunpack.c.h.b16 %v211
    %v1430 = vunpack.c.l.b16 %v212
    %v1431 = vunpack.c.h.b16 %v212
    %v1432 = vunpack.c.l.b16 %v213
    %v1433 = vunpack.c.h.b16 %v213
    %v1434 = vunpack.c.l.b16 %v214
    %v1435 = vunpack.c.h.b16 %v214
    %v1436 = vunpack.c.l.b16 %v215
    %v1437 = vunpack.c.h.b16 %v215
    %v1438 = vunpack.c.l.b16 %v216
    %v1439 = vunpack.c.h.b16 %v216
    %v1440 = vunpack.c.l.b16 %v217
    %v1441 = vunpack.c.h.b16 %v217
    %v1442 = vunpack.c.l.b16 %v218
    %v1443 = vunpack.c.h.b16 %v218
    %v1444 = vunpack.c.l.b16 %v219
    %v1445 = vunpack.c.h.b16 %v219
    %v1446 = vunpack.c.l.b16 %v220
    %v1447 = vunpack.c.h.b16 %v220
    %v1448 = vunpack.c.l.b16 %v221
    %v1449 = vunpack.c.h.b16 %v221
    %v1450 = vunpack.c.l.b16 %v222
    %v1451 = vunpack.c.h.b16 %v222
    %v1452 = vunpack.c.l.b16 %v223
    %v1453 = vunpack.c.h.b16 %v223
    %v1454 = vunpack.c.l.b16 %v224
    %v1455 = vunpack.c.h.b16 %v224
    %v1456 = vunpack.c.l.b16 %v225
    %v1457 = vunpack.c.h.b16 %v225
    %v1458 = vunpack.c.l.b16 %v226
    %v1459 = vunpack.c.h.b16 %v226
    %v1460 = vunpack.c.l.b16 %v227
    %v1461 = vunpack.c.h.b16 %v227
    %v1462 = vunpack.c.l.b16 %v228
    %v1463 = vunpack.c.h.b16 %v228
    %v1464 = vunpack.c.l.b16 %v229
    %v1465 = vunpack.c.h.b16 %v229
    %v1466 = vunpack.c.l.b16 %v230
    %v1467 = vunpack.c.h.b16 %v230
    %v1468 = vunpack.c.l.b16 %v231
    %v1469 = vunpack.c.h.b16 %v231
    %v1470 = vunpack.c.l.b16 %v232
    %v1471 = vunpack.c.h.b16 %v232
    %v1472 = vunpack.c.l.b16 %v233
    %v1473 = vunpack.c.h.b16 %v233
    %v1474 = vunpack.c.l.b16 %v234
    %v1475 = vunpack.c.h.b16 %v234
    %v1476 = vunpack.c.l.b16 %v235
    %v1477 = vunpack.c.h.b16 %v235
    %v1478 = vunpack.c.l.b16 %v236
    %v1479 = vunpack.c.h.b16 %v236
    %v1480 = vunpack.c.l.b16 %v237
    %v1481 = vunpack.c.h.b16 %v237
    %v1482 = vunpack.c.l.b16 %v238
    %v1483 = vunpack.c.h.b16 %v238
    %v1484 = vunpack.c.l.b16 %v239
    %v1485 = vunpack.c.h.b16 %v239
    %v1486 = vunpack.c.l.b16 %v240
    %v1487 = vunpack.c.h.b16 %v240
    %v1488 = vunpack.c.l.b16 %v241
    %v1489 = vunpack.c.h.b16 %v241
    %v1490 = vunpack.c.l.b16 %v242
    %v1491 = vunpack.c.h.b16 %v242
    %v1492 = vunpack.c.l.b16 %v243
    %v1493 = vunpack.c.h.b16 %v243
    %v1494 = vunpack.c.l.b16 %v244
    %v1495 = vunpack.c.h.b16 %v244
    %v1496 = vunpack.c.l.b16 %v245
    %v1497 = vunpack.c.h.b16 %v245
    %v1498 = vunpack.c.l.b16 %v246
    %v1499 = vunpack.c.h.b16 %v246
    %v1500 = vunpack.c.l.b16 %v247
    %v1501 = vunpack.c.h.b16 %v247
    %v1502 = vunpack.c.l.b16 %v248
    %v1503 = vunpack.c.h.b16 %v248
    %v1504 = vunpack.c.l.b16 %v249
    %v1505 = vunpack.c.h.b16 %v249
    %v1506 = vunpack.c.l.b16 %v250
    %v1507 = vunpack.c.h.b16 %v250
    %v1508 = vunpack.c.l.b16 %v251
    %v1509 = vunpack.c.h.b16 %v251
    %v1510 = vunpack.c.l.b16 %v252
    %v1511 = vunpack.c.h.b16 %v252
    %v1512 = vunpack.c.l.b16 %v253
    %v1513 = vunpack.c.h.b16 %v253
    %v1514 = vunpack.c.l.b16 %v254
    %v1515 = vunpack.c.h.b16 %v254
    %v1516 = vunpack.c.l.b16 %v255
    %v1517 = vunpack.c.h.b16 %v255
    %v1518 = vunpack.c.l.b16 %v256
    %v1519 = vunpack.c.h.b16 %v256
    %v1520 = vunpack.c.l.b16 %v257
    %v1521 = vunpack.c.h.b16 %v257
    %v1522 = vunpack.c.l.b16 %v258
    %v1523 = vunpack.c.h.b16 %v258
    %v1524 = vunpack.c.l.b16 %v259
    %v1525 = vunpack.c.h.b16 %v259
    %v1526 = vunpack.c.l.b16 %v260
    %v1527 = vunpack.c.h.b16 %v260
    %v1528 = vunpack.c.l.b16 %v261
    %v1529 = vunpack.c.h.b16 %v261
    %v1530 = vunpack.c.l.b16 %v262
    %v1531 = vunpack.c.h.b16 %v262
    %v1532 = vunpack.c.l.b16 %v263
    %v1533 = vunpack.c.h.b16 %v263
    %v1534 = vunpack.c.l.b16 %v264
    %v1535 = vunpack.c.h.b16 %v264
    %v1536 = vunpack.c.l.b16 %v265
    %v1537 = vunpack.c.h.b16 %v265
    %v1538 = vunpack.c.l.b16 %v266
    %v1539 = vunpack.c.h.b16 %v266
    %v1540 = vunpack.c.l.b16 %v267
    %v1541 = vunpack.c.h.b16 %v267
    %v1542 = vunpack.c.l.b16 %v268
    %v1543 = vunpack.c.h.b16 %v268
    %v1544 = vunpack.c.l.b16 %v269
    %v1545 = vunpack.c.h.b16 %v269
    %v1546 = vunpack.c.l.b16 %v270
    %v1547 = vunpack.c.h.b16 %v270
    %v1548 = vunpack.c.l.b16 %v271
    %v1549 = vunpack.c.h.b16 %v271
    %v1550 = vunpack.c.l.b16 %v272
    %v1551 = vunpack.c.h.b16 %v272
    %v1552 = vunpack.c.l.b16 %v273
    %v1553 = vunpack.c.h.b16 %v273
    %v1554 = vunpack.c.l.b16 %v274
    %v1555 = vunpack.c.h.b16 %v274
    %v1556 = vunpack.c.l.b16 %v275
    %v1557 = vunpack.c.h.b16 %v275
    %v1558 = vunpack.c.l.b16 %v276
    %v1559 = vunpack.c.h.b16 %v276
    %v1560 = vunpack.c.l.b16 %v277
    %v1561 = vunpack.c.h.b16 %v277
    %v1562 = vunpack.c.l.b16 %v278
    %v1563 = vunpack.c.h.b16 %v278
    %v1564 = vunpack.c.l.b16 %v279
    %v1565 = vunpack.c.h.b16 %v279
    %v1566 = vunpack.c.l.b16 %v280
    %v1567 = vunpack.c.h.b16 %v280
    %v1568 = vunpack.c.l.b16 %v281
    %v1569 = vunpack.c.h.b16 %v281
    %v1570 = vunpack.c.l.b16 %v282
    %v1571 = vunpack.c.h.b16 %v282
    %v1572 = vunpack.c.l.b16 %v283
    %v1573 = vunpack.c.h.b16 %v283
    %v1574 = vunpack.c.l.b16 %v284
    %v1575 = vunpack.c.h.b16 %v284
    %v1576 = vunpack.c.l.b16 %v285
    %v1577 = vunpack.c.h.b16 %v285
    %v1578 = vunpack.c.l.b16 %v286
    %v1579 = vunpack.c.h.b16 %v286
    %v1580 = vunpack.c.l.b16 %v287
    %v1581 = vunpack.c.h.b16 %v287
    %v1582 = vunpack.c.l.b16 %v288
    %v1583 = vunpack.c.h.b16 %v288
    %v1584 = vunpack.c.l.b16 %v289
    %v1585 = vunpack.c.h.b16 %v289
    %v1586 = vunpack.c.l.b16 %v290
    %v1587 = vunpack.c.h.b16 %v290
    %v1588 = vunpack.c.l.b16 %v291
    %v1589 = vunpack.c.h.b16 %v291
    %v1590 = vunpack.c.l.b16 %v292
    %v1591 = vunpack.c.h.b16 %v292
    %v1592 = vunpack.c.l.b16 %v293
    %v1593 = vunpack.c.h.b16 %v293
    %v1594 = vunpack.c.l.b16 %v294
    %v1595 = vunpack.c.h.b16 %v294
    %v1596 = vunpack.c.l.b16 %v295
    %v1597 = vunpack.c.h.b16 %v295
    %v1598 = vunpack.c.l.b16 %v296
    %v1599 = vunpack.c.h.b16 %v296
    %v1600 = vunpack.c.l.b16 %v297
    %v1601 = vunpack.c.h.b16 %v297
    %v1602 = vunpack.c.l.b16 %v298
    %v1603 = vunpack.c.h.b16 %v298
    %v1604 = vunpack.c.l.b16 %v299
    %v1605 = vunpack.c.h.b16 %v299
    %v1606 = vunpack.c.l.b16 %v300
    %v1607 = vunpack.c.h.b16 %v300
    %v1608 = vunpack.c.l.b16 %v301
    %v1609 = vunpack.c.h.b16 %v301
    %v1610 = vunpack.c.l.b16 %v302
    %v1611 = vunpack.c.h.b16 %v302
    %v1612 = vunpack.c.l.b16 %v303
    %v1613 = vunpack.c.h.b16 %v303
    %v1614 = vunpack.c.l.b16 %v304
    %v1615 = vunpack.c.h.b16 %v304
    %v1616 = vunpack.c.l.b16 %v305
    %v1617 = vunpack.c.h.b16 %v305
    %v1618 = vunpack.c.l.b16 %v306
    %v1619 = vunpack.c.h.b16 %v306
    %v1620 = vunpack.c.l.b16 %v307
    %v1621 = vunpack.c.h.b16 %v307
    %v1622 = vunpack.c.l.b16 %v308
    %v1623 = vunpack.c.h.b16 %v308
    %v1624 = vunpack.c.l.b16 %v309
    %v1625 = vunpack.c.h.b16 %v309
    %v1626 = vunpack.c.l.b16 %v310
    %v1627 = vunpack.c.h.b16 %v310
    %v1628 = vunpack.c.l.b16 %v311
    %v1629 = vunpack.c.h.b16 %v311
    %v1630 = vunpack.c.l.b16 %v312
    %v1631 = vunpack.c.h.b16 %v312
    %v1632 = vunpack.c.l.b16 %v313
    %v1633 = vunpack.c.h.b16 %v313
    %v1634 = vunpack.c.l.b16 %v314
    %v1635 = vunpack.c.h.b16 %v314
    %v1636 = vunpack.c.l.b16 %v315
    %v1637 = vunpack.c.h.b16 %v315
    %v1638 = vunpack.c.l.b16 %v316
    %v1639 = vunpack.c.h.b16 %v316
    %v1640 = vunpack.c.l.b16 %v317
    %v1641 = vunpack.c.h.b16 %v317
    %v1642 = vunpack.c.l.b16 %v318
    %v1643 = vunpack.c.h.b16 %v318
    %v1644 = vunpack.c.l.b16 %v319
    %v1645 = vunpack.c.h.b16 %v319
    %v1646 = vunpack.c.l.b16 %v320
    %v1647 = vunpack.c.h.b16 %v320
    %v1648 = vunpack.c.l.b16 %v321
    %v1649 = vunpack.c.h.b16 %v321
    %v1650 = vunpack.c.l.b16 %v322
    %v1651 = vunpack.c.h.b16 %v322
    %v1652 = vunpack.c.l.b16 %v323
    %v1653 = vunpack.c.h.b16 %v323
    %v1654 = vunpack.c.l.b16 %v324
    %v1655 = vunpack.c.h.b16 %v324
    %v1656 = vunpack.c.l.b16 %v325
    %v1657 = vunpack.c.h.b16 %v325
    %v1658 = vunpack.c.l.b16 %v326
    %v1659 = vunpack.c.h.b16 %v326
    %v1660 = vunpack.c.l.b16 %v327
    %v1661 = vunpack.c.h.b16 %v327
    %v1662 = vunpack.c.l.b16 %v328
    %v1663 = vunpack.c.h.b16 %v328
    %v1664 = vunpack.c.l.b16 %v329
    %v1665 = vunpack.c.h.b16 %v329
    %v1666 = vunpack.c.l.b16 %v330
    %v1667 = vunpack.c.h.b16 %v330
    %v1668 = vunpack.c.l.b16 %v331
    %v1669 = vunpack.c.h.b16 %v331
    %v1670 = vunpack.c.l.b16 %v332
    %v1671 = vunpack.c.h.b16 %v332
    %v1672 = vunpack.c.l.b16 %v333
    %v1673 = vunpack.c.h.b16 %v333
    %v1674 = vunpack.c.l.b16 %v334
    %v1675 = vunpack.c.h.b16 %v334
    %v1676 = vunpack.c.l.b16 %v335
    %v1677 = vunpack.c.h.b16 %v335
    %v1678 = vunpack.c.l.b16 %v336
    %v1679 = vunpack.c.h.b16 %v336
    %v1680 = vunpack.c.l.b16 %v337
    %v1681 = vunpack.c.h.b16 %v337
    %v1682 = vunpack.c.l.b16 %v338
    %v1683 = vunpack.c.h.b16 %v338
    %v1684 = vunpack.c.l.b16 %v339
    %v1685 = vunpack.c.h.b16 %v339
    %v1686 = vunpack.c.l.b16 %v340
    %v1687 = vunpack.c.h.b16 %v340
    %v1688 = vunpack.c.l.b16 %v341
    %v1689 = vunpack.c.h.b16 %v341
    %v1690 = vunpack.c.l.b16 %v342
    %v1691 = vunpack.c.h.b16 %v342
    %v1692 = vunpack.c.l.b16 %v343
    %v1693 = vunpack.c.h.b16 %v343
    %v1694 = vunpack.c.l.b16 %v344
    %v1695 = vunpack.c.h.b16 %v344
    %v1696 = vunpack.c.l.b16 %v345
    %v1697 = vunpack.c.h.b16 %v345
    %v1698 = vunpack.c.l.b16 %v346
    %v1699 = vunpack.c.h.b16 %v346
    %v1700 = vunpack.c.l.b16 %v347
    %v1701 = vunpack.c.h.b16 %v347
    %v1702 = vunpack.c.l.b16 %v348
    %v1703 = vunpack.c.h.b16 %v348
    %v1704 = vunpack.c.l.b16 %v349
    %v1705 = vunpack.c.h.b16 %v349
    %v1706 = vunpack.c.l.b16 %v350
    %v1707 = vunpack.c.h.b16 %v350
    %v1708 = vunpack.c.l.b16 %v351
    %v1709 = vunpack.c.h.b16 %v351
    %v1710 = vunpack.c.l.b16 %v352
    %v1711 = vunpack.c.h.b16 %v352
    %v1712 = vunpack.c.l.b16 %v353
    %v1713 = vunpack.c.h.b16 %v353
    %v1714 = vunpack.c.l.b16 %v354
    %v1715 = vunpack.c.h.b16 %v354
    %v1716 = vunpack.c.l.b16 %v355
    %v1717 = vunpack.c.h.b16 %v355
    %v1718 = vunpack.c.l.b16 %v356
    %v1719 = vunpack.c.h.b16 %v356
    %v1720 = vunpack.c.l.b16 %v357
    %v1721 = vunpack.c.h.b16 %v357
    %v1722 = vunpack.c.l.b16 %v358
    %v1723 = vunpack.c.h.b16 %v358
    %v1724 = vunpack.c.l.b16 %v359
    %v1725 = vunpack.c.h.b16 %v359
    %v1726 = vunpack.c.l.b16 %v360
    %v1727 = vunpack.c.h.b16 %v360
    %v1728 = vunpack.c.l.b16 %v361
    %v1729 = vunpack.c.h.b16 %v361
    %v1730 = vunpack.c.l.b16 %v362
    %v1731 = vunpack.c.h.b16 %v362
    %v1732 = vunpack.c.l.b16 %v363
    %v1733 = vunpack.c.h.b16 %v363
    %v1734 = vunpack.c.l.b16 %v364
    %v1735 = vunpack.c.h.b16 %v364
    %v1736 = vunpack.c.l.b16 %v365
    %v1737 = vunpack.c.h.b16 %v365
    %v1738 = vunpack.c.l.b16 %v366
    %v1739 = vunpack.c.h.b16 %v366
    %v1740 = vunpack.c.l.b16 %v367
    %v1741 = vunpack.c.h.b16 %v367
    %v1742 = vunpack.c.l.b16 %v368
    %v1743 = vunpack.c.h.b16 %v368
    %v1744 = vunpack.c.l.b16 %v369
    %v1745 = vunpack.c.h.b16 %v369
    %v1746 = vunpack.c.l.b16 %v370
    %v1747 = vunpack.c.h.b16 %v370
    %v1748 = vunpack.c.l.b16 %v371
    %v1749 = vunpack.c.h.b16 %v371
    %v1750 = vunpack.c.l.b16 %v372
    %v1751 = vunpack.c.h.b16 %v372
    %v1752 = vunpack.c.l.b16 %v373
    %v1753 = vunpack.c.h.b16 %v373
    %v1754 = vunpack.c.l.b16 %v374
    %v1755 = vunpack.c.h.b16 %v374
    %v1756 = vunpack.c.l.b16 %v375
    %v1757 = vunpack.c.h.b16 %v375
    %v1758 = vunpack.c.l.b16 %v376
    %v1759 = vunpack.c.h.b16 %v376
    %v1760 = vunpack.c.l.b16 %v377
    %v1761 = vunpack.c.h.b16 %v377
    %v1762 = vunpack.c.l.b16 %v378
    %v1763 = vunpack.c.h.b16 %v378
    %v1764 = vunpack.c.l.b16 %v379
    %v1765 = vunpack.c.h.b16 %v379
    %v1766 = vunpack.c.l.b16 %v380
    %v1767 = vunpack.c.h.b16 %v380
    %v1768 = vunpack.c.l.b16 %v381
    %v1769 = vunpack.c.h.b16 %v381
    %v1770 = vunpack.c.l.b16 %v382
    %v1771 = vunpack.c.h.b16 %v382
    %v1772 = vunpack.c.l.b16 %v383
    %v1773 = vunpack.c.h.b16 %v383
    %v1774 = vunpack.c.l.b16 %v384
    %v1775 = vunpack.c.h.b16 %v384
    %v1776 = vunpack.c.l.b16 %v385
    %v1777 = vunpack.c.h.b16 %v385
    %v1778 = vunpack.c.l.b16 %v386
    %v1779 = vunpack.c.h.b16 %v386
    %v1780 = vunpack.c.l.b16 %v387
    %v1781 = vunpack.c.h.b16 %v387
    %v1782 = vunpack.c.l.b16 %v388
    %v1783 = vunpack.c.h.b16 %v388
    %v1784 = vunpack.c.l.b16 %v389
    %v1785 = vunpack.c.h.b16 %v389
    %v1786 = vunpack.c.l.b16 %v390
    %v1787 = vunpack.c.h.b16 %v390
    %v1788 = vunpack.c.l.b16 %v391
    %v1789 = vunpack.c.h.b16 %v391
    %v1790 = vunpack.c.l.b16 %v392
    %v1791 = vunpack.c.h.b16 %v392
    %v1792 = vunpack.c.l.b16 %v393
    %v1793 = vunpack.c.h.b16 %v393
    %v1794 = vunpack.c.l.b16 %v394
    %v1795 = vunpack.c.h.b16 %v394
    %v1796 = vunpack.c.l.b16 %v395
    %v1797 = vunpack.c.h.b16 %v395
    %v1798 = vunpack.c.l.b16 %v396
    %v1799 = vunpack.c.h.b16 %v396
    %v1800 = vunpack.c.l.b16 %v397
    %v1801 = vunpack.c.h.b16 %v397
    %v1802 = vunpack.c.l.b16 %v398
    %v1803 = vunpack.c.h.b16 %v398
    %v1804 = vunpack.c.l.b16 %v399
    %v1805 = vunpack.c.h.b16 %v399
    %v1806 = vunpack.c.l.b16 %v400
    %v1807 = vunpack.c.h.b16 %v400
    %v1808 = vunpack.c.l.b16 %v401
    %v1809 = vunpack.c.h.b16 %v401
    %v1810 = vunpack.c.l.b16 %v402
    %v1811 = vunpack.c.h.b16 %v402
    %v1812 = vunpack.c.l.b16 %v403
    %v1813 = vunpack.c.h.b16 %v403
    %v1814 = vunpack.c.l.b16 %v404
    %v1815 = vunpack.c.h.b16 %v404
    %v1816 = vunpack.c.l.b16 %v405
    %v1817 = vunpack.c.h.b16 %v405
    %v1818 = vunpack.c.l.b16 %v406
    %v1819 = vunpack.c.h.b16 %v406
    %v1820 = vunpack.c.l.b16 %v407
    %v1821 = vunpack.c.h.b16 %v407
    %v1822 = vunpack.c.l.b16 %v408
    %v1823 = vunpack.c.h.b16 %v408
    %v1824 = vunpack.c.l.b16 %v409
    %v1825 = vunpack.c.h.b16 %v409
    %v1826 = vunpack.c.l.b16 %v410
    %v1827 = vunpack.c.h.b16 %v410
    %v1828 = vunpack.c.l.b16 %v411
    %v1829 = vunpack.c.h.b16 %v411
    %v1830 = vunpack.c.l.b16 %v412
    %v1831 = vunpack.c.h.b16 %v412
    %v1832 = vunpack.c.l.b16 %v413
    %v1833 = vunpack.c.h.b16 %v413
    %v1834 = vunpack.c.l.b16 %v414
    %v1835 = vunpack.c.h.b16 %v414
    %v1836 = vunpack.c.l.b16 %v415
    %v1837 = vunpack.c.h.b16 %v415
    %v1838 = vunpack.c.l.b16 %v416
    %v1839 = vunpack.c.h.b16 %v416
    %v1840 = vunpack.c.l.b16 %v417
    %v1841 = vunpack.c.h.b16 %v417
    %v1842 = vunpack.c.l.b16 %v418
    %v1843 = vunpack.c.h.b16 %v418
    %v1844 = vunpack.c.l.b16 %v419
    %v1845 = vunpack.c.h.b16 %v419
    %v1846 = vunpack.c.l.b16 %v420
    %v1847 = vunpack.c.h.b16 %v420
    %v1848 = vunpack.c.l.b16 %v421
    %v1849 = vunpack.c.h.b16 %v421
    %v1850 = vunpack.c.l.b16 %v422
    %v1851 = vunpack.c.h.b16 %v422
    %v1852 = vunpack.c.l.b16 %v423
    %v1853 = vunpack.c.h.b16 %v423
    %v1854 = vunpack.c.l.b16 %v424
    %v1855 = vunpack.c.h.b16 %v424
    %v1856 = vunpack.c.l.b16 %v425
    %v1857 = vunpack.c.h.b16 %v425
    %v1858 = vunpack.c.l.b16 %v426
    %v1859 = vunpack.c.h.b16 %v426
    %v1860 = vunpack.c.l.b16 %v427
    %v1861 = vunpack.c.h.b16 %v427
    %v1862 = vunpack.c.l.b16 %v428
    %v1863 = vunpack.c.h.b16 %v428
    %v1864 = vunpack.c.l.b16 %v429
    %v1865 = vunpack.c.h.b16 %v429
    %v1866 = vunpack.c.l.b16 %v430
    %v1867 = vunpack.c.h.b16 %v430
    %v1868 = vunpack.c.l.b16 %v431
    %v1869 = vunpack.c.h.b16 %v431
    %v1870 = vunpack.c.l.b16 %v432
    %v1871 = vunpack.c.h.b16 %v432
    %v1872 = vunpack.c.l.b16 %v433
    %v1873 = vunpack.c.h.b16 %v433
    %v1874 = vunpack.c.l.b16 %v434
    %v1875 = vunpack.c.h.b16 %v434
    %v1876 = vunpack.c.l.b16 %v435
    %v1877 = vunpack.c.h.b16 %v435
    %v1878 = vunpack.c.l.b16 %v436
    %v1879 = vunpack.c.h.b16 %v436
    %v1880 = vunpack.c.l.b16 %v437
    %v1881 = vunpack.c.h.b16 %v437
    %v1882 = vunpack.c.l.b16 %v438
    %v1883 = vunpack.c.h.b16 %v438
    %v1884 = vunpack.c.l.b16 %v439
    %v1885 = vunpack.c.h.b16 %v439
    %v1886 = vunpack.c.l.b16 %v440
    %v1887 = vunpack.c.h.b16 %v440
    %v1888 = vunpack.c.l.b16 %v441
    %v1889 = vunpack.c.h.b16 %v441
    %v1890 = vunpack.c.l.b16 %v442
    %v1891 = vunpack.c.h.b16 %v442
    %v1892 = vunpack.c.l.b16 %v443
    %v1893 = vunpack.c.h.b16 %v443
    %v1894 = vunpack.c.l.b16 %v444
    %v1895 = vunpack.c.h.b16 %v444
    %v1896 = vunpack.c.l.b16 %v445
    %v1897 = vunpack.c.h.b16 %v445
    %v1898 = vunpack.c.l.b16 %v446
    %v1899 = vunpack.c.h.b16 %v446
    %v1900 = vunpack.c.l.b16 %v447
    %v1901 = vunpack.c.h.b16 %v447
    %v1902 = vunpack.c.l.b16 %v448
    %v1903 = vunpack.c.h.b16 %v448
    %v1904 = vunpack.c.l.b16 %v449
    %v1905 = vunpack.c.h.b16 %v449
    %v1906 = vunpack.c.l.b16 %v450
    %v1907 = vunpack.c.h.b16 %v450
    %v1908 = vunpack.c.l.b16 %v451
    %v1909 = vunpack.c.h.b16 %v451
    %v1910 = vunpack.c.l.b16 %v452
    %v1911 = vunpack.c.h.b16 %v452
    %v1912 = vunpack.c.l.b16 %v453
    %v1913 = vunpack.c.h.b16 %v453
    %v1914 = vunpack.c.l.b16 %v454
    %v1915 = vunpack.c.h.b16 %v454
    %v1916 = vunpack.c.l.b16 %v455
    %v1917 = vunpack.c.h.b16 %v455
    %v1918 = vunpack.c.l.b16 %v456
    %v1919 = vunpack.c.h.b16 %v456
    %v1920 = vunpack.c.l.b16 %v457
    %v1921 = vunpack.c.h.b16 %v457
    %v1922 = vunpack.c.l.b16 %v458
    %v1923 = vunpack.c.h.b16 %v458
    %v1924 = vunpack.c.l.b16 %v459
    %v1925 = vunpack.c.h.b16 %v459
    %v1926 = vunpack.c.l.b16 %v460
    %v1927 = vunpack.c.h.b16 %v460
    %v1928 = vunpack.c.l.b16 %v461
    %v1929 = vunpack.c.h.b16 %v461
    %v1930 = vunpack.c.l.b16 %v462
    %v1931 = vunpack.c.h.b16 %v462
    %v1932 = vunpack.c.l.b16 %v463
    %v1933 = vunpack.c.h.b16 %v463
    %v1934 = vunpack.c.l.b16 %v464
    %v1935 = vunpack.c.h.b16 %v464
    %v1936 = vunpack.c.l.b16 %v465
    %v1937 = vunpack.c.h.b16 %v465
    %v1938 = vunpack.c.l.b16 %v466
    %v1939 = vunpack.c.h.b16 %v466
    %v1940 = vunpack.c.l.b16 %v467
    %v1941 = vunpack.c.h.b16 %v467
    %v1942 = vunpack.c.l.b16 %v468
    %v1943 = vunpack.c.h.b16 %v468
    %v1944 = vunpack.c.l.b16 %v469
    %v1945 = vunpack.c.h.b16 %v469
    %v1946 = vunpack.c.l.b16 %v470
    %v1947 = vunpack.c.h.b16 %v470
    %v1948 = vunpack.c.l.b16 %v471
    %v1949 = vunpack.c.h.b16 %v471
    %v1950 = vunpack.c.l.b16 %v472
    %v1951 = vunpack.c.h.b16 %v472
    %v1952 = vunpack.c.l.b16 %v473
    %v1953 = vunpack.c.h.b16 %v473
    %v1954 = vunpack.c.l.b16 %v474
    %v1955 = vunpack.c.h.b16 %v474
    %v1956 = vunpack.c.l.b16 %v475
    %v1957 = vunpack.c.h.b16 %v475
    %v1958 = vunpack.c.l.b16 %v476
    %v1959 = vunpack.c.h.b16 %v476
    %v1960 = vunpack.c.l.b16 %v477
    %v1961 = vunpack.c.h.b16 %v477
    %v1962 = vunpack.c.l.b16 %v478
    %v1963 = vunpack.c.h.b16 %v478
    %v1964 = vunpack.c.l.b16 %v479
    %v1965 = vunpack.c.h.b16 %v479
    %v1966 = vunpack.c.l.b16 %v480
    %v1967 = vunpack.c.h.b16 %v480
    %v1968 = vunpack.c.l.b16 %v481
    %v1969 = vunpack.c.h.b16 %v481
    %v1970 = vunpack.c.l.b16 %v482
    %v1971 = vunpack.c.h.b16 %v482
    %v1972 = vunpack.c.l.b16 %v483
    %v1973 = vunpack.c.h.b16 %v483
    %v1974 = vunpack.c.l.b16 %v484
    %v1975 = vunpack.c.h.b16 %v484
    %v1976 = vunpack.c.l.b16 %v485
    %v1977 = vunpack.c.h.b16 %v485
    %v1978 = vunpack.c.l.b16 %v486
    %v1979 = vunpack.c.h.b16 %v486
    %v1980 = vunpack.c.l.b16 %v487
    %v1981 = vunpack.c.h.b16 %v487
    %v1982 = vunpack.c.l.b16 %v488
    %v1983 = vunpack.c.h.b16 %v488
    %v1984 = vunpack.c.l.b16 %v489
    %v1985 = vunpack.c.h.b16 %v489
    %v1986 = vunpack.c.l.b16 %v490
    %v1987 = vunpack.c.h.b16 %v490
    %v1988 = vunpack.c.l.b16 %v491
    %v1989 = vunpack.c.h.b16 %v491
    %v1990 = vunpack.c.l.b16 %v492
    %v1991 = vunpack.c.h.b16 %v492
    %v1992 = vunpack.c.l.b16 %v493
    %v1993 = vunpack.c.h.b16 %v493
    %v1994 = vunpack.c.l.b16 %v494
    %v1995 = vunpack.c.h.b16 %v494
    %v1996 = vunpack.c.l.b16 %v495
    %v1997 = vunpack.c.h.b16 %v495
    %v1998 = vunpack.c.l.b16 %v496
    %v1999 = vunpack.c.h.b16 %v496
    %v2000 = vunpack.c.l.b16 %v497
    %v2001 = vunpack.c.h.b16 %v497
    %v2002 = vunpack.c.l.b16 %v498
    %v2003 = vunpack.c.h.b16 %v498
    %v2004 = vunpack.c.l.b16 %v499
    %v2005 = vunpack.c.h.b16 %v499
    %v2006 = vunpack.c.l.b16 %v500
    %v2007 = vunpack.c.h.b16 %v500
    %v2008 = vunpack.c.l.b16 %v501
    %v2009 = vunpack.c.h.b16 %v501
    %v2010 = vunpack.c.l.b16 %v502
    %v2011 = vunpack.c.h.b16 %v502
    %v2012 = vunpack.c.l.b16 %v503
    %v2013 = vunpack.c.h.b16 %v503
    %v2014 = vunpack.c.l.b16 %v504
    %v2015 = vunpack.c.h.b16 %v504
    %v2016 = vunpack.c.l.b16 %v505
    %v2017 = vunpack.c.h.b16 %v505
    %v2018 = vunpack.c.l.b16 %v506
    %v2019 = vunpack.c.h.b16 %v506
    %v2020 = vunpack.c.l.b16 %v507
    %v2021 = vunpack.c.h.b16 %v507
    %v2022 = vunpack.c.l.b16 %v508
    %v2023 = vunpack.c.h.b16 %v508
    %v2024 = vunpack.c.l.b16 %v509
    %v2025 = vunpack.c.h.b16 %v509
    %v2026 = vunpack.c.l.b16 %v510
    %v2027 = vunpack.c.h.b16 %v510
    %v2028 = vunpack.c.l.b16 %v511
    %v2029 = vunpack.c.h.b16 %v511
    %v2030 = vunpack.c.l.b16 %v512
    %v2031 = vunpack.c.h.b16 %v512
    %v2032 = vunpack.c.l.b16 %v513
    %v2033 = vunpack.c.h.b16 %v513
    %v2034 = vunpack.c.l.b16 %v514
    %v2035 = vunpack.c.h.b16 %v514
    %v2036 = vunpack.c.l.b16 %v515
    %v2037 = vunpack.c.h.b16 %v515
    %v2038 = vunpack.c.l.b16 %v516
    %v2039 = vunpack.c.h.b16 %v516
    %v2040 = vunpack.c.l.b16 %v517
    %v2041 = vunpack.c.h.b16 %v517
    %v2042 = vunpack.c.l.b16 %v518
    %v2043 = vunpack.c.h.b16 %v518
    %v2044 = vunpack.c.l.b16 %v519
    %v2045 = vunpack.c.h.b16 %v519
    %v2046 = vunpack.c.l.b16 %v520
    %v2047 = vunpack.c.h.b16 %v520
    %v2048 = vunpack.c.l.b16 %v521
    %v2049 = vunpack.c.h.b16 %v521
    %v2050 = vunpack.c.l.b16 %v522
    %v2051 = vunpack.c.h.b16 %v522
    %v2052 = vunpack.c.l.b16 %v523
    %v2053 = vunpack.c.h.b16 %v523
    %v2054 = vunpack.c.l.b16 %v524
    %v2055 = vunpack.c.h.b16 %v524
    %v2056 = vunpack.c.l.b16 %v525
    %v2057 = vunpack.c.h.b16 %v525
    %v2058 = vunpack.c.l.b16 %v526
    %v2059 = vunpack.c.h.b16 %v526
    %v2060 = vunpack.c.l.b16 %v527
    %v2061 = vunpack.c.h.b16 %v527
    %v2062 = vunpack.c.l.b16 %v528
    %v2063 = vunpack.c.h.b16 %v528
    %v2064 = vunpack.c.l.b16 %v529
    %v2065 = vunpack.c.h.b16 %v529
    %v2066 = vunpack.c.l.b16 %v530
    %v2067 = vunpack.c.h.b16 %v530
    %v2068 = vunpack.c.l.b16 %v531
    %v2069 = vunpack.c.h.b16 %v531
    %v2070 = vunpack.c.l.b16 %v532
    %v2071 = vunpack.c.h.b16 %v532
    %v2072 = vunpack.c.l.b16 %v533
    %v2073 = vunpack.c.h.b16 %v533
    %v2074 = vunpack.c.l.b16 %v534
    %v2075 = vunpack.c.h.b16 %v534
    %v2076 = vunpack.c.l.b16 %v535
    %v2077 = vunpack.c.h.b16 %v535
    %v2078 = vunpack.c.l.b16 %v536
    %v2079 = vunpack.c.h.b16 %v536
    %v2080 = vunpack.c.l.b16 %v537
    %v2081 = vunpack.c.h.b16 %v537
    %v2082 = vunpack.c.l.b16 %v538
    %v2083 = vunpack.c.h.b16 %v538
    %v2084 = vunpack.c.l.b16 %v539
    %v2085 = vunpack.c.h.b16 %v539
    %v2086 = vunpack.c.l.b16 %v540
    %v2087 = vunpack.c.h.b16 %v540
    %v2088 = vunpack.c.l.b16 %v541
    %v2089 = vunpack.c.h.b16 %v541
    %v2090 = vunpack.c.l.b16 %v542
    %v2091 = vunpack.c.h.b16 %v542
    %v2092 = vunpack.c.l.b16 %v543
    %v2093 = vunpack.c.h.b16 %v543
    %v2094 = vunpack.c.l.b16 %v544
    %v2095 = vunpack.c.h.b16 %v544
    %v2096 = vunpack.c.l.b16 %v545
    %v2097 = vunpack.c.h.b16 %v545
    %v2098 = vunpack.c.l.b16 %v546
    %v2099 = vunpack.c.h.b16 %v546
    %v2100 = vunpack.c.l.b16 %v547
    %v2101 = vunpack.c.h.b16 %v547
    %v2102 = vunpack.c.l.b16 %v548
    %v2103 = vunpack.c.h.b16 %v548
    %v2104 = vunpack.c.l.b16 %v549
    %v2105 = vunpack.c.h.b16 %v549
    %v2106 = vunpack.c.l.b16 %v550
    %v2107 = vunpack.c.h.b16 %v550
    %v2108 = vunpack.c.l.b16 %v551
    %v2109 = vunpack.c.h.b16 %v551
    %v2110 = vunpack.c.l.b16 %v552
    %v2111 = vunpack.c.h.b16 %v552
    %v2112 = vunpack.c.l.b16 %v553
    %v2113 = vunpack.c.h.b16 %v553
    %v2114 = vunpack.c.l.b16 %v554
    %v2115 = vunpack.c.h.b16 %v554
    %v2116 = vunpack.c.l.b16 %v555
    %v2117 = vunpack.c.h.b16 %v555
    %v2118 = vunpack.c.l.b16 %v556
    %v2119 = vunpack.c.h.b16 %v556
    %v2120 = vunpack.c.l.b16 %v557
    %v2121 = vunpack.c.h.b16 %v557
    %v2122 = vunpack.c.l.b16 %v558
    %v2123 = vunpack.c.h.b16 %v558
    %v2124 = vunpack.c.l.b16 %v559
    %v2125 = vunpack.c.h.b16 %v559
    %v2126 = vunpack.c.l.b16 %v560
    %v2127 = vunpack.c.h.b16 %v560
    %v2128 = vunpack.c.l.b16 %v561
    %v2129 = vunpack.c.h.b16 %v561
    %v2130 = vunpack.c.l.b16 %v562
    %v2131 = vunpack.c.h.b16 %v562
    %v2132 = vunpack.c.l.b16 %v563
    %v2133 = vunpack.c.h.b16 %v563
    %v2134 = vunpack.c.l.b16 %v564
    %v2135 = vunpack.c.h.b16 %v564
    %v2136 = vunpack.c.l.b16 %v565
    %v2137 = vunpack.c.h.b16 %v565
    %v2138 = vunpack.c.l.b16 %v566
    %v2139 = vunpack.c.h.b16 %v566
    %v2140 = vunpack.c.l.b16 %v567
    %v2141 = vunpack.c.h.b16 %v567
    %v2142 = vunpack.c.l.b16 %v568
    %v2143 = vunpack.c.h.b16 %v568
    %v2144 = vunpack.c.l.b16 %v569
    %v2145 = vunpack.c.h.b16 %v569
    %v2146 = vunpack.c.l.b16 %v570
    %v2147 = vunpack.c.h.b16 %v570
    %v2148 = vunpack.c.l.b16 %v571
    %v2149 = vunpack.c.h.b16 %v571
    %v2150 = vunpack.c.l.b16 %v572
    %v2151 = vunpack.c.h.b16 %v572
    %v2152 = vunpack.c.l.b16 %v573
    %v2153 = vunpack.c.h.b16 %v573
    %v2154 = vunpack.c.l.b16 %v574
    %v2155 = vunpack.c.h.b16 %v574
    %v2156 = vunpack.c.l.b16 %v575
    %v2157 = vunpack.c.h.b16 %v575
    %v2158 = vunpack.c.l.b16 %v576
    %v2159 = vunpack.c.h.b16 %v576
    %v2160 = vunpack.c.l.b16 %v577
    %v2161 = vunpack.c.h.b16 %v577
    %v2162 = vunpack.c.l.b16 %v578
    %v2163 = vunpack.c.h.b16 %v578
    %v2164 = vunpack.c.l.b16 %v579
    %v2165 = vunpack.c.h.b16 %v579
    %v2166 = vunpack.c.l.b16 %v580
    %v2167 = vunpack.c.h.b16 %v580
    %v2168 = vunpack.c.l.b16 %v581
    %v2169 = vunpack.c.h.b16 %v581
    %v2170 = vunpack.c.l.b16 %v582
    %v2171 = vunpack.c.h.b16 %v582
    %v2172 = vunpack.c.l.b16 %v583
    %v2173 = vunpack.c.h.b16 %v583
    %v2174 = vunpack.c.l.b16 %v584
    %v2175 = vunpack.c.h.b16 %v584
    %v2176 = vunpack.c.l.b16 %v585
    %v2177 = vunpack.c.h.b16 %v585
    %v2178 = vunpack.c.l.b16 %v586
    %v2179 = vunpack.c.h.b16 %v586
    %v2180 = vunpack.c.l.b16 %v587
    %v2181 = vunpack.c.h.b16 %v587
    %v2182 = vunpack.c.l.b16 %v588
    %v2183 = vunpack.c.h.b16 %v588
    %v2184 = vunpack.c.l.b16 %v589
    %v2185 = vunpack.c.h.b16 %v589
    %v2186 = vunpack.c.l.b16 %v590
    %v2187 = vunpack.c.h.b16 %v590
    %v2188 = vunpack.c.l.b16 %v591
    %v2189 = vunpack.c.h.b16 %v591
    %v2190 = vunpack.c.l.b16 %v592
    %v2191 = vunpack.c.h.b16 %v592
    %v2192 = vunpack.c.l.b16 %v593
    %v2193 = vunpack.c.h.b16 %v593
    %v2194 = vunpack.c.l.b16 %v594
    %v2195 = vunpack.c.h.b16 %v594
    %v2196 = vunpack.c.l.b16 %v595
    %v2197 = vunpack.c.h.b16 %v595
    %v2198 = vunpack.c.l.b16 %v596
    %v2199 = vunpack.c.h.b16 %v596
    %v2200 = vunpack.c.l.b16 %v597
    %v2201 = vunpack.c.h.b16 %v597
    %v2202 = vunpack.c.l.b16 %v598
    %v2203 = vunpack.c.h.b16 %v598
    %v2204 = vunpack.c.l.b16 %v599
    %v2205 = vunpack.c.h.b16 %v599
    %v2206 = vpack.c.b16 %v1190, %v1182
    %v2207 = vpack.c.b16 %v1191, %v1183
    %v2208 = vpack.c.b16 %v1192, %v1184
    %v2209 = vpack.c.b16 %v1193, %v1185
    %v2210 = vpack.c.b16 %v1194, %v1186
    %v2211 = vpack.c.b16 %v1195, %v1187
    %v2212 = vpack.c.b16 %v1196, %v1188
    %v2213 = vpack.c.b16 %v1197, %v1189
    %v2214 = vpack.c.b16 %v1206, %v1198
    %v2215 = vpack.c.b16 %v1207, %v1199
    %v2216 = vpack.c.b16 %v1208, %v1200
    %v2217 = vpack.c.b16 %v1209, %v1201
    %v2218 = vpack.c.b16 %v1210, %v1202
    %v2219 = vpack.c.b16 %v1211, %v1203
    %v2220 = vpack.c.b16 %v1212, %v1204
    %v2221 = vpack.c.b16 %v1213, %v1205
    %v2222 = vpack.c.b16 %v1222, %v1214
    %v2223 = vpack.c.b16 %v1223, %v1215
    %v2224 = vpack.c.b16 %v1224, %v1216
    %v2225 = vpack.c.b16 %v1225, %v1217
    %v2226 = vpack.c.b16 %v1226, %v1218
    %v2227 = vpack.c.b16 %v1227, %v1219
    %v2228 = vpack.c.b16 %v1228, %v1220
    %v2229 = vpack.c.b16 %v1229, %v1221
    %v2230 = vpack.c.b16 %v1238, %v1230
    %v2231 = vpack.c.b16 %v1239, %v1231
    %v2232 = vpack.c.b16 %v1240, %v1232
    %v2233 = vpack.c.b16 %v1241, %v1233
    %v2234 = vpack.c.b16 %v1242, %v1234
    %v2235 = vpack.c.b16 %v1243, %v1235
    %v2236 = vpack.c.b16 %v1244, %v1236
    %v2237 = vpack.c.b16 %v1245, %v1237
    %v2238 = vpack.c.b16 %v1254, %v1246
    %v2239 = vpack.c.b16 %v1255, %v1247
    %v2240 = vpack.c.b16 %v1256, %v1248
    %v2241 = vpack.c.b16 %v1257, %v1249
    %v2242 = vpack.c.b16 %v1258, %v1250
    %v2243 = vpack.c.b16 %v1259, %v1251
    %v2244 = vpack.c.b16 %v1260, %v1252
    %v2245 = vpack.c.b16 %v1261, %v1253
    %v2246 = vpack.c.b16 %v1270, %v1262
    %v2247 = vpack.c.b16 %v1271, %v1263
    %v2248 = vpack.c.b16 %v1272, %v1264
    %v2249 = vpack.c.b16 %v1273, %v1265
    %v2250 = vpack.c.b16 %v1274, %v1266
    %v2251 = vpack.c.b16 %v1275, %v1267
    %v2252 = vpack.c.b16 %v1276, %v1268
    %v2253 = vpack.c.b16 %v1277, %v1269
    %v2254 = vpack.c.b16 %v1286, %v1278
    %v2255 = vpack.c.b16 %v1287, %v1279
    %v2256 = vpack.c.b16 %v1288, %v1280
    %v2257 = vpack.c.b16 %v1289, %v1281
    %v2258 = vpack.c.b16 %v1290, %v1282
    %v2259 = vpack.c.b16 %v1291, %v1283
    %v2260 = vpack.c.b16 %v1292, %v1284
    %v2261 = vpack.c.b16 %v1293, %v1285
    %v2262 = vpack.c.b16 %v1302, %v1294
    %v2263 = vpack.c.b16 %v1303, %v1295
    %v2264 = vpack.c.b16 %v1304, %v1296
    %v2265 = vpack.c.b16 %v1305, %v1297
    %v2266 = vpack.c.b16 %v1306, %v1298
    %v2267 = vpack.c.b16 %v1307, %v1299
    %v2268 = vpack.c.b16 %v1308, %v1300
    %v2269 = vpack.c.b16 %v1309, %v1301
    %v2270 = vpack.c.b16 %v1318, %v1310
    %v2271 = vpack.c.b16 %v1319, %v1311
    %v2272 = vpack.c.b16 %v1320, %v1312
    %v2273 = vpack.c.b16 %v1321, %v1313
    %v2274 = vpack.c.b16 %v1322, %v1314
    %v2275 = vpack.c.b16 %v1323, %v1315
    %v2276 = vpack.c.b16 %v1324, %v1316
    %v2277 = vpack.c.b16 %v1325, %v1317
    %v2278 = vpack.c.b16 %v1334, %v1326
    %v2279 = vpack.c.b16 %v1335, %v1327
    %v2280 = vpack.c.b16 %v1336, %v1328
    %v2281 = vpack.c.b16 %v1337, %v1329
    %v2282 = vpack.c.b16 %v1338, %v1330
    %v2283 = vpack.c.b16 %v1339, %v1331
    %v2284 = vpack.c.b16 %v1340, %v1332
    %v2285 = vpack.c.b16 %v1341, %v1333
    %v2286 = vpack.c.b16 %v1350, %v1342
    %v2287 = vpack.c.b16 %v1351, %v1343
    %v2288 = vpack.c.b16 %v1352, %v1344
    %v2289 = vpack.c.b16 %v1353, %v1345
    %v2290 = vpack.c.b16 %v1354, %v1346
    %v2291 = vpack.c.b16 %v1355, %v1347
    %v2292 = vpack.c.b16 %v1356, %v1348
    %v2293 = vpack.c.b16 %v1357, %v1349
    %v2294 = vpack.c.b16 %v1366, %v1358
    %v2295 = vpack.c.b16 %v1367, %v1359
    %v2296 = vpack.c.b16 %v1368, %v1360
    %v2297 = vpack.c.b16 %v1369, %v1361
    %v2298 = vpack.c.b16 %v1370, %v1362
    %v2299 = vpack.c.b16 %v1371, %v1363
    %v2300 = vpack.c.b16 %v1372, %v1364
    %v2301 = vpack.c.b16 %v1373, %v1365
    %v2302 = vpack.c.b16 %v1382, %v1374
    %v2303 = vpack.c.b16 %v1383, %v1375
    %v2304 = vpack.c.b16 %v1384, %v1376
    %v2305 = vpack.c.b16 %v1385, %v1377
    %v2306 = vpack.c.b16 %v1386, %v1378
    %v2307 = vpack.c.b16 %v1387, %v1379
    %v2308 = vpack.c.b16 %v1388, %v1380
    %v2309 = vpack.c.b16 %v1389, %v1381
    %v2310 = vpack.c.b16 %v1398, %v1390
    %v2311 = vpack.c.b16 %v1399, %v1391
    %v2312 = vpack.c.b16 %v1400, %v1392
    %v2313 = vpack.c.b16 %v1401, %v1393
    %v2314 = vpack.c.b16 %v1402, %v1394
    %v2315 = vpack.c.b16 %v1403, %v1395
    %v2316 = vpack.c.b16 %v1404, %v1396
    %v2317 = vpack.c.b16 %v1405, %v1397
    %v2318 = vpack.c.b16 %v1414, %v1406
    %v2319 = vpack.c.b16 %v1415, %v1407
    %v2320 = vpack.c.b16 %v1416, %v1408
    %v2321 = vpack.c.b16 %v1417, %v1409
    %v2322 = vpack.c.b16 %v1418, %v1410
    %v2323 = vpack.c.b16 %v1419, %v1411
    %v2324 = vpack.c.b16 %v1420, %v1412
    %v2325 = vpack.c.b16 %v1421, %v1413
    %v2326 = vpack.c.b16 %v1430, %v1422
    %v2327 = vpack.c.b16 %v1431, %v1423
    %v2328 = vpack.c.b16 %v1432, %v1424
    %v2329 = vpack.c.b16 %v1433, %v1425
    %v2330 = vpack.c.b16 %v1434, %v1426
    %v2331 = vpack.c.b16 %v1435, %v1427
    %v2332 = vpack.c.b16 %v1436, %v1428
    %v2333 = vpack.c.b16 %v1437, %v1429
    %v2334 = vpack.c.b16 %v1446, %v1438
    %v2335 = vpack.c.b16 %v1447, %v1439
    %v2336 = vpack.c.b16 %v1448, %v1440
    %v2337 = vpack.c.b16 %v1449, %v1441
    %v2338 = vpack.c.b16 %v1450, %v1442
    %v2339 = vpack.c.b16 %v1451, %v1443
    %v2340 = vpack.c.b16 %v1452, %v1444
    %v2341 = vpack.c.b16 %v1453, %v1445
    %v2342 = vpack.c.b16 %v1462, %v1454
    %v2343 = vpack.c.b16 %v1463, %v1455
    %v2344 = vpack.c.b16 %v1464, %v1456
    %v2345 = vpack.c.b16 %v1465, %v1457
    %v2346 = vpack.c.b16 %v1466, %v1458
    %v2347 = vpack.c.b16 %v1467, %v1459
    %v2348 = vpack.c.b16 %v1468, %v1460
    %v2349 = vpack.c.b16 %v1469, %v1461
    %v2350 = vpack.c.b16 %v1478, %v1470
    %v2351 = vpack.c.b16 %v1479, %v1471
    %v2352 = vpack.c.b16 %v1480, %v1472
    %v2353 = vpack.c.b16 %v1481, %v1473
    %v2354 = vpack.c.b16 %v1482, %v1474
    %v2355 = vpack.c.b16 %v1483, %v1475
    %v2356 = vpack.c.b16 %v1484, %v1476
    %v2357 = vpack.c.b16 %v1485, %v1477
    %v2358 = vpack.c.b16 %v1494, %v1486
    %v2359 = vpack.c.b16 %v1495, %v1487
    %v2360 = vpack.c.b16 %v1496, %v1488
    %v2361 = vpack.c.b16 %v1497, %v1489
    %v2362 = vpack.c.b16 %v1498, %v1490
    %v2363 = vpack.c.b16 %v1499, %v1491
    %v2364 = vpack.c.b16 %v1500, %v1492
    %v2365 = vpack.c.b16 %v1501, %v1493
    %v2366 = vpack.c.b16 %v1510, %v1502
    %v2367 = vpack.c.b16 %v1511, %v1503
    %v2368 = vpack.c.b16 %v1512, %v1504
    %v2369 = vpack.c.b16 %v1513, %v1505
    %v2370 = vpack.c.b16 %v1514, %v1506
    %v2371 = vpack.c.b16 %v1515, %v1507
    %v2372 = vpack.c.b16 %v1516, %v1508
    %v2373 = vpack.c.b16 %v1517, %v1509
    %v2374 = vpack.c.b16 %v1526, %v1518
    %v2375 = vpack.c.b16 %v1527, %v1519
    %v2376 = vpack.c.b16 %v1528, %v1520
    %v2377 = vpack.c.b16 %v1529, %v1521
    %v2378 = vpack.c.b16 %v1530, %v1522
    %v2379 = vpack.c.b16 %v1531, %v1523
    %v2380 = vpack.c.b16 %v1532, %v1524
    %v2381 = vpack.c.b16 %v1533, %v1525
    %v2382 = vpack.c.b16 %v1542, %v1534
    %v2383 = vpack.c.b16 %v1543, %v1535
    %v2384 = vpack.c.b16 %v1544, %v1536
    %v2385 = vpack.c.b16 %v1545, %v1537
    %v2386 = vpack.c.b16 %v1546, %v1538
    %v2387 = vpack.c.b16 %v1547, %v1539
    %v2388 = vpack.c.b16 %v1548, %v1540
    %v2389 = vpack.c.b16 %v1549, %v1541
    %v2390 = vpack.c.b16 %v1558, %v1550
    %v2391 = vpack.c.b16 %v1559, %v1551
    %v2392 = vpack.c.b16 %v1560, %v1552
    %v2393 = vpack.c.b16 %v1561, %v1553
    %v2394 = vpack.c.b16 %v1562, %v1554
    %v2395 = vpack.c.b16 %v1563, %v1555
    %v2396 = vpack.c.b16 %v1564, %v1556
    %v2397 = vpack.c.b16 %v1565, %v1557
    %v2398 = vpack.c.b16 %v1574, %v1566
    %v2399 = vpack.c.b16 %v1575, %v1567
    %v2400 = vpack.c.b16 %v1576, %v1568
    %v2401 = vpack.c.b16 %v1577, %v1569
    %v2402 = vpack.c.b16 %v1578, %v1570
    %v2403 = vpack.c.b16 %v1579, %v1571
    %v2404 = vpack.c.b16 %v1580, %v1572
    %v2405 = vpack.c.b16 %v1581, %v1573
    %v2406 = vpack.c.b16 %v1590, %v1582
    %v2407 = vpack.c.b16 %v1591, %v1583
    %v2408 = vpack.c.b16 %v1592, %v1584
    %v2409 = vpack.c.b16 %v1593, %v1585
    %v2410 = vpack.c.b16 %v1594, %v1586
    %v2411 = vpack.c.b16 %v1595, %v1587
    %v2412 = vpack.c.b16 %v1596, %v1588
    %v2413 = vpack.c.b16 %v1597, %v1589
    %v2414 = vpack.c.b16 %v1606, %v1598
    %v2415 = vpack.c.b16 %v1607, %v1599
    %v2416 = vpack.c.b16 %v1608, %v1600
    %v2417 = vpack.c.b16 %v1609, %v1601
    %v2418 = vpack.c.b16 %v1610, %v1602
    %v2419 = vpack.c.b16 %v1611, %v1603
    %v2420 = vpack.c.b16 %v1612, %v1604
    %v2421 = vpack.c.b16 %v1613, %v1605
    %v2422 = vpack.c.b16 %v1622, %v1614
    %v2423 = vpack.c.b16 %v1623, %v1615
    %v2424 = vpack.c.b16 %v1624, %v1616
    %v2425 = vpack.c.b16 %v1625, %v1617
    %v2426 = vpack.c.b16 %v1626, %v1618
    %v2427 = vpack.c.b16 %v1627, %v1619
    %v2428 = vpack.c.b16 %v1628, %v1620
    %v2429 = vpack.c.b16 %v1629, %v1621
    %v2430 = vpack.c.b16 %v1638, %v1630
    %v2431 = vpack.c.b16 %v1639, %v1631
    %v2432 = vpack.c.b16 %v1640, %v1632
    %v2433 = vpack.c.b16 %v1641, %v1633
    %v2434 = vpack.c.b16 %v1642, %v1634
    %v2435 = vpack.c.b16 %v1643, %v1635
    %v2436 = vpack.c.b16 %v1644, %v1636
    %v2437 = vpack.c.b16 %v1645, %v1637
    %v2438 = vpack.c.b16 %v1654, %v1646
    %v2439 = vpack.c.b16 %v1655, %v1647
    %v2440 = vpack.c.b16 %v1656, %v1648
    %v2441 = vpack.c.b16 %v1657, %v1649
    %v2442 = vpack.c.b16 %v1658, %v1650
    %v2443 = vpack.c.b16 %v1659, %v1651
    %v2444 = vpack.c.b16 %v1660, %v1652
    %v2445 = vpack.c.b16 %v1661, %v1653
    %v2446 = vpack.c.b16 %v1670, %v1662
    %v2447 = vpack.c.b16 %v1671, %v1663
    %v2448 = vpack.c.b16 %v1672, %v1664
    %v2449 = vpack.c.b16 %v1673, %v1665
    %v2450 = vpack.c.b16 %v1674, %v1666
    %v2451 = vpack.c.b16 %v1675, %v1667
    %v2452 = vpack.c.b16 %v1676, %v1668
    %v2453 = vpack.c.b16 %v1677, %v1669
    %v2454 = vpack.c.b16 %v1686, %v1678
    %v2455 = vpack.c.b16 %v1687, %v1679
    %v2456 = vpack.c.b16 %v1688, %v1680
    %v2457 = vpack.c.b16 %v1689, %v1681
    %v2458 = vpack.c.b16 %v1690, %v1682
    %v2459 = vpack.c.b16 %v1691, %v1683
    %v2460 = vpack.c.b16 %v1692, %v1684
    %v2461 = vpack.c.b16 %v1693, %v1685
    %v2462 = vpack.c.b16 %v1702, %v1694
    %v2463 = vpack.c.b16 %v1703, %v1695
    %v2464 = vpack.c.b16 %v1704, %v1696
    %v2465 = vpack.c.b16 %v1705, %v1697
    %v2466 = vpack.c.b16 %v1706, %v1698
    %v2467 = vpack.c.b16 %v1707, %v1699
    %v2468 = vpack.c.b16 %v1708, %v1700
    %v2469 = vpack.c.b16 %v1709, %v1701
    %v2470 = vpack.c.b16 %v1718, %v1710
    %v2471 = vpack.c.b16 %v1719, %v1711
    %v2472 = vpack.c.b16 %v1720, %v1712
    %v2473 = vpack.c.b16 %v1721, %v1713
    %v2474 = vpack.c.b16 %v1722, %v1714
    %v2475 = vpack.c.b16 %v1723, %v1715
    %v2476 = vpack.c.b16 %v1724, %v1716
    %v2477 = vpack.c.b16 %v1725, %v1717
    %v2478 = vpack.c.b16 %v1734, %v1726
    %v2479 = vpack.c.b16 %v1735, %v1727
    %v2480 = vpack.c.b16 %v1736, %v1728
    %v2481 = vpack.c.b16 %v1737, %v1729
    %v2482 = vpack.c.b16 %v1738, %v1730
    %v2483 = vpack.c.b16 %v1739, %v1731
    %v2484 = vpack.c.b16 %v1740, %v1732
    %v2485 = vpack.c.b16 %v1741, %v1733
    %v2486 = vpack.c.b16 %v1750, %v1742
    %v2487 = vpack.c.b16 %v1751, %v1743
    %v2488 = vpack.c.b16 %v1752, %v1744
    %v2489 = vpack.c.b16 %v1753, %v1745
    %v2490 = vpack.c.b16 %v1754, %v1746
    %v2491 = vpack.c.b16 %v1755, %v1747
    %v2492 = vpack.c.b16 %v1756, %v1748
    %v2493 = vpack.c.b16 %v1757, %v1749
    %v2494 = vpack.c.b16 %v1766, %v1758
    %v2495 = vpack.c.b16 %v1767, %v1759
    %v2496 = vpack.c.b16 %v1768, %v1760
    %v2497 = vpack.c.b16 %v1769, %v1761
    %v2498 = vpack.c.b16 %v1770, %v1762
    %v2499 = vpack.c.b16 %v1771, %v1763
    %v2500 = vpack.c.b16 %v1772, %v1764
    %v2501 = vpack.c.b16 %v1773, %v1765
    %v2502 = vpack.c.b16 %v1782, %v1774
    %v2503 = vpack.c.b16 %v1783, %v1775
    %v2504 = vpack.c.b16 %v1784, %v1776
    %v2505 = vpack.c.b16 %v1785, %v1777
    %v2506 = vpack.c.b16 %v1786, %v1778
    %v2507 = vpack.c.b16 %v1787, %v1779
    %v2508 = vpack.c.b16 %v1788, %v1780
    %v2509 = vpack.c.b16 %v1789, %v1781
    %v2510 = vpack.c.b16 %v1798, %v1790
    %v2511 = vpack.c.b16 %v1799, %v1791
    %v2512 = vpack.c.b16 %v1800, %v1792
    %v2513 = vpack.c.b16 %v1801, %v1793
    %v2514 = vpack.c.b16 %v1802, %v1794
    %v2515 = vpack.c.b16 %v1803, %v1795
    %v2516 = vpack.c.b16 %v1804, %v1796
    %v2517 = vpack.c.b16 %v1805, %v1797
    %v2518 = vpack.c.b16 %v1814, %v1806
    %v2519 = vpack.c.b16 %v1815, %v1807
    %v2520 = vpack.c.b16 %v1816, %v1808
    %v2521 = vpack.c.b16 %v1817, %v1809
    %v2522 = vpack.c.b16 %v1818, %v1810
    %v2523 = vpack.c.b16 %v1819, %v1811
    %v2524 = vpack.c.b16 %v1820, %v1812
    %v2525 = vpack.c.b16 %v1821, %v1813
    %v2526 = vpack.c.b16 %v1830, %v1822
    %v2527 = vpack.c.b16 %v1831, %v1823
    %v2528 = vpack.c.b16 %v1832, %v1824
    %v2529 = vpack.c.b16 %v1833, %v1825
    %v2530 = vpack.c.b16 %v1834, %v1826
    %v2531 = vpack.c.b16 %v1835, %v1827
    %v2532 = vpack.c.b16 %v1836, %v1828
    %v2533 = vpack.c.b16 %v1837, %v1829
    %v2534 = vpack.c.b16 %v1846, %v1838
    %v2535 = vpack.c.b16 %v1847, %v1839
    %v2536 = vpack.c.b16 %v1848, %v1840
    %v2537 = vpack.c.b16 %v1849, %v1841
    %v2538 = vpack.c.b16 %v1850, %v1842
    %v2539 = vpack.c.b16 %v1851, %v1843
    %v2540 = vpack.c.b16 %v1852, %v1844
    %v2541 = vpack.c.b16 %v1853, %v1845
    %v2542 = vpack.c.b16 %v1862, %v1854
    %v2543 = vpack.c.b16 %v1863, %v1855
    %v2544 = vpack.c.b16 %v1864, %v1856
    %v2545 = vpack.c.b16 %v1865, %v1857
    %v2546 = vpack.c.b16 %v1866, %v1858
    %v2547 = vpack.c.b16 %v1867, %v1859
    %v2548 = vpack.c.b16 %v1868, %v1860
    %v2549 = vpack.c.b16 %v1869, %v1861
    %v2550 = vpack.c.b16 %v1878, %v1870
    %v2551 = vpack.c.b16 %v1879, %v1871
    %v2552 = vpack.c.b16 %v1880, %v1872
    %v2553 = vpack.c.b16 %v1881, %v1873
    %v2554 = vpack.c.b16 %v1882, %v1874
    %v2555 = vpack.c.b16 %v1883, %v1875
    %v2556 = vpack.c.b16 %v1884, %v1876
    %v2557 = vpack.c.b16 %v1885, %v1877
    %v2558 = vpack.c.b16 %v1894, %v1886
    %v2559 = vpack.c.b16 %v1895, %v1887
    %v2560 = vpack.c.b16 %v1896, %v1888
    %v2561 = vpack.c.b16 %v1897, %v1889
    %v2562 = vpack.c.b16 %v1898, %v1890
    %v2563 = vpack.c.b16 %v1899, %v1891
    %v2564 = vpack.c.b16 %v1900, %v1892
    %v2565 = vpack.c.b16 %v1901, %v1893
    %v2566 = vpack.c.b16 %v1910, %v1902
    %v2567 = vpack.c.b16 %v1911, %v1903
    %v2568 = vpack.c.b16 %v1912, %v1904
    %v2569 = vpack.c.b16 %v1913, %v1905
    %v2570 = vpack.c.b16 %v1914, %v1906
    %v2571 = vpack.c.b16 %v1915, %v1907
    %v2572 = vpack.c.b16 %v1916, %v1908
    %v2573 = vpack.c.b16 %v1917, %v1909
    %v2574 = vpack.c.b16 %v1926, %v1918
    %v2575 = vpack.c.b16 %v1927, %v1919
    %v2576 = vpack.c.b16 %v1928, %v1920
    %v2577 = vpack.c.b16 %v1929, %v1921
    %v2578 = vpack.c.b16 %v1930, %v1922
    %v2579 = vpack.c.b16 %v1931, %v1923
    %v2580 = vpack.c.b16 %v1932, %v1924
    %v2581 = vpack.c.b16 %v1933, %v1925
    %v2582 = vpack.c.b16 %v1942, %v1934
    %v2583 = vpack.c.b16 %v1943, %v1935
    %v2584 = vpack.c.b16 %v1944, %v1936
    %v2585 = vpack.c.b16 %v1945, %v1937
    %v2586 = vpack.c.b16 %v1946, %v1938
    %v2587 = vpack.c.b16 %v1947, %v1939
    %v2588 = vpack.c.b16 %v1948, %v1940
    %v2589 = vpack.c.b16 %v1949, %v1941
    %v2590 = vpack.c.b16 %v1958, %v1950
    %v2591 = vpack.c.b16 %v1959, %v1951
    %v2592 = vpack.c.b16 %v1960, %v1952
    %v2593 = vpack.c.b16 %v1961, %v1953
    %v2594 = vpack.c.b16 %v1962, %v1954
    %v2595 = vpack.c.b16 %v1963, %v1955
    %v2596 = vpack.c.b16 %v1964, %v1956
    %v2597 = vpack.c.b16 %v1965, %v1957
    %v2598 = vpack.c.b16 %v1974, %v1966
    %v2599 = vpack.c.b16 %v1975, %v1967
    %v2600 = vpack.c.b16 %v1976, %v1968
    %v2601 = vpack.c.b16 %v1977, %v1969
    %v2602 = vpack.c.b16 %v1978, %v1970
    %v2603 = vpack.c.b16 %v1979, %v1971
    %v2604 = vpack.c.b16 %v1980, %v1972
    %v2605 = vpack.c.b16 %v1981, %v1973
    %v2606 = vpack.c.b16 %v1990, %v1982
    %v2607 = vpack.c.b16 %v1991, %v1983
    %v2608 = vpack.c.b16 %v1992, %v1984
    %v2609 = vpack.c.b16 %v1993, %v1985
    %v2610 = vpack.c.b16 %v1994, %v1986
    %v2611 = vpack.c.b16 %v1995, %v1987
    %v2612 = vpack.c.b16 %v1996, %v1988
    %v2613 = vpack.c.b16 %v1997, %v1989
    %v2614 = vpack.c.b16 %v2006, %v1998
    %v2615 = vpack.c.b16 %v2007, %v1999
    %v2616 = vpack.c.b16 %v2008, %v2000
    %v2617 = vpack.c.b16 %v2009, %v2001
    %v2618 = vpack.c.b16 %v2010, %v2002
    %v2619 = vpack.c.b16 %v2011, %v2003
    %v2620 = vpack.c.b16 %v2012, %v2004
    %v2621 = vpack.c.b16 %v2013, %v2005
    %v2622 = vpack.c.b16 %v2022, %v2014
    %v2623 = vpack.c.b16 %v2023, %v2015
    %v2624 = vpack.c.b16 %v2024, %v2016
    %v2625 = vpack.c.b16 %v2025, %v2017
    %v2626 = vpack.c.b16 %v2026, %v2018
    %v2627 = vpack.c.b16 %v2027, %v2019
    %v2628 = vpack.c.b16 %v2028, %v2020
    %v2629 = vpack.c.b16 %v2029, %v2021
    %v2630 = vpack.c.b16 %v2038, %v2030
    %v2631 = vpack.c.b16 %v2039, %v2031
    %v2632 = vpack.c.b16 %v2040, %v2032
    %v2633 = vpack.c.b16 %v2041, %v2033
    %v2634 = vpack.c.b16 %v2042, %v2034
    %v2635 = vpack.c.b16 %v2043, %v2035
    %v2636 = vpack.c.b16 %v2044, %v2036
    %v2637 = vpack.c.b16 %v2045, %v2037
    %v2638 = vpack.c.b16 %v2054, %v2046
    %v2639 = vpack.c.b16 %v2055, %v2047
    %v2640 = vpack.c.b16 %v2056, %v2048
    %v2641 = vpack.c.b16 %v2057, %v2049
    %v2642 = vpack.c.b16 %v2058, %v2050
    %v2643 = vpack.c.b16 %v2059, %v2051
    %v2644 = vpack.c.b16 %v2060, %v2052
    %v2645 = vpack.c.b16 %v2061, %v2053
    %v2646 = vpack.c.b16 %v2070, %v2062
    %v2647 = vpack.c.b16 %v2071, %v2063
    %v2648 = vpack.c.b16 %v2072, %v2064
    %v2649 = vpack.c.b16 %v2073, %v2065
    %v2650 = vpack.c.b16 %v2074, %v2066
    %v2651 = vpack.c.b16 %v2075, %v2067
    %v2652 = vpack.c.b16 %v2076, %v2068
    %v2653 = vpack.c.b16 %v2077, %v2069
    %v2654 = vpack.c.b16 %v2086, %v2078
    %v2655 = vpack.c.b16 %v2087, %v2079
    %v2656 = vpack.c.b16 %v2088, %v2080
    %v2657 = vpack.c.b16 %v2089, %v2081
    %v2658 = vpack.c.b16 %v2090, %v2082
    %v2659 = vpack.c.b16 %v2091, %v2083
    %v2660 = vpack.c.b16 %v2092, %v2084
    %v2661 = vpack.c.b16 %v2093, %v2085
    %v2662 = vpack.c.b16 %v2102, %v2094
    %v2663 = vpack.c.b16 %v2103, %v2095
    %v2664 = vpack.c.b16 %v2104, %v2096
    %v2665 = vpack.c.b16 %v2105, %v2097
    %v2666 = vpack.c.b16 %v2106, %v2098
    %v2667 = vpack.c.b16 %v2107, %v2099
    %v2668 = vpack.c.b16 %v2108, %v2100
    %v2669 = vpack.c.b16 %v2109, %v2101
    %v2670 = vpack.c.b16 %v2118, %v2110
    %v2671 = vpack.c.b16 %v2119, %v2111
    %v2672 = vpack.c.b16 %v2120, %v2112
    %v2673 = vpack.c.b16 %v2121, %v2113
    %v2674 = vpack.c.b16 %v2122, %v2114
    %v2675 = vpack.c.b16 %v2123, %v2115
    %v2676 = vpack.c.b16 %v2124, %v2116
    %v2677 = vpack.c.b16 %v2125, %v2117
    %v2678 = vpack.c.b16 %v2134, %v2126
    %v2679 = vpack.c.b16 %v2135, %v2127
    %v2680 = vpack.c.b16 %v2136, %v2128
    %v2681 = vpack.c.b16 %v2137, %v2129
    %v2682 = vpack.c.b16 %v2138, %v2130
    %v2683 = vpack.c.b16 %v2139, %v2131
    %v2684 = vpack.c.b16 %v2140, %v2132
    %v2685 = vpack.c.b16 %v2141, %v2133
    %v2686 = vpack.c.b16 %v2150, %v2142
    %v2687 = vpack.c.b16 %v2151, %v2143
    %v2688 = vpack.c.b16 %v2152, %v2144
    %v2689 = vpack.c.b16 %v2153, %v2145
    %v2690 = vpack.c.b16 %v2154, %v2146
    %v2691 = vpack.c.b16 %v2155, %v2147
    %v2692 = vpack.c.b16 %v2156, %v2148
    %v2693 = vpack.c.b16 %v2157, %v2149
    %v2694 = vpack.c.b16 %v2166, %v2158
    %v2695 = vpack.c.b16 %v2167, %v2159
    %v2696 = vpack.c.b16 %v2168, %v2160
    %v2697 = vpack.c.b16 %v2169, %v2161
    %v2698 = vpack.c.b16 %v2170, %v2162
    %v2699 = vpack.c.b16 %v2171, %v2163
    %v2700 = vpack.c.b16 %v2172, %v2164
    %v2701 = vpack.c.b16 %v2173, %v2165
    %v2702 = vpack.c.b16 %v2182, %v2174
    %v2703 = vpack.c.b16 %v2183, %v2175
    %v2704 = vpack.c.b16 %v2184, %v2176
    %v2705 = vpack.c.b16 %v2185, %v2177
    %v2706 = vpack.c.b16 %v2186, %v2178
    %v2707 = vpack.c.b16 %v2187, %v2179
    %v2708 = vpack.c.b16 %v2188, %v2180
    %v2709 = vpack.c.b16 %v2189, %v2181
    %v2710 = vpack.c.b16 %v2198, %v2190
    %v2711 = vpack.c.b16 %v2199, %v2191
    %v2712 = vpack.c.b16 %v2200, %v2192
    %v2713 = vpack.c.b16 %v2201, %v2193
    %v2714 = vpack.c.b16 %v2202, %v2194
    %v2715 = vpack.c.b16 %v2203, %v2195
    %v2716 = vpack.c.b16 %v2204, %v2196
    %v2717 = vpack.c.b16 %v2205, %v2197
    %3230 = vmatprep.subr.bf16.mxu0 %v2263
    %3231 = vmatpush1.bf16.msra.mxu0 %v2262
    %3232 = vmatprep.subr.bf16.mxu0 %v2255
    %3233 = vmatpush1.bf16.msra.mxu0 %v2254
    %3234 = vmatprep.subr.bf16.mxu0 %v2247
    %3235 = vmatpush1.bf16.msra.mxu0 %v2246
    %3236 = vmatprep.subr.bf16.mxu0 %v2239
    %3237 = vmatpush1.bf16.msra.mxu0 %v2238
    %3238 = vmatprep.subr.bf16.mxu0 %v2231
    %3239 = vmatpush1.bf16.msra.mxu0 %v2230
    %3240 = vmatprep.subr.bf16.mxu0 %v2223
    %3241 = vmatpush1.bf16.msra.mxu0 %v2222
    %3242 = vmatprep.subr.bf16.mxu0 %v2215
    %3243 = vmatpush1.bf16.msra.mxu0 %v2214
    %3244 = vmatprep.subr.bf16.mxu0 %v2207
    %3245 = vmatpush1.bf16.msra.mxu0 %v2206
    %3246 = vmatprep.subr.bf16.mxu0 %v2327
    %3247 = vmatpush2.bf16.msra.mxu0 %v2326
    %3248 = vmatprep.subr.bf16.mxu0 %v2319
    %3249 = vmatpush2.bf16.msra.mxu0 %v2318
    %3250 = vmatprep.subr.bf16.mxu0 %v2311
    %3251 = vmatpush2.bf16.msra.mxu0 %v2310
    %3252 = vmatprep.subr.bf16.mxu0 %v2303
    %3253 = vmatpush2.bf16.msra.mxu0 %v2302
    %3254 = vmatprep.subr.bf16.mxu0 %v2295
    %3255 = vmatpush2.bf16.msra.mxu0 %v2294
    %3256 = vmatprep.subr.bf16.mxu0 %v2287
    %3257 = vmatpush2.bf16.msra.mxu0 %v2286
    %3258 = vmatprep.subr.bf16.mxu0 %v2279
    %3259 = vmatpush2.bf16.msra.mxu0 %v2278
    %3260 = vmatprep.subr.bf16.mxu0 %v2271
    %3261 = vmatpush2.bf16.msra.mxu0 %v2270
    %3262 = vmatprep.mubr.bf16.mxu0 %v655
    %3263 = vmatmul.mubr.bf16.gmra.mxu0 %v654
    %v3264 = vpop.f32.mrf.mxu0
    %v3265 = vadd.f32 %v605, %v3264
    %v3266 = vpop.f32.mrf.mxu0
    %v3267 = vadd.f32 %v609, %v3266
    %v3268 = vpop.f32.mrf.mxu0
    %v3269 = vpop.f32.mrf.mxu0
    %3270 = vdwg.mxu0
    %3271 = vmatprep.subr.bf16.mxu0 %v2391
    %3272 = vmatpush1.bf16.msra.mxu0 %v2390
    %3273 = vmatprep.subr.bf16.mxu0 %v2383
    %3274 = vmatpush1.bf16.msra.mxu0 %v2382
    %3275 = vmatprep.subr.bf16.mxu0 %v2375
    %3276 = vmatpush1.bf16.msra.mxu0 %v2374
    %3277 = vmatprep.subr.bf16.mxu0 %v2367
    %3278 = vmatpush1.bf16.msra.mxu0 %v2366
    %3279 = vmatprep.subr.bf16.mxu0 %v2359
    %3280 = vmatpush1.bf16.msra.mxu0 %v2358
    %3281 = vmatprep.subr.bf16.mxu0 %v2351
    %3282 = vmatpush1.bf16.msra.mxu0 %v2350
    %3283 = vmatprep.subr.bf16.mxu0 %v2343
    %3284 = vmatpush1.bf16.msra.mxu0 %v2342
    %3285 = vmatprep.subr.bf16.mxu0 %v2335
    %3286 = vmatpush1.bf16.msra.mxu0 %v2334
    %3287 = vmatprep.subr.bf16.mxu0 %v2455
    %3288 = vmatpush2.bf16.msra.mxu0 %v2454
    %3289 = vmatprep.subr.bf16.mxu0 %v2447
    %3290 = vmatpush2.bf16.msra.mxu0 %v2446
    %3291 = vmatprep.subr.bf16.mxu0 %v2439
    %3292 = vmatpush2.bf16.msra.mxu0 %v2438
    %3293 = vmatprep.subr.bf16.mxu0 %v2431
    %3294 = vmatpush2.bf16.msra.mxu0 %v2430
    %3295 = vmatprep.subr.bf16.mxu0 %v2423
    %3296 = vmatpush2.bf16.msra.mxu0 %v2422
    %3297 = vmatprep.subr.bf16.mxu0 %v2415
    %3298 = vmatpush2.bf16.msra.mxu0 %v2414
    %3299 = vmatprep.subr.bf16.mxu0 %v2407
    %3300 = vmatpush2.bf16.msra.mxu0 %v2406
    %3301 = vmatprep.subr.bf16.mxu0 %v2399
    %3302 = vmatpush2.bf16.msra.mxu0 %v2398
    %3303 = vmatprep.mubr.bf16.mxu0 %v657
    %3304 = vmatmul.mubr.bf16.gmra.mxu0 %v656
    %v3305 = vpop.f32.mrf.mxu0
    %v3306 = vadd.f32 %v3265, %v3305
    %v3307 = vpop.f32.mrf.mxu0
    %v3308 = vadd.f32 %v3267, %v3307
    %v3309 = vpop.f32.mrf.mxu0
    %v3310 = vpop.f32.mrf.mxu0
    %3311 = vdwg.mxu0
    %3312 = vmatprep.subr.bf16.mxu0 %v2519
    %3313 = vmatpush1.bf16.msra.mxu0 %v2518
    %3314 = vmatprep.subr.bf16.mxu0 %v2511
    %3315 = vmatpush1.bf16.msra.mxu0 %v2510
    %3316 = vmatprep.subr.bf16.mxu0 %v2503
    %3317 = vmatpush1.bf16.msra.mxu0 %v2502
    %3318 = vmatprep.subr.bf16.mxu0 %v2495
    %3319 = vmatpush1.bf16.msra.mxu0 %v2494
    %3320 = vmatprep.subr.bf16.mxu0 %v2487
    %3321 = vmatpush1.bf16.msra.mxu0 %v2486
    %3322 = vmatprep.subr.bf16.mxu0 %v2479
    %3323 = vmatpush1.bf16.msra.mxu0 %v2478
    %3324 = vmatprep.subr.bf16.mxu0 %v2471
    %3325 = vmatpush1.bf16.msra.mxu0 %v2470
    %3326 = vmatprep.subr.bf16.mxu0 %v2463
    %3327 = vmatpush1.bf16.msra.mxu0 %v2462
    %3328 = vmatprep.subr.bf16.mxu0 %v2583
    %3329 = vmatpush2.bf16.msra.mxu0 %v2582
    %3330 = vmatprep.subr.bf16.mxu0 %v2575
    %3331 = vmatpush2.bf16.msra.mxu0 %v2574
    %3332 = vmatprep.subr.bf16.mxu0 %v2567
    %3333 = vmatpush2.bf16.msra.mxu0 %v2566
    %3334 = vmatprep.subr.bf16.mxu0 %v2559
    %3335 = vmatpush2.bf16.msra.mxu0 %v2558
    %3336 = vmatprep.subr.bf16.mxu0 %v2551
    %3337 = vmatpush2.bf16.msra.mxu0 %v2550
    %3338 = vmatprep.subr.bf16.mxu0 %v2543
    %3339 = vmatpush2.bf16.msra.mxu0 %v2542
    %3340 = vmatprep.subr.bf16.mxu0 %v2535
    %3341 = vmatpush2.bf16.msra.mxu0 %v2534
    %3342 = vmatprep.subr.bf16.mxu0 %v2527
    %3343 = vmatpush2.bf16.msra.mxu0 %v2526
    %3344 = vmatprep.mubr.bf16.mxu0 %v659
    %3345 = vmatmul.mubr.bf16.gmra.mxu0 %v658
    %v3346 = vpop.f32.mrf.mxu0
    %v3347 = vadd.f32 %v3306, %v3346
    %v3348 = vpop.f32.mrf.mxu0
    %v3349 = vadd.f32 %v3308, %v3348
    %v3350 = vpop.f32.mrf.mxu0
    %v3351 = vpop.f32.mrf.mxu0
    %3352 = vdwg.mxu0
    %3353 = vmatprep.subr.bf16.mxu0 %v2647
    %3354 = vmatpush1.bf16.msra.mxu0 %v2646
    %3355 = vmatprep.subr.bf16.mxu0 %v2639
    %3356 = vmatpush1.bf16.msra.mxu0 %v2638
    %3357 = vmatprep.subr.bf16.mxu0 %v2631
    %3358 = vmatpush1.bf16.msra.mxu0 %v2630
    %3359 = vmatprep.subr.bf16.mxu0 %v2623
    %3360 = vmatpush1.bf16.msra.mxu0 %v2622
    %3361 = vmatprep.subr.bf16.mxu0 %v2615
    %3362 = vmatpush1.bf16.msra.mxu0 %v2614
    %3363 = vmatprep.subr.bf16.mxu0 %v2607
    %3364 = vmatpush1.bf16.msra.mxu0 %v2606
    %3365 = vmatprep.subr.bf16.mxu0 %v2599
    %3366 = vmatpush1.bf16.msra.mxu0 %v2598
    %3367 = vmatprep.subr.bf16.mxu0 %v2591
    %3368 = vmatpush1.bf16.msra.mxu0 %v2590
    %3369 = vmatprep.subr.bf16.mxu0 %v2711
    %3370 = vmatpush2.bf16.msra.mxu0 %v2710
    %3371 = vmatprep.subr.bf16.mxu0 %v2703
    %3372 = vmatpush2.bf16.msra.mxu0 %v2702
    %3373 = vmatprep.subr.bf16.mxu0 %v2695
    %3374 = vmatpush2.bf16.msra.mxu0 %v2694
    %3375 = vmatprep.subr.bf16.mxu0 %v2687
    %3376 = vmatpush2.bf16.msra.mxu0 %v2686
    %3377 = vmatprep.subr.bf16.mxu0 %v2679
    %3378 = vmatpush2.bf16.msra.mxu0 %v2678
    %3379 = vmatprep.subr.bf16.mxu0 %v2671
    %3380 = vmatpush2.bf16.msra.mxu0 %v2670
    %3381 = vmatprep.subr.bf16.mxu0 %v2663
    %3382 = vmatpush2.bf16.msra.mxu0 %v2662
    %3383 = vmatprep.subr.bf16.mxu0 %v2655
    %3384 = vmatpush2.bf16.msra.mxu0 %v2654
    %3385 = vmatprep.mubr.bf16.mxu0 %v661
    %3386 = vmatmul.mubr.bf16.gmra.mxu0 %v660
    %v3387 = vpop.f32.mrf.mxu0
    %v3388 = vadd.f32 %v3347, %v3387
    %v3389 = vpop.f32.mrf.mxu0
    %v3390 = vadd.f32 %v3349, %v3389
    %v3391 = vpop.f32.mrf.mxu0
    %v3392 = vpop.f32.mrf.mxu0
    %3393 = vdwg.mxu0
    %3394 = vmatprep.subr.bf16.mxu0 %v2265
    %3395 = vmatpush1.bf16.msra.mxu0 %v2264
    %3396 = vmatprep.subr.bf16.mxu0 %v2257
    %3397 = vmatpush1.bf16.msra.mxu0 %v2256
    %3398 = vmatprep.subr.bf16.mxu0 %v2249
    %3399 = vmatpush1.bf16.msra.mxu0 %v2248
    %3400 = vmatprep.subr.bf16.mxu0 %v2241
    %3401 = vmatpush1.bf16.msra.mxu0 %v2240
    %3402 = vmatprep.subr.bf16.mxu0 %v2233
    %3403 = vmatpush1.bf16.msra.mxu0 %v2232
    %3404 = vmatprep.subr.bf16.mxu0 %v2225
    %3405 = vmatpush1.bf16.msra.mxu0 %v2224
    %3406 = vmatprep.subr.bf16.mxu0 %v2217
    %3407 = vmatpush1.bf16.msra.mxu0 %v2216
    %3408 = vmatprep.subr.bf16.mxu0 %v2209
    %3409 = vmatpush1.bf16.msra.mxu0 %v2208
    %3410 = vmatprep.subr.bf16.mxu0 %v2329
    %3411 = vmatpush2.bf16.msra.mxu0 %v2328
    %3412 = vmatprep.subr.bf16.mxu0 %v2321
    %3413 = vmatpush2.bf16.msra.mxu0 %v2320
    %3414 = vmatprep.subr.bf16.mxu0 %v2313
    %3415 = vmatpush2.bf16.msra.mxu0 %v2312
    %3416 = vmatprep.subr.bf16.mxu0 %v2305
    %3417 = vmatpush2.bf16.msra.mxu0 %v2304
    %3418 = vmatprep.subr.bf16.mxu0 %v2297
    %3419 = vmatpush2.bf16.msra.mxu0 %v2296
    %3420 = vmatprep.subr.bf16.mxu0 %v2289
    %3421 = vmatpush2.bf16.msra.mxu0 %v2288
    %3422 = vmatprep.subr.bf16.mxu0 %v2281
    %3423 = vmatpush2.bf16.msra.mxu0 %v2280
    %3424 = vmatprep.subr.bf16.mxu0 %v2273
    %3425 = vmatpush2.bf16.msra.mxu0 %v2272
    %3426 = vmatprep.mubr.bf16.mxu0 %v655
    %3427 = vmatmul.mubr.bf16.gmra.mxu0 %v654
    %v3428 = vpop.f32.mrf.mxu0
    %v3429 = vadd.f32 %v613, %v3428
    %v3430 = vpop.f32.mrf.mxu0
    %v3431 = vadd.f32 %v617, %v3430
    %v3432 = vpop.f32.mrf.mxu0
    %v3433 = vpop.f32.mrf.mxu0
    %3434 = vdwg.mxu0
    %3435 = vmatprep.subr.bf16.mxu0 %v2393
    %3436 = vmatpush1.bf16.msra.mxu0 %v2392
    %3437 = vmatprep.subr.bf16.mxu0 %v2385
    %3438 = vmatpush1.bf16.msra.mxu0 %v2384
    %3439 = vmatprep.subr.bf16.mxu0 %v2377
    %3440 = vmatpush1.bf16.msra.mxu0 %v2376
    %3441 = vmatprep.subr.bf16.mxu0 %v2369
    %3442 = vmatpush1.bf16.msra.mxu0 %v2368
    %3443 = vmatprep.subr.bf16.mxu0 %v2361
    %3444 = vmatpush1.bf16.msra.mxu0 %v2360
    %3445 = vmatprep.subr.bf16.mxu0 %v2353
    %3446 = vmatpush1.bf16.msra.mxu0 %v2352
    %3447 = vmatprep.subr.bf16.mxu0 %v2345
    %3448 = vmatpush1.bf16.msra.mxu0 %v2344
    %3449 = vmatprep.subr.bf16.mxu0 %v2337
    %3450 = vmatpush1.bf16.msra.mxu0 %v2336
    %3451 = vmatprep.subr.bf16.mxu0 %v2457
    %3452 = vmatpush2.bf16.msra.mxu0 %v2456
    %3453 = vmatprep.subr.bf16.mxu0 %v2449
    %3454 = vmatpush2.bf16.msra.mxu0 %v2448
    %3455 = vmatprep.subr.bf16.mxu0 %v2441
    %3456 = vmatpush2.bf16.msra.mxu0 %v2440
    %3457 = vmatprep.subr.bf16.mxu0 %v2433
    %3458 = vmatpush2.bf16.msra.mxu0 %v2432
    %3459 = vmatprep.subr.bf16.mxu0 %v2425
    %3460 = vmatpush2.bf16.msra.mxu0 %v2424
    %3461 = vmatprep.subr.bf16.mxu0 %v2417
    %3462 = vmatpush2.bf16.msra.mxu0 %v2416
    %3463 = vmatprep.subr.bf16.mxu0 %v2409
    %3464 = vmatpush2.bf16.msra.mxu0 %v2408
    %3465 = vmatprep.subr.bf16.mxu0 %v2401
    %3466 = vmatpush2.bf16.msra.mxu0 %v2400
    %3467 = vmatprep.mubr.bf16.mxu0 %v657
    %3468 = vmatmul.mubr.bf16.gmra.mxu0 %v656
    %v3469 = vpop.f32.mrf.mxu0
    %v3470 = vadd.f32 %v3429, %v3469
    %v3471 = vpop.f32.mrf.mxu0
    %v3472 = vadd.f32 %v3431, %v3471
    %v3473 = vpop.f32.mrf.mxu0
    %v3474 = vpop.f32.mrf.mxu0
    %3475 = vdwg.mxu0
    %3476 = vmatprep.subr.bf16.mxu0 %v2521
    %3477 = vmatpush1.bf16.msra.mxu0 %v2520
    %3478 = vmatprep.subr.bf16.mxu0 %v2513
    %3479 = vmatpush1.bf16.msra.mxu0 %v2512
    %3480 = vmatprep.subr.bf16.mxu0 %v2505
    %3481 = vmatpush1.bf16.msra.mxu0 %v2504
    %3482 = vmatprep.subr.bf16.mxu0 %v2497
    %3483 = vmatpush1.bf16.msra.mxu0 %v2496
    %3484 = vmatprep.subr.bf16.mxu0 %v2489
    %3485 = vmatpush1.bf16.msra.mxu0 %v2488
    %3486 = vmatprep.subr.bf16.mxu0 %v2481
    %3487 = vmatpush1.bf16.msra.mxu0 %v2480
    %3488 = vmatprep.subr.bf16.mxu0 %v2473
    %3489 = vmatpush1.bf16.msra.mxu0 %v2472
    %3490 = vmatprep.subr.bf16.mxu0 %v2465
    %3491 = vmatpush1.bf16.msra.mxu0 %v2464
    %3492 = vmatprep.subr.bf16.mxu0 %v2585
    %3493 = vmatpush2.bf16.msra.mxu0 %v2584
    %3494 = vmatprep.subr.bf16.mxu0 %v2577
    %3495 = vmatpush2.bf16.msra.mxu0 %v2576
    %3496 = vmatprep.subr.bf16.mxu0 %v2569
    %3497 = vmatpush2.bf16.msra.mxu0 %v2568
    %3498 = vmatprep.subr.bf16.mxu0 %v2561
    %3499 = vmatpush2.bf16.msra.mxu0 %v2560
    %3500 = vmatprep.subr.bf16.mxu0 %v2553
    %3501 = vmatpush2.bf16.msra.mxu0 %v2552
    %3502 = vmatprep.subr.bf16.mxu0 %v2545
    %3503 = vmatpush2.bf16.msra.mxu0 %v2544
    %3504 = vmatprep.subr.bf16.mxu0 %v2537
    %3505 = vmatpush2.bf16.msra.mxu0 %v2536
    %3506 = vmatprep.subr.bf16.mxu0 %v2529
    %3507 = vmatpush2.bf16.msra.mxu0 %v2528
    %3508 = vmatprep.mubr.bf16.mxu0 %v659
    %3509 = vmatmul.mubr.bf16.gmra.mxu0 %v658
    %v3510 = vpop.f32.mrf.mxu0
    %v3511 = vadd.f32 %v3470, %v3510
    %v3512 = vpop.f32.mrf.mxu0
    %v3513 = vadd.f32 %v3472, %v3512
    %v3514 = vpop.f32.mrf.mxu0
    %v3515 = vpop.f32.mrf.mxu0
    %3516 = vdwg.mxu0
    %3517 = vmatprep.subr.bf16.mxu0 %v2649
    %3518 = vmatpush1.bf16.msra.mxu0 %v2648
    %3519 = vmatprep.subr.bf16.mxu0 %v2641
    %3520 = vmatpush1.bf16.msra.mxu0 %v2640
    %3521 = vmatprep.subr.bf16.mxu0 %v2633
    %3522 = vmatpush1.bf16.msra.mxu0 %v2632
    %3523 = vmatprep.subr.bf16.mxu0 %v2625
    %3524 = vmatpush1.bf16.msra.mxu0 %v2624
    %3525 = vmatprep.subr.bf16.mxu0 %v2617
    %3526 = vmatpush1.bf16.msra.mxu0 %v2616
    %3527 = vmatprep.subr.bf16.mxu0 %v2609
    %3528 = vmatpush1.bf16.msra.mxu0 %v2608
    %3529 = vmatprep.subr.bf16.mxu0 %v2601
    %3530 = vmatpush1.bf16.msra.mxu0 %v2600
    %3531 = vmatprep.subr.bf16.mxu0 %v2593
    %3532 = vmatpush1.bf16.msra.mxu0 %v2592
    %3533 = vmatprep.subr.bf16.mxu0 %v2713
    %3534 = vmatpush2.bf16.msra.mxu0 %v2712
    %3535 = vmatprep.subr.bf16.mxu0 %v2705
    %3536 = vmatpush2.bf16.msra.mxu0 %v2704
    %3537 = vmatprep.subr.bf16.mxu0 %v2697
    %3538 = vmatpush2.bf16.msra.mxu0 %v2696
    %3539 = vmatprep.subr.bf16.mxu0 %v2689
    %3540 = vmatpush2.bf16.msra.mxu0 %v2688
    %3541 = vmatprep.subr.bf16.mxu0 %v2681
    %3542 = vmatpush2.bf16.msra.mxu0 %v2680
    %3543 = vmatprep.subr.bf16.mxu0 %v2673
    %3544 = vmatpush2.bf16.msra.mxu0 %v2672
    %3545 = vmatprep.subr.bf16.mxu0 %v2665
    %3546 = vmatpush2.bf16.msra.mxu0 %v2664
    %3547 = vmatprep.subr.bf16.mxu0 %v2657
    %3548 = vmatpush2.bf16.msra.mxu0 %v2656
    %3549 = vmatprep.mubr.bf16.mxu0 %v661
    %3550 = vmatmul.mubr.bf16.gmra.mxu0 %v660
    %v3551 = vpop.f32.mrf.mxu0
    %v3552 = vadd.f32 %v3511, %v3551
    %v3553 = vpop.f32.mrf.mxu0
    %v3554 = vadd.f32 %v3513, %v3553
    %v3555 = vpop.f32.mrf.mxu0
    %v3556 = vpop.f32.mrf.mxu0
    %3557 = vdwg.mxu0
    %3558 = vmatprep.subr.bf16.mxu0 %v2267
    %3559 = vmatpush1.bf16.msra.mxu0 %v2266
    %3560 = vmatprep.subr.bf16.mxu0 %v2259
    %3561 = vmatpush1.bf16.msra.mxu0 %v2258
    %3562 = vmatprep.subr.bf16.mxu0 %v2251
    %3563 = vmatpush1.bf16.msra.mxu0 %v2250
    %3564 = vmatprep.subr.bf16.mxu0 %v2243
    %3565 = vmatpush1.bf16.msra.mxu0 %v2242
    %3566 = vmatprep.subr.bf16.mxu0 %v2235
    %3567 = vmatpush1.bf16.msra.mxu0 %v2234
    %3568 = vmatprep.subr.bf16.mxu0 %v2227
    %3569 = vmatpush1.bf16.msra.mxu0 %v2226
    %3570 = vmatprep.subr.bf16.mxu0 %v2219
    %3571 = vmatpush1.bf16.msra.mxu0 %v2218
    %3572 = vmatprep.subr.bf16.mxu0 %v2211
    %3573 = vmatpush1.bf16.msra.mxu0 %v2210
    %3574 = vmatprep.subr.bf16.mxu0 %v2331
    %3575 = vmatpush2.bf16.msra.mxu0 %v2330
    %3576 = vmatprep.subr.bf16.mxu0 %v2323
    %3577 = vmatpush2.bf16.msra.mxu0 %v2322
    %3578 = vmatprep.subr.bf16.mxu0 %v2315
    %3579 = vmatpush2.bf16.msra.mxu0 %v2314
    %3580 = vmatprep.subr.bf16.mxu0 %v2307
    %3581 = vmatpush2.bf16.msra.mxu0 %v2306
    %3582 = vmatprep.subr.bf16.mxu0 %v2299
    %3583 = vmatpush2.bf16.msra.mxu0 %v2298
    %3584 = vmatprep.subr.bf16.mxu0 %v2291
    %3585 = vmatpush2.bf16.msra.mxu0 %v2290
    %3586 = vmatprep.subr.bf16.mxu0 %v2283
    %3587 = vmatpush2.bf16.msra.mxu0 %v2282
    %3588 = vmatprep.subr.bf16.mxu0 %v2275
    %3589 = vmatpush2.bf16.msra.mxu0 %v2274
    %3590 = vmatprep.mubr.bf16.mxu0 %v655
    %3591 = vmatmul.mubr.bf16.gmra.mxu0 %v654
    %v3592 = vpop.f32.mrf.mxu0
    %v3593 = vadd.f32 %v621, %v3592
    %v3594 = vpop.f32.mrf.mxu0
    %v3595 = vadd.f32 %v625, %v3594
    %v3596 = vpop.f32.mrf.mxu0
    %v3597 = vpop.f32.mrf.mxu0
    %3598 = vdwg.mxu0
    %3599 = vmatprep.subr.bf16.mxu0 %v2395
    %3600 = vmatpush1.bf16.msra.mxu0 %v2394
    %3601 = vmatprep.subr.bf16.mxu0 %v2387
    %3602 = vmatpush1.bf16.msra.mxu0 %v2386
    %3603 = vmatprep.subr.bf16.mxu0 %v2379
    %3604 = vmatpush1.bf16.msra.mxu0 %v2378
    %3605 = vmatprep.subr.bf16.mxu0 %v2371
    %3606 = vmatpush1.bf16.msra.mxu0 %v2370
    %3607 = vmatprep.subr.bf16.mxu0 %v2363
    %3608 = vmatpush1.bf16.msra.mxu0 %v2362
    %3609 = vmatprep.subr.bf16.mxu0 %v2355
    %3610 = vmatpush1.bf16.msra.mxu0 %v2354
    %3611 = vmatprep.subr.bf16.mxu0 %v2347
    %3612 = vmatpush1.bf16.msra.mxu0 %v2346
    %3613 = vmatprep.subr.bf16.mxu0 %v2339
    %3614 = vmatpush1.bf16.msra.mxu0 %v2338
    %3615 = vmatprep.subr.bf16.mxu0 %v2459
    %3616 = vmatpush2.bf16.msra.mxu0 %v2458
    %3617 = vmatprep.subr.bf16.mxu0 %v2451
    %3618 = vmatpush2.bf16.msra.mxu0 %v2450
    %3619 = vmatprep.subr.bf16.mxu0 %v2443
    %3620 = vmatpush2.bf16.msra.mxu0 %v2442
    %3621 = vmatprep.subr.bf16.mxu0 %v2435
    %3622 = vmatpush2.bf16.msra.mxu0 %v2434
    %3623 = vmatprep.subr.bf16.mxu0 %v2427
    %3624 = vmatpush2.bf16.msra.mxu0 %v2426
    %3625 = vmatprep.subr.bf16.mxu0 %v2419
    %3626 = vmatpush2.bf16.msra.mxu0 %v2418
    %3627 = vmatprep.subr.bf16.mxu0 %v2411
    %3628 = vmatpush2.bf16.msra.mxu0 %v2410
    %3629 = vmatprep.subr.bf16.mxu0 %v2403
    %3630 = vmatpush2.bf16.msra.mxu0 %v2402
    %3631 = vmatprep.mubr.bf16.mxu0 %v657
    %3632 = vmatmul.mubr.bf16.gmra.mxu0 %v656
    %v3633 = vpop.f32.mrf.mxu0
    %v3634 = vadd.f32 %v3593, %v3633
    %v3635 = vpop.f32.mrf.mxu0
    %v3636 = vadd.f32 %v3595, %v3635
    %v3637 = vpop.f32.mrf.mxu0
    %v3638 = vpop.f32.mrf.mxu0
    %3639 = vdwg.mxu0
    %3640 = vmatprep.subr.bf16.mxu0 %v2523
    %3641 = vmatpush1.bf16.msra.mxu0 %v2522
    %3642 = vmatprep.subr.bf16.mxu0 %v2515
    %3643 = vmatpush1.bf16.msra.mxu0 %v2514
    %3644 = vmatprep.subr.bf16.mxu0 %v2507
    %3645 = vmatpush1.bf16.msra.mxu0 %v2506
    %3646 = vmatprep.subr.bf16.mxu0 %v2499
    %3647 = vmatpush1.bf16.msra.mxu0 %v2498
    %3648 = vmatprep.subr.bf16.mxu0 %v2491
    %3649 = vmatpush1.bf16.msra.mxu0 %v2490
    %3650 = vmatprep.subr.bf16.mxu0 %v2483
    %3651 = vmatpush1.bf16.msra.mxu0 %v2482
    %3652 = vmatprep.subr.bf16.mxu0 %v2475
    %3653 = vmatpush1.bf16.msra.mxu0 %v2474
    %3654 = vmatprep.subr.bf16.mxu0 %v2467
    %3655 = vmatpush1.bf16.msra.mxu0 %v2466
    %3656 = vmatprep.subr.bf16.mxu0 %v2587
    %3657 = vmatpush2.bf16.msra.mxu0 %v2586
    %3658 = vmatprep.subr.bf16.mxu0 %v2579
    %3659 = vmatpush2.bf16.msra.mxu0 %v2578
    %3660 = vmatprep.subr.bf16.mxu0 %v2571
    %3661 = vmatpush2.bf16.msra.mxu0 %v2570
    %3662 = vmatprep.subr.bf16.mxu0 %v2563
    %3663 = vmatpush2.bf16.msra.mxu0 %v2562
    %3664 = vmatprep.subr.bf16.mxu0 %v2555
    %3665 = vmatpush2.bf16.msra.mxu0 %v2554
    %3666 = vmatprep.subr.bf16.mxu0 %v2547
    %3667 = vmatpush2.bf16.msra.mxu0 %v2546
    %3668 = vmatprep.subr.bf16.mxu0 %v2539
    %3669 = vmatpush2.bf16.msra.mxu0 %v2538
    %3670 = vmatprep.subr.bf16.mxu0 %v2531
    %3671 = vmatpush2.bf16.msra.mxu0 %v2530
    %3672 = vmatprep.mubr.bf16.mxu0 %v659
    %3673 = vmatmul.mubr.bf16.gmra.mxu0 %v658
    %v3674 = vpop.f32.mrf.mxu0
    %v3675 = vadd.f32 %v3634, %v3674
    %v3676 = vpop.f32.mrf.mxu0
    %v3677 = vadd.f32 %v3636, %v3676
    %v3678 = vpop.f32.mrf.mxu0
    %v3679 = vpop.f32.mrf.mxu0
    %3680 = vdwg.mxu0
    %3681 = vmatprep.subr.bf16.mxu0 %v2651
    %3682 = vmatpush1.bf16.msra.mxu0 %v2650
    %3683 = vmatprep.subr.bf16.mxu0 %v2643
    %3684 = vmatpush1.bf16.msra.mxu0 %v2642
    %3685 = vmatprep.subr.bf16.mxu0 %v2635
    %3686 = vmatpush1.bf16.msra.mxu0 %v2634
    %3687 = vmatprep.subr.bf16.mxu0 %v2627
    %3688 = vmatpush1.bf16.msra.mxu0 %v2626
    %3689 = vmatprep.subr.bf16.mxu0 %v2619
    %3690 = vmatpush1.bf16.msra.mxu0 %v2618
    %3691 = vmatprep.subr.bf16.mxu0 %v2611
    %3692 = vmatpush1.bf16.msra.mxu0 %v2610
    %3693 = vmatprep.subr.bf16.mxu0 %v2603
    %3694 = vmatpush1.bf16.msra.mxu0 %v2602
    %3695 = vmatprep.subr.bf16.mxu0 %v2595
    %3696 = vmatpush1.bf16.msra.mxu0 %v2594
    %3697 = vmatprep.subr.bf16.mxu0 %v2715
    %3698 = vmatpush2.bf16.msra.mxu0 %v2714
    %3699 = vmatprep.subr.bf16.mxu0 %v2707
    %3700 = vmatpush2.bf16.msra.mxu0 %v2706
    %3701 = vmatprep.subr.bf16.mxu0 %v2699
    %3702 = vmatpush2.bf16.msra.mxu0 %v2698
    %3703 = vmatprep.subr.bf16.mxu0 %v2691
    %3704 = vmatpush2.bf16.msra.mxu0 %v2690
    %3705 = vmatprep.subr.bf16.mxu0 %v2683
    %3706 = vmatpush2.bf16.msra.mxu0 %v2682
    %3707 = vmatprep.subr.bf16.mxu0 %v2675
    %3708 = vmatpush2.bf16.msra.mxu0 %v2674
    %3709 = vmatprep.subr.bf16.mxu0 %v2667
    %3710 = vmatpush2.bf16.msra.mxu0 %v2666
    %3711 = vmatprep.subr.bf16.mxu0 %v2659
    %3712 = vmatpush2.bf16.msra.mxu0 %v2658
    %3713 = vmatprep.mubr.bf16.mxu0 %v661
    %3714 = vmatmul.mubr.bf16.gmra.mxu0 %v660
    %v3715 = vpop.f32.mrf.mxu0
    %v3716 = vadd.f32 %v3675, %v3715
    %v3717 = vpop.f32.mrf.mxu0
    %v3718 = vadd.f32 %v3677, %v3717
    %v3719 = vpop.f32.mrf.mxu0
    %v3720 = vpop.f32.mrf.mxu0
    %3721 = vdwg.mxu0
    %3722 = vmatprep.subr.bf16.mxu0 %v2269
    %3723 = vmatpush1.bf16.msra.mxu0 %v2268
    %3724 = vmatprep.subr.bf16.mxu0 %v2261
    %3725 = vmatpush1.bf16.msra.mxu0 %v2260
    %3726 = vmatprep.subr.bf16.mxu0 %v2253
    %3727 = vmatpush1.bf16.msra.mxu0 %v2252
    %3728 = vmatprep.subr.bf16.mxu0 %v2245
    %3729 = vmatpush1.bf16.msra.mxu0 %v2244
    %3730 = vmatprep.subr.bf16.mxu0 %v2237
    %3731 = vmatpush1.bf16.msra.mxu0 %v2236
    %3732 = vmatprep.subr.bf16.mxu0 %v2229
    %3733 = vmatpush1.bf16.msra.mxu0 %v2228
    %3734 = vmatprep.subr.bf16.mxu0 %v2221
    %3735 = vmatpush1.bf16.msra.mxu0 %v2220
    %3736 = vmatprep.subr.bf16.mxu0 %v2213
    %3737 = vmatpush1.bf16.msra.mxu0 %v2212
    %3738 = vmatprep.subr.bf16.mxu0 %v2333
    %3739 = vmatpush2.bf16.msra.mxu0 %v2332
    %3740 = vmatprep.subr.bf16.mxu0 %v2325
    %3741 = vmatpush2.bf16.msra.mxu0 %v2324
    %3742 = vmatprep.subr.bf16.mxu0 %v2317
    %3743 = vmatpush2.bf16.msra.mxu0 %v2316
    %3744 = vmatprep.subr.bf16.mxu0 %v2309
    %3745 = vmatpush2.bf16.msra.mxu0 %v2308
    %3746 = vmatprep.subr.bf16.mxu0 %v2301
    %3747 = vmatpush2.bf16.msra.mxu0 %v2300
    %3748 = vmatprep.subr.bf16.mxu0 %v2293
    %3749 = vmatpush2.bf16.msra.mxu0 %v2292
    %3750 = vmatprep.subr.bf16.mxu0 %v2285
    %3751 = vmatpush2.bf16.msra.mxu0 %v2284
    %3752 = vmatprep.subr.bf16.mxu0 %v2277
    %3753 = vmatpush2.bf16.msra.mxu0 %v2276
    %3754 = vmatprep.mubr.bf16.mxu0 %v655
    %3755 = vmatmul.mubr.bf16.gmra.mxu0 %v654
    %v3756 = vpop.f32.mrf.mxu0
    %v3757 = vadd.f32 %v629, %v3756
    %v3758 = vpop.f32.mrf.mxu0
    %v3759 = vadd.f32 %v633, %v3758
    %v3760 = vpop.f32.mrf.mxu0
    %v3761 = vpop.f32.mrf.mxu0
    %3762 = vdwg.mxu0
    %3763 = vmatprep.subr.bf16.mxu0 %v2397
    %3764 = vmatpush1.bf16.msra.mxu0 %v2396
    %3765 = vmatprep.subr.bf16.mxu0 %v2389
    %3766 = vmatpush1.bf16.msra.mxu0 %v2388
    %3767 = vmatprep.subr.bf16.mxu0 %v2381
    %3768 = vmatpush1.bf16.msra.mxu0 %v2380
    %3769 = vmatprep.subr.bf16.mxu0 %v2373
    %3770 = vmatpush1.bf16.msra.mxu0 %v2372
    %3771 = vmatprep.subr.bf16.mxu0 %v2365
    %3772 = vmatpush1.bf16.msra.mxu0 %v2364
    %3773 = vmatprep.subr.bf16.mxu0 %v2357
    %3774 = vmatpush1.bf16.msra.mxu0 %v2356
    %3775 = vmatprep.subr.bf16.mxu0 %v2349
    %3776 = vmatpush1.bf16.msra.mxu0 %v2348
    %3777 = vmatprep.subr.bf16.mxu0 %v2341
    %3778 = vmatpush1.bf16.msra.mxu0 %v2340
    %3779 = vmatprep.subr.bf16.mxu0 %v2461
    %3780 = vmatpush2.bf16.msra.mxu0 %v2460
    %3781 = vmatprep.subr.bf16.mxu0 %v2453
    %3782 = vmatpush2.bf16.msra.mxu0 %v2452
    %3783 = vmatprep.subr.bf16.mxu0 %v2445
    %3784 = vmatpush2.bf16.msra.mxu0 %v2444
    %3785 = vmatprep.subr.bf16.mxu0 %v2437
    %3786 = vmatpush2.bf16.msra.mxu0 %v2436
    %3787 = vmatprep.subr.bf16.mxu0 %v2429
    %3788 = vmatpush2.bf16.msra.mxu0 %v2428
    %3789 = vmatprep.subr.bf16.mxu0 %v2421
    %3790 = vmatpush2.bf16.msra.mxu0 %v2420
    %3791 = vmatprep.subr.bf16.mxu0 %v2413
    %3792 = vmatpush2.bf16.msra.mxu0 %v2412
    %3793 = vmatprep.subr.bf16.mxu0 %v2405
    %3794 = vmatpush2.bf16.msra.mxu0 %v2404
    %3795 = vmatprep.mubr.bf16.mxu0 %v657
    %3796 = vmatmul.mubr.bf16.gmra.mxu0 %v656
    %v3797 = vpop.f32.mrf.mxu0
    %v3798 = vadd.f32 %v3757, %v3797
    %v3799 = vpop.f32.mrf.mxu0
    %v3800 = vadd.f32 %v3759, %v3799
    %v3801 = vpop.f32.mrf.mxu0
    %v3802 = vpop.f32.mrf.mxu0
    %3803 = vdwg.mxu0
    %3804 = vmatprep.subr.bf16.mxu0 %v2525
    %3805 = vmatpush1.bf16.msra.mxu0 %v2524
    %3806 = vmatprep.subr.bf16.mxu0 %v2517
    %3807 = vmatpush1.bf16.msra.mxu0 %v2516
    %3808 = vmatprep.subr.bf16.mxu0 %v2509
    %3809 = vmatpush1.bf16.msra.mxu0 %v2508
    %3810 = vmatprep.subr.bf16.mxu0 %v2501
    %3811 = vmatpush1.bf16.msra.mxu0 %v2500
    %3812 = vmatprep.subr.bf16.mxu0 %v2493
    %3813 = vmatpush1.bf16.msra.mxu0 %v2492
    %3814 = vmatprep.subr.bf16.mxu0 %v2485
    %3815 = vmatpush1.bf16.msra.mxu0 %v2484
    %3816 = vmatprep.subr.bf16.mxu0 %v2477
    %3817 = vmatpush1.bf16.msra.mxu0 %v2476
    %3818 = vmatprep.subr.bf16.mxu0 %v2469
    %3819 = vmatpush1.bf16.msra.mxu0 %v2468
    %3820 = vmatprep.subr.bf16.mxu0 %v2589
    %3821 = vmatpush2.bf16.msra.mxu0 %v2588
    %3822 = vmatprep.subr.bf16.mxu0 %v2581
    %3823 = vmatpush2.bf16.msra.mxu0 %v2580
    %3824 = vmatprep.subr.bf16.mxu0 %v2573
    %3825 = vmatpush2.bf16.msra.mxu0 %v2572
    %3826 = vmatprep.subr.bf16.mxu0 %v2565
    %3827 = vmatpush2.bf16.msra.mxu0 %v2564
    %3828 = vmatprep.subr.bf16.mxu0 %v2557
    %3829 = vmatpush2.bf16.msra.mxu0 %v2556
    %3830 = vmatprep.subr.bf16.mxu0 %v2549
    %3831 = vmatpush2.bf16.msra.mxu0 %v2548
    %3832 = vmatprep.subr.bf16.mxu0 %v2541
    %3833 = vmatpush2.bf16.msra.mxu0 %v2540
    %3834 = vmatprep.subr.bf16.mxu0 %v2533
    %3835 = vmatpush2.bf16.msra.mxu0 %v2532
    %3836 = vmatprep.mubr.bf16.mxu0 %v659
    %3837 = vmatmul.mubr.bf16.gmra.mxu0 %v658
    %v3838 = vpop.f32.mrf.mxu0
    %v3839 = vadd.f32 %v3798, %v3838
    %v3840 = vpop.f32.mrf.mxu0
    %v3841 = vadd.f32 %v3800, %v3840
    %v3842 = vpop.f32.mrf.mxu0
    %v3843 = vpop.f32.mrf.mxu0
    %3844 = vdwg.mxu0
    %3845 = vmatprep.subr.bf16.mxu0 %v2653
    %3846 = vmatpush1.bf16.msra.mxu0 %v2652
    %3847 = vmatprep.subr.bf16.mxu0 %v2645
    %3848 = vmatpush1.bf16.msra.mxu0 %v2644
    %3849 = vmatprep.subr.bf16.mxu0 %v2637
    %3850 = vmatpush1.bf16.msra.mxu0 %v2636
    %3851 = vmatprep.subr.bf16.mxu0 %v2629
    %3852 = vmatpush1.bf16.msra.mxu0 %v2628
    %3853 = vmatprep.subr.bf16.mxu0 %v2621
    %3854 = vmatpush1.bf16.msra.mxu0 %v2620
    %3855 = vmatprep.subr.bf16.mxu0 %v2613
    %3856 = vmatpush1.bf16.msra.mxu0 %v2612
    %3857 = vmatprep.subr.bf16.mxu0 %v2605
    %3858 = vmatpush1.bf16.msra.mxu0 %v2604
    %3859 = vmatprep.subr.bf16.mxu0 %v2597
    %3860 = vmatpush1.bf16.msra.mxu0 %v2596
    %3861 = vmatprep.subr.bf16.mxu0 %v2717
    %3862 = vmatpush2.bf16.msra.mxu0 %v2716
    %3863 = vmatprep.subr.bf16.mxu0 %v2709
    %3864 = vmatpush2.bf16.msra.mxu0 %v2708
    %3865 = vmatprep.subr.bf16.mxu0 %v2701
    %3866 = vmatpush2.bf16.msra.mxu0 %v2700
    %3867 = vmatprep.subr.bf16.mxu0 %v2693
    %3868 = vmatpush2.bf16.msra.mxu0 %v2692
    %3869 = vmatprep.subr.bf16.mxu0 %v2685
    %3870 = vmatpush2.bf16.msra.mxu0 %v2684
    %3871 = vmatprep.subr.bf16.mxu0 %v2677
    %3872 = vmatpush2.bf16.msra.mxu0 %v2676
    %3873 = vmatprep.subr.bf16.mxu0 %v2669
    %3874 = vmatpush2.bf16.msra.mxu0 %v2668
    %3875 = vmatprep.subr.bf16.mxu0 %v2661
    %3876 = vmatpush2.bf16.msra.mxu0 %v2660
    %3877 = vmatprep.mubr.bf16.mxu0 %v661
    %3878 = vmatmul.mubr.bf16.gmra.mxu0 %v660
    %v3879 = vpop.f32.mrf.mxu0
    %v3880 = vadd.f32 %v3839, %v3879
    %v3881 = vpop.f32.mrf.mxu0
    %v3882 = vadd.f32 %v3841, %v3881
    %v3883 = vpop.f32.mrf.mxu0
    %v3884 = vpop.f32.mrf.mxu0
    %3885 = vdwg.mxu0
    %v3886 = vpack.c.bf16 %v3388, %v3388
    %v3887 = vpack.c.bf16 %v3390, %v3390
    %v3888 = vpack.c.bf16 %v3552, %v3552
    %v3889 = vpack.c.bf16 %v3554, %v3554
    %v3890 = vpack.c.bf16 %v3716, %v3716
    %v3891 = vpack.c.bf16 %v3718, %v3718
    %v3892 = vpack.c.bf16 %v3880, %v3880
    %v3893 = vpack.c.bf16 %v3882, %v3882
    %v3894 = vld [vmem:[#allocation8] sm:$0xf]
    %v3895 = vld [vmem:[#allocation8 + $0x4] sm:$0xf]
    %v3896 = vld [vmem:[#allocation8 + $0x8] sm:$0xf]
    %v3897 = vld [vmem:[#allocation8 + $0xc] sm:$0xf]
    %v3898 = vld [vmem:[#allocation8 + $0x10] sm:$0xf]
    %v3899 = vld [vmem:[#allocation8 + $0x14] sm:$0xf]
    %v3900 = vld [vmem:[#allocation8 + $0x18] sm:$0xf]
    %v3901 = vld [vmem:[#allocation8 + $0x1c] sm:$0xf]
    %v3902 = vld [vmem:[#allocation8 + $0x20] sm:$0xf]
    %v3903 = vld [vmem:[#allocation8 + $0x24] sm:$0xf]
    %v3904 = vld [vmem:[#allocation8 + $0x28] sm:$0xf]
    %v3905 = vld [vmem:[#allocation8 + $0x2c] sm:$0xf]
    %v3906 = vld [vmem:[#allocation8 + $0x30] sm:$0xf]
    %v3907 = vld [vmem:[#allocation8 + $0x34] sm:$0xf]
    %v3908 = vld [vmem:[#allocation8 + $0x38] sm:$0xf]
    %v3909 = vld [vmem:[#allocation8 + $0x3c] sm:$0xf]
    %v3910 = vld [vmem:[#allocation8 + $0x40] sm:$0xf]
    %v3911 = vld [vmem:[#allocation8 + $0x44] sm:$0xf]
    %v3912 = vld [vmem:[#allocation8 + $0x48] sm:$0xf]
    %v3913 = vld [vmem:[#allocation8 + $0x4c] sm:$0xf]
    %v3914 = vld [vmem:[#allocation8 + $0x50] sm:$0xf]
    %v3915 = vld [vmem:[#allocation8 + $0x54] sm:$0xf]
    %v3916 = vld [vmem:[#allocation8 + $0x58] sm:$0xf]
    %v3917 = vld [vmem:[#allocation8 + $0x5c] sm:$0xf]
    %v3918 = vld [vmem:[#allocation8 + $0x60] sm:$0xf]
    %v3919 = vld [vmem:[#allocation8 + $0x64] sm:$0xf]
    %v3920 = vld [vmem:[#allocation8 + $0x68] sm:$0xf]
    %v3921 = vld [vmem:[#allocation8 + $0x6c] sm:$0xf]
    %v3922 = vld [vmem:[#allocation8 + $0x70] sm:$0xf]
    %v3923 = vld [vmem:[#allocation8 + $0x74] sm:$0xf]
    %v3924 = vld [vmem:[#allocation8 + $0x78] sm:$0xf]
    %v3925 = vld [vmem:[#allocation8 + $0x7c] sm:$0xf]
    %v3926 = vld [vmem:[#allocation8 + $0x80] sm:$0xf]
    %v3927 = vld [vmem:[#allocation8 + $0x84] sm:$0xf]
    %v3928 = vld [vmem:[#allocation8 + $0x88] sm:$0xf]
    %v3929 = vld [vmem:[#allocation8 + $0x8c] sm:$0xf]
    %v3930 = vld [vmem:[#allocation8 + $0x90] sm:$0xf]
    %v3931 = vld [vmem:[#allocation8 + $0x94] sm:$0xf]
    %v3932 = vld [vmem:[#allocation8 + $0x98] sm:$0xf]
    %v3933 = vld [vmem:[#allocation8 + $0x9c] sm:$0xf]
    %v3934 = vld [vmem:[#allocation8 + $0xa0] sm:$0xf]
    %v3935 = vld [vmem:[#allocation8 + $0xa4] sm:$0xf]
    %v3936 = vld [vmem:[#allocation8 + $0xa8] sm:$0xf]
    %v3937 = vld [vmem:[#allocation8 + $0xac] sm:$0xf]
    %v3938 = vld [vmem:[#allocation8 + $0xb0] sm:$0xf]
    %v3939 = vld [vmem:[#allocation8 + $0xb4] sm:$0xf]
    %v3940 = vld [vmem:[#allocation8 + $0xb8] sm:$0xf]
    %v3941 = vld [vmem:[#allocation8 + $0xbc] sm:$0xf]
    %v3942 = vld [vmem:[#allocation8 + $0xc0] sm:$0xf]
    %v3943 = vld [vmem:[#allocation8 + $0xc4] sm:$0xf]
    %v3944 = vld [vmem:[#allocation8 + $0xc8] sm:$0xf]
    %v3945 = vld [vmem:[#allocation8 + $0xcc] sm:$0xf]
    %v3946 = vld [vmem:[#allocation8 + $0xd0] sm:$0xf]
    %v3947 = vld [vmem:[#allocation8 + $0xd4] sm:$0xf]
    %v3948 = vld [vmem:[#allocation8 + $0xd8] sm:$0xf]
    %v3949 = vld [vmem:[#allocation8 + $0xdc] sm:$0xf]
    %v3950 = vld [vmem:[#allocation8 + $0xe0] sm:$0xf]
    %v3951 = vld [vmem:[#allocation8 + $0xe4] sm:$0xf]
    %v3952 = vld [vmem:[#allocation8 + $0xe8] sm:$0xf]
    %v3953 = vld [vmem:[#allocation8 + $0xec] sm:$0xf]
    %v3954 = vld [vmem:[#allocation8 + $0xf0] sm:$0xf]
    %v3955 = vld [vmem:[#allocation8 + $0xf4] sm:$0xf]
    %v3956 = vld [vmem:[#allocation8 + $0xf8] sm:$0xf]
    %v3957 = vld [vmem:[#allocation8 + $0xfc] sm:$0xf]
    %v3958 = vld [vmem:[#allocation8 + $0x100] sm:$0xf]
    %v3959 = vld [vmem:[#allocation8 + $0x104] sm:$0xf]
    %v3960 = vld [vmem:[#allocation8 + $0x108] sm:$0xf]
    %v3961 = vld [vmem:[#allocation8 + $0x10c] sm:$0xf]
    %v3962 = vld [vmem:[#allocation8 + $0x110] sm:$0xf]
    %v3963 = vld [vmem:[#allocation8 + $0x114] sm:$0xf]
    %v3964 = vld [vmem:[#allocation8 + $0x118] sm:$0xf]
    %v3965 = vld [vmem:[#allocation8 + $0x11c] sm:$0xf]
    %v3966 = vld [vmem:[#allocation8 + $0x120] sm:$0xf]
    %v3967 = vld [vmem:[#allocation8 + $0x124] sm:$0xf]
    %v3968 = vld [vmem:[#allocation8 + $0x128] sm:$0xf]
    %v3969 = vld [vmem:[#allocation8 + $0x12c] sm:$0xf]
    %v3970 = vld [vmem:[#allocation8 + $0x130] sm:$0xf]
    %v3971 = vld [vmem:[#allocation8 + $0x134] sm:$0xf]
    %v3972 = vld [vmem:[#allocation8 + $0x138] sm:$0xf]
    %v3973 = vld [vmem:[#allocation8 + $0x13c] sm:$0xf]
    %v3974 = vld [vmem:[#allocation8 + $0x140] sm:$0xf]
    %v3975 = vld [vmem:[#allocation8 + $0x144] sm:$0xf]
    %v3976 = vld [vmem:[#allocation8 + $0x148] sm:$0xf]
    %v3977 = vld [vmem:[#allocation8 + $0x14c] sm:$0xf]
    %v3978 = vld [vmem:[#allocation8 + $0x150] sm:$0xf]
    %v3979 = vld [vmem:[#allocation8 + $0x154] sm:$0xf]
    %v3980 = vld [vmem:[#allocation8 + $0x158] sm:$0xf]
    %v3981 = vld [vmem:[#allocation8 + $0x15c] sm:$0xf]
    %v3982 = vld [vmem:[#allocation8 + $0x160] sm:$0xf]
    %v3983 = vld [vmem:[#allocation8 + $0x164] sm:$0xf]
    %v3984 = vld [vmem:[#allocation8 + $0x168] sm:$0xf]
    %v3985 = vld [vmem:[#allocation8 + $0x16c] sm:$0xf]
    %v3986 = vld [vmem:[#allocation8 + $0x170] sm:$0xf]
    %v3987 = vld [vmem:[#allocation8 + $0x174] sm:$0xf]
    %v3988 = vld [vmem:[#allocation8 + $0x178] sm:$0xf]
    %v3989 = vld [vmem:[#allocation8 + $0x17c] sm:$0xf]
    %v3990 = vld [vmem:[#allocation8 + $0x180] sm:$0xf]
    %v3991 = vld [vmem:[#allocation8 + $0x184] sm:$0xf]
    %v3992 = vld [vmem:[#allocation8 + $0x188] sm:$0xf]
    %v3993 = vld [vmem:[#allocation8 + $0x18c] sm:$0xf]
    %v3994 = vld [vmem:[#allocation8 + $0x190] sm:$0xf]
    %v3995 = vld [vmem:[#allocation8 + $0x194] sm:$0xf]
    %v3996 = vld [vmem:[#allocation8 + $0x198] sm:$0xf]
    %v3997 = vld [vmem:[#allocation8 + $0x19c] sm:$0xf]
    %v3998 = vld [vmem:[#allocation8 + $0x1a0] sm:$0xf]
    %v3999 = vld [vmem:[#allocation8 + $0x1a4] sm:$0xf]
    %v4000 = vld [vmem:[#allocation8 + $0x1a8] sm:$0xf]
    %v4001 = vld [vmem:[#allocation8 + $0x1ac] sm:$0xf]
    %v4002 = vld [vmem:[#allocation8 + $0x1b0] sm:$0xf]
    %v4003 = vld [vmem:[#allocation8 + $0x1b4] sm:$0xf]
    %v4004 = vld [vmem:[#allocation8 + $0x1b8] sm:$0xf]
    %v4005 = vld [vmem:[#allocation8 + $0x1bc] sm:$0xf]
    %v4006 = vld [vmem:[#allocation8 + $0x1c0] sm:$0xf]
    %v4007 = vld [vmem:[#allocation8 + $0x1c4] sm:$0xf]
    %v4008 = vld [vmem:[#allocation8 + $0x1c8] sm:$0xf]
    %v4009 = vld [vmem:[#allocation8 + $0x1cc] sm:$0xf]
    %v4010 = vld [vmem:[#allocation8 + $0x1d0] sm:$0xf]
    %v4011 = vld [vmem:[#allocation8 + $0x1d4] sm:$0xf]
    %v4012 = vld [vmem:[#allocation8 + $0x1d8] sm:$0xf]
    %v4013 = vld [vmem:[#allocation8 + $0x1dc] sm:$0xf]
    %v4014 = vld [vmem:[#allocation8 + $0x1e0] sm:$0xf]
    %v4015 = vld [vmem:[#allocation8 + $0x1e4] sm:$0xf]
    %v4016 = vld [vmem:[#allocation8 + $0x1e8] sm:$0xf]
    %v4017 = vld [vmem:[#allocation8 + $0x1ec] sm:$0xf]
    %v4018 = vld [vmem:[#allocation8 + $0x1f0] sm:$0xf]
    %v4019 = vld [vmem:[#allocation8 + $0x1f4] sm:$0xf]
    %v4020 = vld [vmem:[#allocation8 + $0x1f8] sm:$0xf]
    %v4021 = vld [vmem:[#allocation8 + $0x1fc] sm:$0xf]
    %v4022 = vld [vmem:[#allocation10] sm:$0x1]
    %v4024 = vlaneseq
    %v4025 = vshrl.u32 %v4024, 7
    %v4026 = vsub.s32 0, %v4025
    %v4027 = vrot.slane %v4022, %v4026
    %v4157 = vunpack.c.l.b16 %v3894
    %v4158 = vunpack.c.l.b16 %v3895
    %v4159 = vunpack.c.l.b16 %v3896
    %v4160 = vunpack.c.l.b16 %v3897
    %v4161 = vunpack.c.l.b16 %v3898
    %v4162 = vunpack.c.l.b16 %v3899
    %v4163 = vunpack.c.l.b16 %v3900
    %v4164 = vunpack.c.l.b16 %v3901
    %v4165 = vunpack.c.l.b16 %v3902
    %v4166 = vunpack.c.l.b16 %v3903
    %v4167 = vunpack.c.l.b16 %v3904
    %v4168 = vunpack.c.l.b16 %v3905
    %v4169 = vunpack.c.l.b16 %v3906
    %v4170 = vunpack.c.l.b16 %v3907
    %v4171 = vunpack.c.l.b16 %v3908
    %v4172 = vunpack.c.l.b16 %v3909
    %v4173 = vunpack.c.l.b16 %v3910
    %v4174 = vunpack.c.l.b16 %v3911
    %v4175 = vunpack.c.l.b16 %v3912
    %v4176 = vunpack.c.l.b16 %v3913
    %v4177 = vunpack.c.l.b16 %v3914
    %v4178 = vunpack.c.l.b16 %v3915
    %v4179 = vunpack.c.l.b16 %v3916
    %v4180 = vunpack.c.l.b16 %v3917
    %v4181 = vunpack.c.l.b16 %v3918
    %v4182 = vunpack.c.l.b16 %v3919
    %v4183 = vunpack.c.l.b16 %v3920
    %v4184 = vunpack.c.l.b16 %v3921
    %v4185 = vunpack.c.l.b16 %v3922
    %v4186 = vunpack.c.l.b16 %v3923
    %v4187 = vunpack.c.l.b16 %v3924
    %v4188 = vunpack.c.l.b16 %v3925
    %v4189 = vunpack.c.l.b16 %v3926
    %v4190 = vunpack.c.l.b16 %v3927
    %v4191 = vunpack.c.l.b16 %v3928
    %v4192 = vunpack.c.l.b16 %v3929
    %v4193 = vunpack.c.l.b16 %v3930
    %v4194 = vunpack.c.l.b16 %v3931
    %v4195 = vunpack.c.l.b16 %v3932
    %v4196 = vunpack.c.l.b16 %v3933
    %v4197 = vunpack.c.l.b16 %v3934
    %v4198 = vunpack.c.l.b16 %v3935
    %v4199 = vunpack.c.l.b16 %v3936
    %v4200 = vunpack.c.l.b16 %v3937
    %v4201 = vunpack.c.l.b16 %v3938
    %v4202 = vunpack.c.l.b16 %v3939
    %v4203 = vunpack.c.l.b16 %v3940
    %v4204 = vunpack.c.l.b16 %v3941
    %v4205 = vunpack.c.l.b16 %v3942
    %v4206 = vunpack.c.l.b16 %v3943
    %v4207 = vunpack.c.l.b16 %v3944
    %v4208 = vunpack.c.l.b16 %v3945
    %v4209 = vunpack.c.l.b16 %v3946
    %v4210 = vunpack.c.l.b16 %v3947
    %v4211 = vunpack.c.l.b16 %v3948
    %v4212 = vunpack.c.l.b16 %v3949
    %v4213 = vunpack.c.l.b16 %v3950
    %v4214 = vunpack.c.l.b16 %v3951
    %v4215 = vunpack.c.l.b16 %v3952
    %v4216 = vunpack.c.l.b16 %v3953
    %v4217 = vunpack.c.l.b16 %v3954
    %v4218 = vunpack.c.l.b16 %v3955
    %v4219 = vunpack.c.l.b16 %v3956
    %v4220 = vunpack.c.l.b16 %v3957
    %v4221 = vunpack.c.l.b16 %v3958
    %v4222 = vunpack.c.l.b16 %v3959
    %v4223 = vunpack.c.l.b16 %v3960
    %v4224 = vunpack.c.l.b16 %v3961
    %v4225 = vunpack.c.l.b16 %v3962
    %v4226 = vunpack.c.l.b16 %v3963
    %v4227 = vunpack.c.l.b16 %v3964
    %v4228 = vunpack.c.l.b16 %v3965
    %v4229 = vunpack.c.l.b16 %v3966
    %v4230 = vunpack.c.l.b16 %v3967
    %v4231 = vunpack.c.l.b16 %v3968
    %v4232 = vunpack.c.l.b16 %v3969
    %v4233 = vunpack.c.l.b16 %v3970
    %v4234 = vunpack.c.l.b16 %v3971
    %v4235 = vunpack.c.l.b16 %v3972
    %v4236 = vunpack.c.l.b16 %v3973
    %v4237 = vunpack.c.l.b16 %v3974
    %v4238 = vunpack.c.l.b16 %v3975
    %v4239 = vunpack.c.l.b16 %v3976
    %v4240 = vunpack.c.l.b16 %v3977
    %v4241 = vunpack.c.l.b16 %v3978
    %v4242 = vunpack.c.l.b16 %v3979
    %v4243 = vunpack.c.l.b16 %v3980
    %v4244 = vunpack.c.l.b16 %v3981
    %v4245 = vunpack.c.l.b16 %v3982
    %v4246 = vunpack.c.l.b16 %v3983
    %v4247 = vunpack.c.l.b16 %v3984
    %v4248 = vunpack.c.l.b16 %v3985
    %v4249 = vunpack.c.l.b16 %v3986
    %v4250 = vunpack.c.l.b16 %v3987
    %v4251 = vunpack.c.l.b16 %v3988
    %v4252 = vunpack.c.l.b16 %v3989
    %v4253 = vunpack.c.l.b16 %v3990
    %v4254 = vunpack.c.l.b16 %v3991
    %v4255 = vunpack.c.l.b16 %v3992
    %v4256 = vunpack.c.l.b16 %v3993
    %v4257 = vunpack.c.l.b16 %v3994
    %v4258 = vunpack.c.l.b16 %v3995
    %v4259 = vunpack.c.l.b16 %v3996
    %v4260 = vunpack.c.l.b16 %v3997
    %v4261 = vunpack.c.l.b16 %v3998
    %v4262 = vunpack.c.l.b16 %v3999
    %v4263 = vunpack.c.l.b16 %v4000
    %v4264 = vunpack.c.l.b16 %v4001
    %v4265 = vunpack.c.l.b16 %v4002
    %v4266 = vunpack.c.l.b16 %v4003
    %v4267 = vunpack.c.l.b16 %v4004
    %v4268 = vunpack.c.l.b16 %v4005
    %v4269 = vunpack.c.l.b16 %v4006
    %v4270 = vunpack.c.l.b16 %v4007
    %v4271 = vunpack.c.l.b16 %v4008
    %v4272 = vunpack.c.l.b16 %v4009
    %v4273 = vunpack.c.l.b16 %v4010
    %v4274 = vunpack.c.l.b16 %v4011
    %v4275 = vunpack.c.l.b16 %v4012
    %v4276 = vunpack.c.l.b16 %v4013
    %v4277 = vunpack.c.l.b16 %v4014
    %v4278 = vunpack.c.l.b16 %v4015
    %v4279 = vunpack.c.l.b16 %v4016
    %v4280 = vunpack.c.l.b16 %v4017
    %v4281 = vunpack.c.l.b16 %v4018
    %v4282 = vunpack.c.l.b16 %v4019
    %v4283 = vunpack.c.l.b16 %v4020
    %v4284 = vunpack.c.l.b16 %v4021
    %v4285 = vpack.c.b16 %v4158, %v4157
    %v4286 = vpack.c.b16 %v4160, %v4159
    %v4287 = vpack.c.b16 %v4162, %v4161
    %v4288 = vpack.c.b16 %v4164, %v4163
    %v4289 = vpack.c.b16 %v4166, %v4165
    %v4290 = vpack.c.b16 %v4168, %v4167
    %v4291 = vpack.c.b16 %v4170, %v4169
    %v4292 = vpack.c.b16 %v4172, %v4171
    %v4293 = vpack.c.b16 %v4174, %v4173
    %v4294 = vpack.c.b16 %v4176, %v4175
    %v4295 = vpack.c.b16 %v4178, %v4177
    %v4296 = vpack.c.b16 %v4180, %v4179
    %v4297 = vpack.c.b16 %v4182, %v4181
    %v4298 = vpack.c.b16 %v4184, %v4183
    %v4299 = vpack.c.b16 %v4186, %v4185
    %v4300 = vpack.c.b16 %v4188, %v4187
    %v4301 = vpack.c.b16 %v4190, %v4189
    %v4302 = vpack.c.b16 %v4192, %v4191
    %v4303 = vpack.c.b16 %v4194, %v4193
    %v4304 = vpack.c.b16 %v4196, %v4195
    %v4305 = vpack.c.b16 %v4198, %v4197
    %v4306 = vpack.c.b16 %v4200, %v4199
    %v4307 = vpack.c.b16 %v4202, %v4201
    %v4308 = vpack.c.b16 %v4204, %v4203
    %v4309 = vpack.c.b16 %v4206, %v4205
    %v4310 = vpack.c.b16 %v4208, %v4207
    %v4311 = vpack.c.b16 %v4210, %v4209
    %v4312 = vpack.c.b16 %v4212, %v4211
    %v4313 = vpack.c.b16 %v4214, %v4213
    %v4314 = vpack.c.b16 %v4216, %v4215
    %v4315 = vpack.c.b16 %v4218, %v4217
    %v4316 = vpack.c.b16 %v4220, %v4219
    %v4317 = vpack.c.b16 %v4222, %v4221
    %v4318 = vpack.c.b16 %v4224, %v4223
    %v4319 = vpack.c.b16 %v4226, %v4225
    %v4320 = vpack.c.b16 %v4228, %v4227
    %v4321 = vpack.c.b16 %v4230, %v4229
    %v4322 = vpack.c.b16 %v4232, %v4231
    %v4323 = vpack.c.b16 %v4234, %v4233
    %v4324 = vpack.c.b16 %v4236, %v4235
    %v4325 = vpack.c.b16 %v4238, %v4237
    %v4326 = vpack.c.b16 %v4240, %v4239
    %v4327 = vpack.c.b16 %v4242, %v4241
    %v4328 = vpack.c.b16 %v4244, %v4243
    %v4329 = vpack.c.b16 %v4246, %v4245
    %v4330 = vpack.c.b16 %v4248, %v4247
    %v4331 = vpack.c.b16 %v4250, %v4249
    %v4332 = vpack.c.b16 %v4252, %v4251
    %v4333 = vpack.c.b16 %v4254, %v4253
    %v4334 = vpack.c.b16 %v4256, %v4255
    %v4335 = vpack.c.b16 %v4258, %v4257
    %v4336 = vpack.c.b16 %v4260, %v4259
    %v4337 = vpack.c.b16 %v4262, %v4261
    %v4338 = vpack.c.b16 %v4264, %v4263
    %v4339 = vpack.c.b16 %v4266, %v4265
    %v4340 = vpack.c.b16 %v4268, %v4267
    %v4341 = vpack.c.b16 %v4270, %v4269
    %v4342 = vpack.c.b16 %v4272, %v4271
    %v4343 = vpack.c.b16 %v4274, %v4273
    %v4344 = vpack.c.b16 %v4276, %v4275
    %v4345 = vpack.c.b16 %v4278, %v4277
    %v4346 = vpack.c.b16 %v4280, %v4279
    %v4347 = vpack.c.b16 %v4282, %v4281
    %v4348 = vpack.c.b16 %v4284, %v4283
    %4413 = vmatprep.subr.bf16.mxu0 0
    %4414 = vmatpush1.bf16.msra.mxu0 %v4292
    %4415 = vmatprep.subr.bf16.mxu0 0
    %4416 = vmatpush1.bf16.msra.mxu0 %v4291
    %4417 = vmatprep.subr.bf16.mxu0 0
    %4418 = vmatpush1.bf16.msra.mxu0 %v4290
    %4419 = vmatprep.subr.bf16.mxu0 0
    %4420 = vmatpush1.bf16.msra.mxu0 %v4289
    %4421 = vmatprep.subr.bf16.mxu0 0
    %4422 = vmatpush1.bf16.msra.mxu0 %v4288
    %4423 = vmatprep.subr.bf16.mxu0 0
    %4424 = vmatpush1.bf16.msra.mxu0 %v4287
    %4425 = vmatprep.subr.bf16.mxu0 0
    %4426 = vmatpush1.bf16.msra.mxu0 %v4286
    %4427 = vmatprep.subr.bf16.mxu0 0
    %4428 = vmatpush1.bf16.msra.mxu0 %v4285
    %4429 = vmatprep.subr.bf16.mxu0 0
    %4430 = vmatpush2.bf16.msra.mxu0 %v4300
    %4431 = vmatprep.subr.bf16.mxu0 0
    %4432 = vmatpush2.bf16.msra.mxu0 %v4299
    %4433 = vmatprep.subr.bf16.mxu0 0
    %4434 = vmatpush2.bf16.msra.mxu0 %v4298
    %4435 = vmatprep.subr.bf16.mxu0 0
    %4436 = vmatpush2.bf16.msra.mxu0 %v4297
    %4437 = vmatprep.subr.bf16.mxu0 0
    %4438 = vmatpush2.bf16.msra.mxu0 %v4296
    %4439 = vmatprep.subr.bf16.mxu0 0
    %4440 = vmatpush2.bf16.msra.mxu0 %v4295
    %4441 = vmatprep.subr.bf16.mxu0 0
    %4442 = vmatpush2.bf16.msra.mxu0 %v4294
    %4443 = vmatprep.subr.bf16.mxu0 0
    %4444 = vmatpush2.bf16.msra.mxu0 %v4293
    %4445 = vmatprep.mubr.bf16.mxu0 %v3887
    %4446 = vmatmul.mubr.bf16.gmra.mxu0 %v3886
    %v4447 = vpop.f32.mrf.mxu0
    %v4448 = vadd.f32 %v4027, %v4447
    %v4449 = vpop.f32.mrf.mxu0
    %v4450 = vpop.f32.mrf.mxu0
    %v4451 = vpop.f32.mrf.mxu0
    %4452 = vdwg.mxu0
    %4453 = vmatprep.subr.bf16.mxu0 0
    %4454 = vmatpush1.bf16.msra.mxu0 %v4308
    %4455 = vmatprep.subr.bf16.mxu0 0
    %4456 = vmatpush1.bf16.msra.mxu0 %v4307
    %4457 = vmatprep.subr.bf16.mxu0 0
    %4458 = vmatpush1.bf16.msra.mxu0 %v4306
    %4459 = vmatprep.subr.bf16.mxu0 0
    %4460 = vmatpush1.bf16.msra.mxu0 %v4305
    %4461 = vmatprep.subr.bf16.mxu0 0
    %4462 = vmatpush1.bf16.msra.mxu0 %v4304
    %4463 = vmatprep.subr.bf16.mxu0 0
    %4464 = vmatpush1.bf16.msra.mxu0 %v4303
    %4465 = vmatprep.subr.bf16.mxu0 0
    %4466 = vmatpush1.bf16.msra.mxu0 %v4302
    %4467 = vmatprep.subr.bf16.mxu0 0
    %4468 = vmatpush1.bf16.msra.mxu0 %v4301
    %4469 = vmatprep.subr.bf16.mxu0 0
    %4470 = vmatpush2.bf16.msra.mxu0 %v4316
    %4471 = vmatprep.subr.bf16.mxu0 0
    %4472 = vmatpush2.bf16.msra.mxu0 %v4315
    %4473 = vmatprep.subr.bf16.mxu0 0
    %4474 = vmatpush2.bf16.msra.mxu0 %v4314
    %4475 = vmatprep.subr.bf16.mxu0 0
    %4476 = vmatpush2.bf16.msra.mxu0 %v4313
    %4477 = vmatprep.subr.bf16.mxu0 0
    %4478 = vmatpush2.bf16.msra.mxu0 %v4312
    %4479 = vmatprep.subr.bf16.mxu0 0
    %4480 = vmatpush2.bf16.msra.mxu0 %v4311
    %4481 = vmatprep.subr.bf16.mxu0 0
    %4482 = vmatpush2.bf16.msra.mxu0 %v4310
    %4483 = vmatprep.subr.bf16.mxu0 0
    %4484 = vmatpush2.bf16.msra.mxu0 %v4309
    %4485 = vmatprep.mubr.bf16.mxu0 %v3889
    %4486 = vmatmul.mubr.bf16.gmra.mxu0 %v3888
    %v4487 = vpop.f32.mrf.mxu0
    %v4488 = vadd.f32 %v4448, %v4487
    %v4489 = vpop.f32.mrf.mxu0
    %v4490 = vpop.f32.mrf.mxu0
    %v4491 = vpop.f32.mrf.mxu0
    %4492 = vdwg.mxu0
    %4493 = vmatprep.subr.bf16.mxu0 0
    %4494 = vmatpush1.bf16.msra.mxu0 %v4324
    %4495 = vmatprep.subr.bf16.mxu0 0
    %4496 = vmatpush1.bf16.msra.mxu0 %v4323
    %4497 = vmatprep.subr.bf16.mxu0 0
    %4498 = vmatpush1.bf16.msra.mxu0 %v4322
    %4499 = vmatprep.subr.bf16.mxu0 0
    %4500 = vmatpush1.bf16.msra.mxu0 %v4321
    %4501 = vmatprep.subr.bf16.mxu0 0
    %4502 = vmatpush1.bf16.msra.mxu0 %v4320
    %4503 = vmatprep.subr.bf16.mxu0 0
    %4504 = vmatpush1.bf16.msra.mxu0 %v4319
    %4505 = vmatprep.subr.bf16.mxu0 0
    %4506 = vmatpush1.bf16.msra.mxu0 %v4318
    %4507 = vmatprep.subr.bf16.mxu0 0
    %4508 = vmatpush1.bf16.msra.mxu0 %v4317
    %4509 = vmatprep.subr.bf16.mxu0 0
    %4510 = vmatpush2.bf16.msra.mxu0 %v4332
    %4511 = vmatprep.subr.bf16.mxu0 0
    %4512 = vmatpush2.bf16.msra.mxu0 %v4331
    %4513 = vmatprep.subr.bf16.mxu0 0
    %4514 = vmatpush2.bf16.msra.mxu0 %v4330
    %4515 = vmatprep.subr.bf16.mxu0 0
    %4516 = vmatpush2.bf16.msra.mxu0 %v4329
    %4517 = vmatprep.subr.bf16.mxu0 0
    %4518 = vmatpush2.bf16.msra.mxu0 %v4328
    %4519 = vmatprep.subr.bf16.mxu0 0
    %4520 = vmatpush2.bf16.msra.mxu0 %v4327
    %4521 = vmatprep.subr.bf16.mxu0 0
    %4522 = vmatpush2.bf16.msra.mxu0 %v4326
    %4523 = vmatprep.subr.bf16.mxu0 0
    %4524 = vmatpush2.bf16.msra.mxu0 %v4325
    %4525 = vmatprep.mubr.bf16.mxu0 %v3891
    %4526 = vmatmul.mubr.bf16.gmra.mxu0 %v3890
    %v4527 = vpop.f32.mrf.mxu0
    %v4528 = vadd.f32 %v4488, %v4527
    %v4529 = vpop.f32.mrf.mxu0
    %v4530 = vpop.f32.mrf.mxu0
    %v4531 = vpop.f32.mrf.mxu0
    %4532 = vdwg.mxu0
    %4533 = vmatprep.subr.bf16.mxu0 0
    %4534 = vmatpush1.bf16.msra.mxu0 %v4340
    %4535 = vmatprep.subr.bf16.mxu0 0
    %4536 = vmatpush1.bf16.msra.mxu0 %v4339
    %4537 = vmatprep.subr.bf16.mxu0 0
    %4538 = vmatpush1.bf16.msra.mxu0 %v4338
    %4539 = vmatprep.subr.bf16.mxu0 0
    %4540 = vmatpush1.bf16.msra.mxu0 %v4337
    %4541 = vmatprep.subr.bf16.mxu0 0
    %4542 = vmatpush1.bf16.msra.mxu0 %v4336
    %4543 = vmatprep.subr.bf16.mxu0 0
    %4544 = vmatpush1.bf16.msra.mxu0 %v4335
    %4545 = vmatprep.subr.bf16.mxu0 0
    %4546 = vmatpush1.bf16.msra.mxu0 %v4334
    %4547 = vmatprep.subr.bf16.mxu0 0
    %4548 = vmatpush1.bf16.msra.mxu0 %v4333
    %4549 = vmatprep.subr.bf16.mxu0 0
    %4550 = vmatpush2.bf16.msra.mxu0 %v4348
    %4551 = vmatprep.subr.bf16.mxu0 0
    %4552 = vmatpush2.bf16.msra.mxu0 %v4347
    %4553 = vmatprep.subr.bf16.mxu0 0
    %4554 = vmatpush2.bf16.msra.mxu0 %v4346
    %4555 = vmatprep.subr.bf16.mxu0 0
    %4556 = vmatpush2.bf16.msra.mxu0 %v4345
    %4557 = vmatprep.subr.bf16.mxu0 0
    %4558 = vmatpush2.bf16.msra.mxu0 %v4344
    %4559 = vmatprep.subr.bf16.mxu0 0
    %4560 = vmatpush2.bf16.msra.mxu0 %v4343
    %4561 = vmatprep.subr.bf16.mxu0 0
    %4562 = vmatpush2.bf16.msra.mxu0 %v4342
    %4563 = vmatprep.subr.bf16.mxu0 0
    %4564 = vmatpush2.bf16.msra.mxu0 %v4341
    %4565 = vmatprep.mubr.bf16.mxu0 %v3893
    %4566 = vmatmul.mubr.bf16.gmra.mxu0 %v3892
    %v4567 = vpop.f32.mrf.mxu0
    %v4568 = vadd.f32 %v4528, %v4567
    %v4569 = vpop.f32.mrf.mxu0
    %v4570 = vpop.f32.mrf.mxu0
    %v4571 = vpop.f32.mrf.mxu0
    %4572 = vdwg.mxu0
    %4573 = vst [vmem:[#allocation11] sm:$0xff] %v4568
    // Predicated region
    $region42: #{tpu_custom_call.1} parent=1 // pred_check
      _
    $region43: #{tpu_custom_call.1} parent=1 // pred_check_branch
      %4575 = sbr.rel (0) target = $region45
    $region44: #{tpu_custom_call.1} parent=1 // pred_region
      %s4577 = ssub.s32 128, 128
      %4578 = vsyncadd [#allocation4], %s4577
      %s4580 = sshll.u32 [#allocation11], 4
      %s4581 = int_to_ptr.vmem [resolvable:$true] %s4580
      %4583 = dma.vmem_to_hbm [thread:$0]  %s4581, 128, %s5, [#allocation4]
    $region45: #{tpu_custom_call.1} parent=1 // pred_fallthru
      _
    // Predicated region
    $region46: #{tpu_custom_call.1} parent=1 // pred_check
      _
    $region47: #{tpu_custom_call.1} parent=1 // pred_check_branch
      %4585 = sbr.rel (0) target = $region49
    $region48: #{tpu_custom_call.1} parent=1 // pred_region
      %4586 = dma.done [#allocation4], 128
    $region49: #{tpu_custom_call.1} parent=1 // pred_fallthru
      _
    %4587 = vsyncpa [#allocation3], 1
    %4588 = vsyncpa [#allocation6], 1
    %4589 = vsyncpa [#allocation9], 1
    %4590 = vsyncpa [#allocation4], 1

</llo_original>
